<compile_context>
chip_gen: v7x
topology: tpu7x:2x2x1
jax: 0.10.0
libtpu: 0.0.40
codegen_flags: <defaults>
</compile_context>

<pallas_src>
import functools

import numpy as np
import jax
import jax.numpy as jnp
from jax.experimental import pallas as pl
from jax.experimental.pallas import tpu as pltpu


def _round_up(x, m):
    return (x + m - 1) // m * m


def _conv_bn_lrelu_kernel(x_ref, w_ref, shift_ref, o_ref, acc_ref, *,
                          kh, kw, stride, dilation, th, w_out):
    """One grid step = one (batch element, output-row tile).

    x_ref     : (1, 1, sh, w_pad, cin)        bf16 input row-slab
    w_ref     : (kh*kw, cin, cout_pad)        bf16 BN-folded weights (resident)
    shift_ref : (1, cout_pad)                 f32 BN shift
    o_ref     : (1, 1, th*w_out, cout_pad)    bf16 output tile (lane-dense)
    acc_ref   : (th*w_out, cout_pad)          f32 accumulator scratch
    """
    slab = x_ref[0, 0]                         # (sh, w_pad, cin)
    cin = slab.shape[-1]
    m = th * w_out

    # Implicit GEMM: kh*kw shifted windows, each an (m, cin) x (cin, cout) dot.
    for i in range(kh):
        for j in range(kw):
            r0 = i * dilation
            c0 = j * dilation
            patch = slab[r0:r0 + (th - 1) * stride + 1:stride,
                         c0:c0 + (w_out - 1) * stride + 1:stride, :]
            contrib = jnp.dot(patch.reshape(m, cin), w_ref[i * kw + j],
                              preferred_element_type=jnp.float32)
            if i == 0 and j == 0:
                acc_ref[...] = contrib          # first tap: no zero-init pass
            else:
                acc_ref[...] += contrib

    y = acc_ref[...] + shift_ref[...]           # BN shift (scale folded into W)
    y = jnp.maximum(y, 0.1 * y)                 # LeakyReLU(0.1): single vmax
    o_ref[0, 0] = y.astype(o_ref.dtype)


@functools.partial(jax.jit,
                   static_argnames=("stride", "padding", "dilation", "out_dtype"))
def basic_conv2d(x_nchw, weight, gamma, beta, running_mean, running_var,
                 *, stride=1, padding=0, dilation=1, eps=1e-5,
                 out_dtype=jnp.bfloat16):
    """BasicConv2d forward. x_nchw: (N, Cin, H, W); weight: (Cout, Cin, KH, KW)."""
    n, cin, h, w = x_nchw.shape
    cout, _, kh, kw = weight.shape

    h_out = (h + 2 * padding - dilation * (kh - 1) - 1) // stride + 1
    w_out = (w + 2 * padding - dilation * (kw - 1) - 1) // stride + 1
    lane = 128
    cout_pad = _round_up(cout, lane)            # lane-dense output columns
    w_pad_total = w + 2 * padding
    out_bytes = np.dtype(out_dtype).itemsize

    # ---- generation-aware VMEM budget (v5e/v6e: 128 MiB, v7x: 64 MiB) ----
    try:
        vmem_cap = getattr(pltpu.get_tpu_info(), "vmem_capacity_bytes",
                           64 * 1024 * 1024)
    except Exception:
        vmem_cap = 64 * 1024 * 1024
    vmem_limit = min(int(vmem_cap * 0.7), 96 * 1024 * 1024)
    tile_budget = int(vmem_limit * 0.6)

    # VMEM estimates (slab lane dim pads to 128 lanes in VMEM).
    cin_lanes = _round_up(cin, lane)
    weight_vmem = kh * kw * _round_up(cin, 16) * cout_pad * 2

    # ---- output-row tile size ----
    target_rows = 512                            # GEMM M rows per grid step
    th = max(1, min(h_out, max(1, target_rows // max(1, w_out))))
    if n == 1 and h_out >= 2:
        th = min(th, (h_out + 1) // 2)           # >=2 parallel steps (2 TCs on v7x)

    def _tile_bytes(t):
        sh_ = (t - 1) * stride + dilation * (kh - 1) + 1
        slab_b = sh_ * w_pad_total * cin_lanes * 2          # bf16 slab
        out_b = t * w_out * cout_pad * out_bytes
        acc_b = t * w_out * cout_pad * 4
        return 2 * slab_b + 2 * out_b + acc_b                # double-buffered

    while th > 1 and _tile_bytes(th) + weight_vmem > tile_budget:
        th = max(1, th // 2)

    t_tiles = -(-h_out // th)
    h_out_pad = t_tiles * th
    sh = (th - 1) * stride + dilation * (kh - 1) + 1         # slab rows per tile

    # ---- glue (plain JAX, ~1 pass over the input; no materialized im2col) ----
    x_nhwc = jnp.transpose(x_nchw, (0, 2, 3, 1)).astype(jnp.bfloat16)
    rows_needed = (t_tiles - 1) * th * stride + sh
    pad_bottom = padding + max(0, rows_needed - (h + 2 * padding))
    x_pad = jnp.pad(x_nhwc, ((0, 0), (padding, pad_bottom),
                             (padding, padding), (0, 0)))
    # Overlapping row slabs, one per output-row tile.  Duplication is only
    # ~(kh-1)/th of the input (vs. kh*kw x for a materialized im2col).
    # TODO(synk): replace with pl.Element row offsets (or a manual-DMA double
    # buffer) so overlapping slabs are DMA'd straight from x_pad with zero copy.
    slabs = jnp.stack(
        [x_pad[:, t * th * stride:t * th * stride + sh] for t in range(t_tiles)],
        axis=1)                                  # (N, T, sh, w_pad, cin) bf16

    # Fold BatchNorm (running stats) into the weights; only the shift enters
    # the kernel:  y = (x (*) W) * scale + shift == x (*) (W * scale) + shift.
    scale = (gamma.astype(jnp.float32) /
             jnp.sqrt(running_var.astype(jnp.float32) + eps))
    shift = beta.astype(jnp.float32) - running_mean.astype(jnp.float32) * scale
    w_mat = jnp.transpose(weight, (2, 3, 1, 0)).reshape(kh * kw, cin, cout)
    w_mat = (w_mat.astype(jnp.float32) * scale[None, None, :]).astype(jnp.bfloat16)
    w_mat = jnp.pad(w_mat, ((0, 0), (0, 0), (0, cout_pad - cout)))
    shift2d = jnp.pad(shift.reshape(1, cout), ((0, 0), (0, cout_pad - cout)))

    kernel = functools.partial(_conv_bn_lrelu_kernel, kh=kh, kw=kw,
                               stride=stride, dilation=dilation,
                               th=th, w_out=w_out)

    # NOTE: if a profile shows exposed DMA on the slab stream, add
    # pipeline_mode=pl.Buffered(3) to the slab BlockSpec (ample VMEM headroom).
    out = pl.pallas_call(
        kernel,
        out_shape=jax.ShapeDtypeStruct((n, t_tiles, th * w_out, cout_pad),
                                       out_dtype),
        grid_spec=pltpu.PrefetchScalarGridSpec(
            num_scalar_prefetch=0,
            grid=(n, t_tiles),
            in_specs=[
                pl.BlockSpec((1, 1, sh, w_pad_total, cin),
                             lambda b, t: (b, t, 0, 0, 0)),       # input slab
                pl.BlockSpec((kh * kw, cin, cout_pad),
                             lambda b, t: (0, 0, 0)),             # folded weights
                pl.BlockSpec((1, cout_pad), lambda b, t: (0, 0)),  # BN shift
            ],
            out_specs=pl.BlockSpec((1, 1, th * w_out, cout_pad),
                                   lambda b, t: (b, t, 0, 0)),
            scratch_shapes=[pltpu.VMEM((th * w_out, cout_pad), jnp.float32)],
        ),
        compiler_params=pltpu.CompilerParams(
            dimension_semantics=("parallel", "parallel"),
            vmem_limit_bytes=vmem_limit,
        ),
    )(slabs, w_mat, shift2d)

    # (N, T, th*w_out, Cp) -> (N, T*th, w_out, Cp) is contiguous (free bitcast).
    out = out.reshape(n, h_out_pad, w_out, cout_pad)[:, :h_out, :, :cout]
    # TODO(synk): keep NHWC end-to-end if the surrounding model allows it; this
    # transpose exists only to preserve the PyTorch NCHW interface.
    return jnp.transpose(out, (0, 3, 1, 2))


def _reference(x_nchw, weight, gamma, beta, running_mean, running_var,
               *, stride, padding, dilation, eps=1e-5):
    y = jax.lax.conv_general_dilated(
        x_nchw.astype(jnp.float32), weight.astype(jnp.float32),
        window_strides=(stride, stride),
        padding=[(padding, padding), (padding, padding)],
        rhs_dilation=(dilation, dilation),
        dimension_numbers=("NCHW", "OIHW", "NCHW"))
    scale = gamma / jnp.sqrt(running_var + eps)
    shift = beta - running_mean * scale
    y = y * scale[None, :, None, None] + shift[None, :, None, None]
    return jnp.where(y >= 0.0, y, 0.1 * y)


if __name__ == "__main__":
    # BasicConv2d(in_planes=4, out_planes=8, kernel_size=3, stride=1, padding=1)
    N, CIN, H, W = 2, 4, 16, 16
    COUT, KH, KW = 8, 3, 3
    STRIDE, PAD, DIL = 1, 1, 1

    key = jax.random.PRNGKey(0)
    k1, k2, k3, k4, k5, k6 = jax.random.split(key, 6)

    x = jax.random.normal(k1, (N, CIN, H, W), dtype=jnp.float32)
    weight = jax.random.normal(k2, (COUT, CIN, KH, KW), dtype=jnp.float32) * 0.1
    gamma = 1.0 + 0.1 * jax.random.normal(k3, (COUT,), dtype=jnp.float32)
    beta = 0.1 * jax.random.normal(k4, (COUT,), dtype=jnp.float32)
    running_mean = 0.1 * jax.random.normal(k5, (COUT,), dtype=jnp.float32)
    running_var = 1.0 + 0.1 * jnp.abs(jax.random.normal(k6, (COUT,), dtype=jnp.float32))

    out = basic_conv2d(x, weight, gamma, beta, running_mean, running_var,
                       stride=STRIDE, padding=PAD, dilation=DIL)
    out = jax.block_until_ready(out)

    ref = _reference(x, weight, gamma, beta, running_mean, running_var,
                     stride=STRIDE, padding=PAD, dilation=DIL)
    assert out.shape == (N, COUT, H, W), out.shape
    # bf16 operands + bf16 output with f32 accumulation: well inside tolerance.
    assert jnp.allclose(out.astype(jnp.float32), ref, rtol=2e-2, atol=2e-2), \
        "mismatch vs reference"

    print("KERNEL_OK")
</pallas_src>

<mosaic_0001>
module attributes {stable_mosaic.version = 11 : i64} {
  func.func @_conv_bn_lrelu_kernel(%arg0: i32, %arg1: i32, %arg2: memref<1x1x18x18x4xbf16, #tpu.memory_space<vmem>>, %arg3: memref<9x4x128xbf16, #tpu.memory_space<vmem>>, %arg4: memref<1x128xf32, #tpu.memory_space<vmem>>, %arg5: memref<1x1x256x128xbf16, #tpu.memory_space<vmem>>, %arg6: memref<256x128xf32, #tpu.memory_space<vmem>>) attributes {dimension_semantics = [#tpu.dimension_semantics<parallel>, #tpu.dimension_semantics<parallel>], iteration_bounds = array<i64: 2, 1>, scalar_prefetch = 0 : i64, scratch_operands = 1 : i64, tpu.core_type = #tpu.core_type<tc>, window_params = [{transform_indices = @transform_0, window_bounds = array<i64: 1, 1, 18, 18, 4>}, {pipeline_mode = #tpu.pipeline_mode<synchronous>, transform_indices = @transform_1, window_bounds = array<i64: 9, 4, 128>}, {pipeline_mode = #tpu.pipeline_mode<synchronous>, transform_indices = @transform_2, window_bounds = array<i64: 1, 128>}, {transform_indices = @transform_3, window_bounds = array<i64: 1, 1, 256, 128>}]} {
    %c0 = arith.constant 0 : index
    %c0_0 = arith.constant 0 : index
    %c0_1 = arith.constant 0 : index
    %c0_2 = arith.constant 0 : index
    %c0_3 = arith.constant 0 : index
    %0 = vector.load %arg2[%c0, %c0_0, %c0_1, %c0_2, %c0_3] : memref<1x1x18x18x4xbf16, #tpu.memory_space<vmem>>, vector<1x1x18x18x4xbf16>
    %1 = vector.shape_cast %0 : vector<1x1x18x18x4xbf16> to vector<18x18x4xbf16>
    %2 = vector.extract_strided_slice %1 {offsets = [0, 0, 0], sizes = [16, 16, 4], strides = [1, 1, 1]} : vector<18x18x4xbf16> to vector<16x16x4xbf16>
    %3 = vector.shape_cast %2 : vector<16x16x4xbf16> to vector<256x4xbf16>
    %c0_4 = arith.constant 0 : index
    %c0_5 = arith.constant 0 : index
    %c0_6 = arith.constant 0 : index
    %4 = vector.load %arg3[%c0_4, %c0_5, %c0_6] : memref<9x4x128xbf16, #tpu.memory_space<vmem>>, vector<1x4x128xbf16>
    %5 = vector.shape_cast %4 : vector<1x4x128xbf16> to vector<4x128xbf16>
    %cst = arith.constant dense<0.000000e+00> : vector<256x128xf32>
    %6 = tpu.matmul %3, %5, %cst {dimension_numbers = #tpu.dot_dimension_numbers<[1], [0], [0], [1], [0, 0, 1, 1], [], []>} : vector<256x4xbf16>, vector<4x128xbf16>, vector<256x128xf32> -> vector<256x128xf32>
    %c0_7 = arith.constant 0 : index
    %c0_8 = arith.constant 0 : index
    %7 = vector.load %arg6[%c0_7, %c0_8] : memref<256x128xf32, #tpu.memory_space<vmem>>, vector<256x128xf32>
    tpu.vector_store %arg6[%c0_7, %c0_8], %6 {strides = array<i32>} : memref<256x128xf32, #tpu.memory_space<vmem>>, vector<256x128xf32>,
    %8 = vector.extract_strided_slice %1 {offsets = [0, 1, 0], sizes = [16, 16, 4], strides = [1, 1, 1]} : vector<18x18x4xbf16> to vector<16x16x4xbf16>
    %9 = vector.shape_cast %8 : vector<16x16x4xbf16> to vector<256x4xbf16>
    %c1 = arith.constant 1 : index
    %c0_9 = arith.constant 0 : index
    %c0_10 = arith.constant 0 : index
    %10 = vector.load %arg3[%c1, %c0_9, %c0_10] : memref<9x4x128xbf16, #tpu.memory_space<vmem>>, vector<1x4x128xbf16>
    %11 = vector.shape_cast %10 : vector<1x4x128xbf16> to vector<4x128xbf16>
    %cst_11 = arith.constant dense<0.000000e+00> : vector<256x128xf32>
    %12 = tpu.matmul %9, %11, %cst_11 {dimension_numbers = #tpu.dot_dimension_numbers<[1], [0], [0], [1], [0, 0, 1, 1], [], []>} : vector<256x4xbf16>, vector<4x128xbf16>, vector<256x128xf32> -> vector<256x128xf32>
    %c0_12 = arith.constant 0 : index
    %c0_13 = arith.constant 0 : index
    %13 = vector.load %arg6[%c0_12, %c0_13] : memref<256x128xf32, #tpu.memory_space<vmem>>, vector<256x128xf32>
    %14 = arith.addf %13, %12 : vector<256x128xf32>
    %c0_14 = arith.constant 0 : index
    %c0_15 = arith.constant 0 : index
    %15 = vector.load %arg6[%c0_14, %c0_15] : memref<256x128xf32, #tpu.memory_space<vmem>>, vector<256x128xf32>
    tpu.vector_store %arg6[%c0_14, %c0_15], %14 {strides = array<i32>} : memref<256x128xf32, #tpu.memory_space<vmem>>, vector<256x128xf32>,
    %16 = vector.extract_strided_slice %1 {offsets = [0, 2, 0], sizes = [16, 16, 4], strides = [1, 1, 1]} : vector<18x18x4xbf16> to vector<16x16x4xbf16>
    %17 = vector.shape_cast %16 : vector<16x16x4xbf16> to vector<256x4xbf16>
    %c2 = arith.constant 2 : index
    %c0_16 = arith.constant 0 : index
    %c0_17 = arith.constant 0 : index
    %18 = vector.load %arg3[%c2, %c0_16, %c0_17] : memref<9x4x128xbf16, #tpu.memory_space<vmem>>, vector<1x4x128xbf16>
    %19 = vector.shape_cast %18 : vector<1x4x128xbf16> to vector<4x128xbf16>
    %cst_18 = arith.constant dense<0.000000e+00> : vector<256x128xf32>
    %20 = tpu.matmul %17, %19, %cst_18 {dimension_numbers = #tpu.dot_dimension_numbers<[1], [0], [0], [1], [0, 0, 1, 1], [], []>} : vector<256x4xbf16>, vector<4x128xbf16>, vector<256x128xf32> -> vector<256x128xf32>
    %c0_19 = arith.constant 0 : index
    %c0_20 = arith.constant 0 : index
    %21 = vector.load %arg6[%c0_19, %c0_20] : memref<256x128xf32, #tpu.memory_space<vmem>>, vector<256x128xf32>
    %22 = arith.addf %21, %20 : vector<256x128xf32>
    %c0_21 = arith.constant 0 : index
    %c0_22 = arith.constant 0 : index
    %23 = vector.load %arg6[%c0_21, %c0_22] : memref<256x128xf32, #tpu.memory_space<vmem>>, vector<256x128xf32>
    tpu.vector_store %arg6[%c0_21, %c0_22], %22 {strides = array<i32>} : memref<256x128xf32, #tpu.memory_space<vmem>>, vector<256x128xf32>,
    %24 = vector.extract_strided_slice %1 {offsets = [1, 0, 0], sizes = [16, 16, 4], strides = [1, 1, 1]} : vector<18x18x4xbf16> to vector<16x16x4xbf16>
    %25 = vector.shape_cast %24 : vector<16x16x4xbf16> to vector<256x4xbf16>
    %c3 = arith.constant 3 : index
    %c0_23 = arith.constant 0 : index
    %c0_24 = arith.constant 0 : index
    %26 = vector.load %arg3[%c3, %c0_23, %c0_24] : memref<9x4x128xbf16, #tpu.memory_space<vmem>>, vector<1x4x128xbf16>
    %27 = vector.shape_cast %26 : vector<1x4x128xbf16> to vector<4x128xbf16>
    %cst_25 = arith.constant dense<0.000000e+00> : vector<256x128xf32>
    %28 = tpu.matmul %25, %27, %cst_25 {dimension_numbers = #tpu.dot_dimension_numbers<[1], [0], [0], [1], [0, 0, 1, 1], [], []>} : vector<256x4xbf16>, vector<4x128xbf16>, vector<256x128xf32> -> vector<256x128xf32>
    %c0_26 = arith.constant 0 : index
    %c0_27 = arith.constant 0 : index
    %29 = vector.load %arg6[%c0_26, %c0_27] : memref<256x128xf32, #tpu.memory_space<vmem>>, vector<256x128xf32>
    %30 = arith.addf %29, %28 : vector<256x128xf32>
    %c0_28 = arith.constant 0 : index
    %c0_29 = arith.constant 0 : index
    %31 = vector.load %arg6[%c0_28, %c0_29] : memref<256x128xf32, #tpu.memory_space<vmem>>, vector<256x128xf32>
    tpu.vector_store %arg6[%c0_28, %c0_29], %30 {strides = array<i32>} : memref<256x128xf32, #tpu.memory_space<vmem>>, vector<256x128xf32>,
    %32 = vector.extract_strided_slice %1 {offsets = [1, 1, 0], sizes = [16, 16, 4], strides = [1, 1, 1]} : vector<18x18x4xbf16> to vector<16x16x4xbf16>
    %33 = vector.shape_cast %32 : vector<16x16x4xbf16> to vector<256x4xbf16>
    %c4 = arith.constant 4 : index
    %c0_30 = arith.constant 0 : index
    %c0_31 = arith.constant 0 : index
    %34 = vector.load %arg3[%c4, %c0_30, %c0_31] : memref<9x4x128xbf16, #tpu.memory_space<vmem>>, vector<1x4x128xbf16>
    %35 = vector.shape_cast %34 : vector<1x4x128xbf16> to vector<4x128xbf16>
    %cst_32 = arith.constant dense<0.000000e+00> : vector<256x128xf32>
    %36 = tpu.matmul %33, %35, %cst_32 {dimension_numbers = #tpu.dot_dimension_numbers<[1], [0], [0], [1], [0, 0, 1, 1], [], []>} : vector<256x4xbf16>, vector<4x128xbf16>, vector<256x128xf32> -> vector<256x128xf32>
    %c0_33 = arith.constant 0 : index
    %c0_34 = arith.constant 0 : index
    %37 = vector.load %arg6[%c0_33, %c0_34] : memref<256x128xf32, #tpu.memory_space<vmem>>, vector<256x128xf32>
    %38 = arith.addf %37, %36 : vector<256x128xf32>
    %c0_35 = arith.constant 0 : index
    %c0_36 = arith.constant 0 : index
    %39 = vector.load %arg6[%c0_35, %c0_36] : memref<256x128xf32, #tpu.memory_space<vmem>>, vector<256x128xf32>
    tpu.vector_store %arg6[%c0_35, %c0_36], %38 {strides = array<i32>} : memref<256x128xf32, #tpu.memory_space<vmem>>, vector<256x128xf32>,
    %40 = vector.extract_strided_slice %1 {offsets = [1, 2, 0], sizes = [16, 16, 4], strides = [1, 1, 1]} : vector<18x18x4xbf16> to vector<16x16x4xbf16>
    %41 = vector.shape_cast %40 : vector<16x16x4xbf16> to vector<256x4xbf16>
    %c5 = arith.constant 5 : index
    %c0_37 = arith.constant 0 : index
    %c0_38 = arith.constant 0 : index
    %42 = vector.load %arg3[%c5, %c0_37, %c0_38] : memref<9x4x128xbf16, #tpu.memory_space<vmem>>, vector<1x4x128xbf16>
    %43 = vector.shape_cast %42 : vector<1x4x128xbf16> to vector<4x128xbf16>
    %cst_39 = arith.constant dense<0.000000e+00> : vector<256x128xf32>
    %44 = tpu.matmul %41, %43, %cst_39 {dimension_numbers = #tpu.dot_dimension_numbers<[1], [0], [0], [1], [0, 0, 1, 1], [], []>} : vector<256x4xbf16>, vector<4x128xbf16>, vector<256x128xf32> -> vector<256x128xf32>
    %c0_40 = arith.constant 0 : index
    %c0_41 = arith.constant 0 : index
    %45 = vector.load %arg6[%c0_40, %c0_41] : memref<256x128xf32, #tpu.memory_space<vmem>>, vector<256x128xf32>
    %46 = arith.addf %45, %44 : vector<256x128xf32>
    %c0_42 = arith.constant 0 : index
    %c0_43 = arith.constant 0 : index
    %47 = vector.load %arg6[%c0_42, %c0_43] : memref<256x128xf32, #tpu.memory_space<vmem>>, vector<256x128xf32>
    tpu.vector_store %arg6[%c0_42, %c0_43], %46 {strides = array<i32>} : memref<256x128xf32, #tpu.memory_space<vmem>>, vector<256x128xf32>,
    %48 = vector.extract_strided_slice %1 {offsets = [2, 0, 0], sizes = [16, 16, 4], strides = [1, 1, 1]} : vector<18x18x4xbf16> to vector<16x16x4xbf16>
    %49 = vector.shape_cast %48 : vector<16x16x4xbf16> to vector<256x4xbf16>
    %c6 = arith.constant 6 : index
    %c0_44 = arith.constant 0 : index
    %c0_45 = arith.constant 0 : index
    %50 = vector.load %arg3[%c6, %c0_44, %c0_45] : memref<9x4x128xbf16, #tpu.memory_space<vmem>>, vector<1x4x128xbf16>
    %51 = vector.shape_cast %50 : vector<1x4x128xbf16> to vector<4x128xbf16>
    %cst_46 = arith.constant dense<0.000000e+00> : vector<256x128xf32>
    %52 = tpu.matmul %49, %51, %cst_46 {dimension_numbers = #tpu.dot_dimension_numbers<[1], [0], [0], [1], [0, 0, 1, 1], [], []>} : vector<256x4xbf16>, vector<4x128xbf16>, vector<256x128xf32> -> vector<256x128xf32>
    %c0_47 = arith.constant 0 : index
    %c0_48 = arith.constant 0 : index
    %53 = vector.load %arg6[%c0_47, %c0_48] : memref<256x128xf32, #tpu.memory_space<vmem>>, vector<256x128xf32>
    %54 = arith.addf %53, %52 : vector<256x128xf32>
    %c0_49 = arith.constant 0 : index
    %c0_50 = arith.constant 0 : index
    %55 = vector.load %arg6[%c0_49, %c0_50] : memref<256x128xf32, #tpu.memory_space<vmem>>, vector<256x128xf32>
    tpu.vector_store %arg6[%c0_49, %c0_50], %54 {strides = array<i32>} : memref<256x128xf32, #tpu.memory_space<vmem>>, vector<256x128xf32>,
    %56 = vector.extract_strided_slice %1 {offsets = [2, 1, 0], sizes = [16, 16, 4], strides = [1, 1, 1]} : vector<18x18x4xbf16> to vector<16x16x4xbf16>
    %57 = vector.shape_cast %56 : vector<16x16x4xbf16> to vector<256x4xbf16>
    %c7 = arith.constant 7 : index
    %c0_51 = arith.constant 0 : index
    %c0_52 = arith.constant 0 : index
    %58 = vector.load %arg3[%c7, %c0_51, %c0_52] : memref<9x4x128xbf16, #tpu.memory_space<vmem>>, vector<1x4x128xbf16>
    %59 = vector.shape_cast %58 : vector<1x4x128xbf16> to vector<4x128xbf16>
    %cst_53 = arith.constant dense<0.000000e+00> : vector<256x128xf32>
    %60 = tpu.matmul %57, %59, %cst_53 {dimension_numbers = #tpu.dot_dimension_numbers<[1], [0], [0], [1], [0, 0, 1, 1], [], []>} : vector<256x4xbf16>, vector<4x128xbf16>, vector<256x128xf32> -> vector<256x128xf32>
    %c0_54 = arith.constant 0 : index
    %c0_55 = arith.constant 0 : index
    %61 = vector.load %arg6[%c0_54, %c0_55] : memref<256x128xf32, #tpu.memory_space<vmem>>, vector<256x128xf32>
    %62 = arith.addf %61, %60 : vector<256x128xf32>
    %c0_56 = arith.constant 0 : index
    %c0_57 = arith.constant 0 : index
    %63 = vector.load %arg6[%c0_56, %c0_57] : memref<256x128xf32, #tpu.memory_space<vmem>>, vector<256x128xf32>
    tpu.vector_store %arg6[%c0_56, %c0_57], %62 {strides = array<i32>} : memref<256x128xf32, #tpu.memory_space<vmem>>, vector<256x128xf32>,
    %64 = vector.extract_strided_slice %1 {offsets = [2, 2, 0], sizes = [16, 16, 4], strides = [1, 1, 1]} : vector<18x18x4xbf16> to vector<16x16x4xbf16>
    %65 = vector.shape_cast %64 : vector<16x16x4xbf16> to vector<256x4xbf16>
    %c8 = arith.constant 8 : index
    %c0_58 = arith.constant 0 : index
    %c0_59 = arith.constant 0 : index
    %66 = vector.load %arg3[%c8, %c0_58, %c0_59] : memref<9x4x128xbf16, #tpu.memory_space<vmem>>, vector<1x4x128xbf16>
    %67 = vector.shape_cast %66 : vector<1x4x128xbf16> to vector<4x128xbf16>
    %cst_60 = arith.constant dense<0.000000e+00> : vector<256x128xf32>
    %68 = tpu.matmul %65, %67, %cst_60 {dimension_numbers = #tpu.dot_dimension_numbers<[1], [0], [0], [1], [0, 0, 1, 1], [], []>} : vector<256x4xbf16>, vector<4x128xbf16>, vector<256x128xf32> -> vector<256x128xf32>
    %c0_61 = arith.constant 0 : index
    %c0_62 = arith.constant 0 : index
    %69 = vector.load %arg6[%c0_61, %c0_62] : memref<256x128xf32, #tpu.memory_space<vmem>>, vector<256x128xf32>
    %70 = arith.addf %69, %68 : vector<256x128xf32>
    %c0_63 = arith.constant 0 : index
    %c0_64 = arith.constant 0 : index
    %71 = vector.load %arg6[%c0_63, %c0_64] : memref<256x128xf32, #tpu.memory_space<vmem>>, vector<256x128xf32>
    tpu.vector_store %arg6[%c0_63, %c0_64], %70 {strides = array<i32>} : memref<256x128xf32, #tpu.memory_space<vmem>>, vector<256x128xf32>,
    %c0_65 = arith.constant 0 : index
    %c0_66 = arith.constant 0 : index
    %72 = vector.load %arg6[%c0_65, %c0_66] : memref<256x128xf32, #tpu.memory_space<vmem>>, vector<256x128xf32>
    %c0_67 = arith.constant 0 : index
    %c0_68 = arith.constant 0 : index
    %73 = vector.load %arg4[%c0_67, %c0_68] : memref<1x128xf32, #tpu.memory_space<vmem>>, vector<1x128xf32>
    %74 = vector.broadcast %73 : vector<1x128xf32> to vector<256x128xf32>
    %75 = arith.addf %72, %74 : vector<256x128xf32>
    %cst_69 = arith.constant 1.000000e-01 : f32
    %76 = vector.broadcast %cst_69 : f32 to vector<256x128xf32>
    %77 = arith.mulf %76, %75 : vector<256x128xf32>
    %78 = arith.maximumf %75, %77 : vector<256x128xf32>
    %79 = arith.truncf %78 : vector<256x128xf32> to vector<256x128xbf16>
    %c0_70 = arith.constant 0 : index
    %c0_71 = arith.constant 0 : index
    %c0_72 = arith.constant 0 : index
    %c0_73 = arith.constant 0 : index
    %80 = vector.load %arg5[%c0_70, %c0_71, %c0_72, %c0_73] : memref<1x1x256x128xbf16, #tpu.memory_space<vmem>>, vector<1x1x256x128xbf16>
    %81 = vector.shape_cast %80 : vector<1x1x256x128xbf16> to vector<256x128xbf16>
    %82 = vector.shape_cast %79 : vector<256x128xbf16> to vector<1x1x256x128xbf16>
    tpu.vector_store %arg5[%c0_70, %c0_71, %c0_72, %c0_73], %82 {strides = array<i32>} : memref<1x1x256x128xbf16, #tpu.memory_space<vmem>>, vector<1x1x256x128xbf16>,
    return
  }
  func.func @transform_0(%arg0: i32, %arg1: i32) -> (i32, i32, i32, i32, i32) {
    %c0_i32 = arith.constant 0 : i32
    %c0_i32_0 = arith.constant 0 : i32
    %c0_i32_1 = arith.constant 0 : i32
    %c0_i32_2 = arith.constant 0 : i32
    return %arg0, %arg1, %c0_i32, %c0_i32_0, %c0_i32_1 : i32, i32, i32, i32, i32
  }
  func.func @transform_1(%arg0: i32, %arg1: i32) -> (i32, i32, i32) {
    %c0_i32 = arith.constant 0 : i32
    %c0_i32_0 = arith.constant 0 : i32
    %c0_i32_1 = arith.constant 0 : i32
    %c0_i32_2 = arith.constant 0 : i32
    return %c0_i32, %c0_i32_0, %c0_i32_1 : i32, i32, i32
  }
  func.func @transform_2(%arg0: i32, %arg1: i32) -> (i32, i32) {
    %c0_i32 = arith.constant 0 : i32
    %c0_i32_0 = arith.constant 0 : i32
    %c0_i32_1 = arith.constant 0 : i32
    return %c0_i32, %c0_i32_0 : i32, i32
  }
  func.func @transform_3(%arg0: i32, %arg1: i32) -> (i32, i32, i32, i32) {
    %c0_i32 = arith.constant 0 : i32
    %c0_i32_0 = arith.constant 0 : i32
    %c0_i32_1 = arith.constant 0 : i32
    return %arg0, %arg1, %c0_i32, %c0_i32_0 : i32, i32, i32, i32
  }
}

</mosaic_0001>

<llo_original>
// kernel: basic_conv2d.1
$region0: #{basic_conv2d.1}
  #allocation0 [shape = 'u32[]', space=smem, size = 0x4, offset = 0x4, fixed_abs, tag = 'smem constant byte address 0x4 - core index']
  #allocation1 [shape = 'u32[144,128]{1,0:T(1,128)}', space=vmem, size = 0x12000, scoped, tag = 'internal scratch']
  #allocation2 [shape = 'f32[256,128]{1,0:T(8,128)}', space=vmem, size = 0x20000, scoped, tag = 'scratch operand']
  %s0 = inlined_call_operand.vmem [shape: bf16[2,1,18,18,4], index: 0, kind: input, shape index: {}]
  %s1 = inlined_call_operand.vmem [shape: bf16[9,4,128], index: 1, kind: input, shape index: {}]
  %s2 = inlined_call_operand.vmem [shape: f32[1,128], index: 2, kind: input, shape index: {}]
  %s3 = inlined_call_operand.vmem [shape: bf16[2,1,256,128], index: 3, kind: output, shape index: {}]
  %s4 = sld [smem:[#allocation0]]
  $region45: #{basic_conv2d.1} parent=0
    _
  %s6 = ssub.s32 1, %s4
  %s7 = scalar_select 0, %s6, %s4
  loop: start=0, step=1, limit=4
  $region2: #{basic_conv2d.1} parent=0 // loop_pre_header
    _
  $region3: #{basic_conv2d.1} parent=0 // loop_header
    %s9 = sphi 0, %s13
    %p10 = scmp.ge.s32.totalorder %s9, 4
    %s16 = sphi 0, %s28
    %s17 = sphi 0, %s24
    %s18 = sphi 0, %s16
    %s19 = sphi 0, %s17
    %s20 = sphi 0, %s18
    %s21 = sphi 0, %s19
    %s33 = sphi 0, %s35
    %s36 = sphi 0, %s33
    %s37 = sphi 0, %s36
    %s53 = sphi 0, %s37
    %s57 = sphi 0, %s57
    %s59 = sphi 0, %s57
    %s60 = sphi 0, %s59
    %s74 = sphi 0, %s60
    %s78 = sphi 0, %s78
    %s80 = sphi 0, %s78
    %s81 = sphi 0, %s80
    %s95 = sphi 0, %s81
    %s103 = sphi 0, %s105
    %s106 = sphi 0, %s103
    %s107 = sphi 0, %s106
    %s123 = sphi 0, %s107
  $region4: #{basic_conv2d.1} parent=0 // loop_header_branch
    %12 = sbr.rel (%p10) target = $region8
  $region5: #{basic_conv2d.1} parent=0 // loop_body
    %s14 = ssub.s32 %s9, 1
    %s15 = ssub.s32 %s9, 2
    %s22 = sadd.s32 1, %s17
    %p23 = scmp.ge.s32.totalorder %s22, 1
    %s24 = scalar_select %p23, 0, %s22
    %s25 = sadd.s32 1, %s16
    %s26 = scalar_select %p23, %s25, %s16
    %p27 = scmp.ge.s32.totalorder %s26, 2
    %s28 = scalar_select %p27, 0, %s26
    %s29 = ssub.s32 %s16, %s28
    %s30 = ssub.s32 %s17, %s24
    %s31 = sor.u32 %s29, %s30
    %p32 = scmp.eq.s32.totalorder %s31, 0
    %s34 = sadd.s32 %s33, 1
    %s35 = scalar_select %p32, %s33, %s34
    %p38 = pneg %p32
    %p39 = scmp.eq.s32.totalorder %s9, 1
    %p40 = por %p38, %p39
    %p41 = scmp.ne.s32.totalorder %s33, %s36
    %p42 = scmp.eq.s32.totalorder %s9, 0
    %p43 = por %p41, %p42
    %p44 = scmp.ne.s32.totalorder %s33, %s36
    %p45 = scmp.eq.s32.totalorder %s14, 1
    %p46 = por %p44, %p45
    %p47 = scmp.ne.s32.totalorder %s36, %s37
    %p48 = scmp.eq.s32.totalorder %s14, 0
    %p49 = por %p47, %p48
    %p50 = scmp.ne.s32.totalorder %s36, %s37
    %p51 = scmp.eq.s32.totalorder %s15, 1
    %p52 = por %p50, %p51
    %p54 = scmp.ne.s32.totalorder %s37, %s53
    %p55 = scmp.eq.s32.totalorder %s15, 0
    %p56 = por %p54, %p55
    %s58 = sadd.s32 %s57, 1
    %p61 = scmp.eq.s32.totalorder %s9, 1
    %p62 = scmp.ne.s32.totalorder %s57, %s59
    %p63 = scmp.eq.s32.totalorder %s9, 0
    %p64 = por %p62, %p63
    %p65 = scmp.ne.s32.totalorder %s57, %s59
    %p66 = scmp.eq.s32.totalorder %s14, 1
    %p67 = por %p65, %p66
    %p68 = scmp.ne.s32.totalorder %s59, %s60
    %p69 = scmp.eq.s32.totalorder %s14, 0
    %p70 = por %p68, %p69
    %p71 = scmp.ne.s32.totalorder %s59, %s60
    %p72 = scmp.eq.s32.totalorder %s15, 1
    %p73 = por %p71, %p72
    %p75 = scmp.ne.s32.totalorder %s60, %s74
    %p76 = scmp.eq.s32.totalorder %s15, 0
    %p77 = por %p75, %p76
    %s79 = sadd.s32 %s78, 1
    %p82 = scmp.eq.s32.totalorder %s9, 1
    %p83 = scmp.ne.s32.totalorder %s78, %s80
    %p84 = scmp.eq.s32.totalorder %s9, 0
    %p85 = por %p83, %p84
    %p86 = scmp.ne.s32.totalorder %s78, %s80
    %p87 = scmp.eq.s32.totalorder %s14, 1
    %p88 = por %p86, %p87
    %p89 = scmp.ne.s32.totalorder %s80, %s81
    %p90 = scmp.eq.s32.totalorder %s14, 0
    %p91 = por %p89, %p90
    %p92 = scmp.ne.s32.totalorder %s80, %s81
    %p93 = scmp.eq.s32.totalorder %s15, 1
    %p94 = por %p92, %p93
    %p96 = scmp.ne.s32.totalorder %s81, %s95
    %p97 = scmp.eq.s32.totalorder %s15, 0
    %p98 = por %p96, %p97
    %s99 = ssub.s32 %s16, %s28
    %s100 = ssub.s32 %s17, %s24
    %s101 = sor.u32 %s99, %s100
    %p102 = scmp.eq.s32.totalorder %s101, 0
    %s104 = sadd.s32 %s103, 1
    %s105 = scalar_select %p102, %s103, %s104
    %p108 = pneg %p102
    %p109 = scmp.eq.s32.totalorder %s9, 1
    %p110 = por %p108, %p109
    %p111 = scmp.ne.s32.totalorder %s103, %s106
    %p112 = scmp.eq.s32.totalorder %s9, 0
    %p113 = por %p111, %p112
    %p114 = scmp.ne.s32.totalorder %s103, %s106
    %p115 = scmp.eq.s32.totalorder %s14, 1
    %p116 = por %p114, %p115
    %p117 = scmp.ne.s32.totalorder %s106, %s107
    %p118 = scmp.eq.s32.totalorder %s14, 0
    %p119 = por %p117, %p118
    %p120 = scmp.ne.s32.totalorder %s106, %s107
    %p121 = scmp.eq.s32.totalorder %s15, 1
    %p122 = por %p120, %p121
    %p124 = scmp.ne.s32.totalorder %s107, %s123
    %p125 = scmp.eq.s32.totalorder %s15, 0
    %p126 = por %p124, %p125
    %p127 = scmp.le.s32.totalorder 1, %s9
    %p128 = scmp.lt.s32.totalorder %s9, 3
    %p129 = pnand %p127, %p128
    %p130 = pneg %p129
    // Predicated region
    $region9: #{basic_conv2d.1} parent=5 // pred_check
      _
    $region10: #{basic_conv2d.1} parent=5 // pred_check_branch
      %132 = sbr.rel (%p129) target = $region12
    $region11: #{basic_conv2d.1} parent=5 // pred_region
      %s133 = ssub.s32 %s9, 1
      // Predicated region
      $region13: #{basic_conv2d.1} parent=11 // pred_check
        %p134 = pneg %p70
      $region14: #{basic_conv2d.1} parent=11 // pred_check_branch
        %136 = sbr.rel (%p134) target = $region16
      $region15: #{basic_conv2d.1} parent=11 // pred_region
        _
      $region16: #{basic_conv2d.1} parent=11 // pred_fallthru
        _
      // Predicated region
      $region17: #{basic_conv2d.1} parent=11 // pred_check
        %p137 = pneg %p91
      $region18: #{basic_conv2d.1} parent=11 // pred_check_branch
        %139 = sbr.rel (%p137) target = $region20
      $region19: #{basic_conv2d.1} parent=11 // pred_region
        _
      $region20: #{basic_conv2d.1} parent=11 // pred_fallthru
        _
    $region12: #{basic_conv2d.1} parent=5 // pred_fallthru
      _
    %p140 = scmp.lt.s32.totalorder %s9, 2
    // Predicated region
    $region21: #{basic_conv2d.1} parent=5 // pred_check
      %p141 = pneg %p140
    $region22: #{basic_conv2d.1} parent=5 // pred_check_branch
      %143 = sbr.rel (%p141) target = $region24
    $region23: #{basic_conv2d.1} parent=5 // pred_region
      // Predicated region
      $region25: #{basic_conv2d.1} parent=23 // pred_check
        %p144 = pneg %p43
      $region26: #{basic_conv2d.1} parent=23 // pred_check_branch
        %146 = sbr.rel (%p144) target = $region28
      $region27: #{basic_conv2d.1} parent=23 // pred_region
        %p147 = scmp.lt.s32.totalorder %s16, 1
        %s148 = scalar_select %p147, %s16, 1
        %p149 = scmp.lt.s32.totalorder %s17, 0
        %s150 = scalar_select %p149, %s17, 0
        %s151 = smul.addr %s150, 54
        %s152 = smul.addr %s148, 54
        %s153 = sadd.s32 %s151, %s152
        %s154 = smul.addr %s153, 4
        %s155 = scalar_lea.vmem %s0, %s154
      $region28: #{basic_conv2d.1} parent=23 // pred_fallthru
        _
    $region24: #{basic_conv2d.1} parent=5 // pred_fallthru
      _
    %p156 = scmp.le.s32.totalorder 1, %s9
    %p157 = scmp.lt.s32.totalorder %s9, 3
    %p158 = pnand %p156, %p157
    %p159 = pneg %p158
    // Predicated region
    $region29: #{basic_conv2d.1} parent=5 // pred_check
      _
    $region30: #{basic_conv2d.1} parent=5 // pred_check_branch
      %161 = sbr.rel (%p158) target = $region32
    $region31: #{basic_conv2d.1} parent=5 // pred_region
      %s162 = ssub.s32 %s9, 1
      %p163 = scmp.lt.s32.totalorder %s18, 1
      %s164 = scalar_select %p163, %s18, 1
      %p165 = scmp.lt.s32.totalorder %s19, 0
      %s166 = scalar_select %p165, %s19, 0
      %s167 = smul.addr %s166, 54
      %s168 = smul.addr %s164, 54
      %s169 = sadd.s32 %s167, %s168
      %s170 = smul.addr %s169, 4
      %s171 = scalar_lea.vmem %s0, %s170
      %p172 = pneg %p49
      %p173 = pneg %p46
      %p174 = pneg %p70
      %p175 = pneg %p67
      %p176 = pneg %p91
      %p177 = pneg %p88
      %p178 = pneg %p119
      %p179 = pneg %p116
      %p180 = scmp.lt.s32.totalorder %s18, 1
      %s181 = scalar_select %p180, %s18, 1
      %p182 = scmp.lt.s32.totalorder %s19, 0
      %s183 = scalar_select %p182, %s19, 0
      %s184 = smul.addr %s183, 32
      %s185 = smul.addr %s181, 32
      %s186 = sadd.s32 %s184, %s185
      %s187 = smul.addr %s186, 4
      %s188 = scalar_lea.vmem %s3, %s187
      %p189 = scmp.lt.s32.totalorder %s18, 1
      %s190 = scalar_select %p189, %s18, 1
      %p191 = scmp.lt.s32.totalorder %s19, 0
      %s192 = scalar_select %p191, %s19, 0
      %s193 = smul.addr %s192, 54
      %s194 = smul.addr %s190, 54
      %s195 = sadd.s32 %s193, %s194
      %s196 = smul.addr %s195, 4
      %s197 = scalar_lea.vmem %s0, %s196
      %p198 = scmp.lt.s32.totalorder %s18, 1
      %s199 = scalar_select %p198, %s18, 1
      %p200 = scmp.lt.s32.totalorder %s19, 0
      %s201 = scalar_select %p200, %s19, 0
      %s202 = smul.addr %s201, 32
      %s203 = smul.addr %s199, 32
      %s204 = sadd.s32 %s202, %s203
      %s205 = smul.addr %s204, 4
      %s206 = scalar_lea.vmem %s3, %s205
      %v208 = vld [vmem:[%s197] sm:$0xf]
      %v209 = vld [vmem:[%s197 + $0x4] sm:$0xf]
      %v210 = vld [vmem:[%s197 + $0x8] sm:$0x1]
      %v211 = vld [vmem:[%s197 + $0xc] sm:$0xf]
      %v212 = vld [vmem:[%s197 + $0x10] sm:$0xf]
      %v213 = vld [vmem:[%s197 + $0x14] sm:$0x1]
      %v214 = vld [vmem:[%s197 + $0x18] sm:$0xf]
      %v215 = vld [vmem:[%s197 + $0x1c] sm:$0xf]
      %v216 = vld [vmem:[%s197 + $0x20] sm:$0x1]
      %v217 = vld [vmem:[%s197 + $0x24] sm:$0xf]
      %v218 = vld [vmem:[%s197 + $0x28] sm:$0xf]
      %v219 = vld [vmem:[%s197 + $0x2c] sm:$0x1]
      %v220 = vld [vmem:[%s197 + $0x30] sm:$0xf]
      %v221 = vld [vmem:[%s197 + $0x34] sm:$0xf]
      %v222 = vld [vmem:[%s197 + $0x38] sm:$0x1]
      %v223 = vld [vmem:[%s197 + $0x3c] sm:$0xf]
      %v224 = vld [vmem:[%s197 + $0x40] sm:$0xf]
      %v225 = vld [vmem:[%s197 + $0x44] sm:$0x1]
      %v226 = vld [vmem:[%s197 + $0x48] sm:$0xf]
      %v227 = vld [vmem:[%s197 + $0x4c] sm:$0xf]
      %v228 = vld [vmem:[%s197 + $0x50] sm:$0x1]
      %v229 = vld [vmem:[%s197 + $0x54] sm:$0xf]
      %v230 = vld [vmem:[%s197 + $0x58] sm:$0xf]
      %v231 = vld [vmem:[%s197 + $0x5c] sm:$0x1]
      %v232 = vld [vmem:[%s197 + $0x60] sm:$0xf]
      %v233 = vld [vmem:[%s197 + $0x64] sm:$0xf]
      %v234 = vld [vmem:[%s197 + $0x68] sm:$0x1]
      %v235 = vld [vmem:[%s197 + $0x6c] sm:$0xf]
      %v236 = vld [vmem:[%s197 + $0x70] sm:$0xf]
      %v237 = vld [vmem:[%s197 + $0x74] sm:$0x1]
      %v238 = vld [vmem:[%s197 + $0x78] sm:$0xf]
      %v239 = vld [vmem:[%s197 + $0x7c] sm:$0xf]
      %v240 = vld [vmem:[%s197 + $0x80] sm:$0x1]
      %v241 = vld [vmem:[%s197 + $0x84] sm:$0xf]
      %v242 = vld [vmem:[%s197 + $0x88] sm:$0xf]
      %v243 = vld [vmem:[%s197 + $0x8c] sm:$0x1]
      %v244 = vld [vmem:[%s197 + $0x90] sm:$0xf]
      %v245 = vld [vmem:[%s197 + $0x94] sm:$0xf]
      %v246 = vld [vmem:[%s197 + $0x98] sm:$0x1]
      %v247 = vld [vmem:[%s197 + $0x9c] sm:$0xf]
      %v248 = vld [vmem:[%s197 + $0xa0] sm:$0xf]
      %v249 = vld [vmem:[%s197 + $0xa4] sm:$0x1]
      %v250 = vld [vmem:[%s197 + $0xa8] sm:$0xf]
      %v251 = vld [vmem:[%s197 + $0xac] sm:$0xf]
      %v252 = vld [vmem:[%s197 + $0xb0] sm:$0x1]
      %v253 = vld [vmem:[%s197 + $0xb4] sm:$0xf]
      %v254 = vld [vmem:[%s197 + $0xb8] sm:$0xf]
      %v255 = vld [vmem:[%s197 + $0xbc] sm:$0x1]
      %v256 = vld [vmem:[%s197 + $0xc0] sm:$0xf]
      %v257 = vld [vmem:[%s197 + $0xc4] sm:$0xf]
      %v258 = vld [vmem:[%s197 + $0xc8] sm:$0x1]
      %v259 = vld [vmem:[%s197 + $0xcc] sm:$0xf]
      %v260 = vld [vmem:[%s197 + $0xd0] sm:$0xf]
      %v261 = vld [vmem:[%s197 + $0xd4] sm:$0x1]
      %v262 = vld [vmem:[%s1] sm:$0x3]
      %v295 = vunpack.c.l.b16 %v208
      %v296 = vunpack.c.l.b16 %v209
      %v297 = vunpack.c.l.b16 %v211
      %v298 = vunpack.c.l.b16 %v212
      %v299 = vunpack.c.l.b16 %v214
      %v300 = vunpack.c.l.b16 %v215
      %v301 = vunpack.c.l.b16 %v217
      %v302 = vunpack.c.l.b16 %v218
      %v303 = vunpack.c.l.b16 %v220
      %v304 = vunpack.c.l.b16 %v221
      %v305 = vunpack.c.l.b16 %v223
      %v306 = vunpack.c.l.b16 %v224
      %v307 = vunpack.c.l.b16 %v226
      %v308 = vunpack.c.l.b16 %v227
      %v309 = vunpack.c.l.b16 %v229
      %v310 = vunpack.c.l.b16 %v230
      %v311 = vunpack.c.l.b16 %v232
      %v312 = vunpack.c.l.b16 %v233
      %v313 = vunpack.c.l.b16 %v235
      %v314 = vunpack.c.l.b16 %v236
      %v315 = vunpack.c.l.b16 %v238
      %v316 = vunpack.c.l.b16 %v239
      %v317 = vunpack.c.l.b16 %v241
      %v318 = vunpack.c.l.b16 %v242
      %v319 = vunpack.c.l.b16 %v244
      %v320 = vunpack.c.l.b16 %v245
      %v321 = vunpack.c.l.b16 %v247
      %v322 = vunpack.c.l.b16 %v248
      %v323 = vunpack.c.l.b16 %v250
      %v324 = vunpack.c.l.b16 %v251
      %v325 = vunpack.c.l.b16 %v253
      %v326 = vunpack.c.l.b16 %v254
      %v327 = vpack.c.b16 %v296, %v295
      %v328 = vpack.c.b16 %v298, %v297
      %v329 = vpack.c.b16 %v300, %v299
      %v330 = vpack.c.b16 %v302, %v301
      %v331 = vpack.c.b16 %v304, %v303
      %v332 = vpack.c.b16 %v306, %v305
      %v333 = vpack.c.b16 %v308, %v307
      %v334 = vpack.c.b16 %v310, %v309
      %v335 = vpack.c.b16 %v312, %v311
      %v336 = vpack.c.b16 %v314, %v313
      %v337 = vpack.c.b16 %v316, %v315
      %v338 = vpack.c.b16 %v318, %v317
      %v339 = vpack.c.b16 %v320, %v319
      %v340 = vpack.c.b16 %v322, %v321
      %v341 = vpack.c.b16 %v324, %v323
      %v342 = vpack.c.b16 %v326, %v325
      %vm343 = vcmask 31744
      %v345 = vsel %vm343, %v327, 0
      %v348 = vsel %vm343, %v328, 0
      %v351 = vsel %vm343, %v329, 0
      %v354 = vsel %vm343, %v330, 0
      %v357 = vsel %vm343, %v331, 0
      %v360 = vsel %vm343, %v332, 0
      %v363 = vsel %vm343, %v333, 0
      %v366 = vsel %vm343, %v334, 0
      %v369 = vsel %vm343, %v335, 0
      %v372 = vsel %vm343, %v336, 0
      %v375 = vsel %vm343, %v337, 0
      %v378 = vsel %vm343, %v338, 0
      %v381 = vsel %vm343, %v339, 0
      %v384 = vsel %vm343, %v340, 0
      %v387 = vsel %vm343, %v341, 0
      %v390 = vsel %vm343, %v342, 0
      %vm392 = vcmask 1041408
      %v394 = vsel %vm392, %v262, 0
      %396 = vmatprep.subr.bf16.mxu0 0
      %397 = vmatpush1.bf16.msra.mxu0 %v394
      %398 = vmatprep.subr.bf16.mxu0 0
      %399 = vmatpush1.bf16.msra.mxu0 0
      %400 = vmatprep.subr.bf16.mxu0 0
      %401 = vmatpush1.bf16.msra.mxu0 0
      %402 = vmatprep.subr.bf16.mxu0 0
      %403 = vmatpush1.bf16.msra.mxu0 0
      %404 = vmatprep.subr.bf16.mxu0 0
      %405 = vmatpush1.bf16.msra.mxu0 0
      %406 = vmatprep.subr.bf16.mxu0 0
      %407 = vmatpush1.bf16.msra.mxu0 0
      %408 = vmatprep.subr.bf16.mxu0 0
      %409 = vmatpush1.bf16.msra.mxu0 0
      %410 = vmatprep.subr.bf16.mxu0 0
      %411 = vmatpush1.bf16.msra.mxu0 0
      %412 = vmatprep.subr.bf16.mxu0 0
      %413 = vmatpush1.bf16.msra.mxu0 0
      %414 = vmatprep.subr.bf16.mxu0 0
      %415 = vmatpush1.bf16.msra.mxu0 0
      %416 = vmatprep.subr.bf16.mxu0 0
      %417 = vmatpush1.bf16.msra.mxu0 0
      %418 = vmatprep.subr.bf16.mxu0 0
      %419 = vmatpush1.bf16.msra.mxu0 0
      %420 = vmatprep.subr.bf16.mxu0 0
      %421 = vmatpush1.bf16.msra.mxu0 0
      %422 = vmatprep.subr.bf16.mxu0 0
      %423 = vmatpush1.bf16.msra.mxu0 0
      %424 = vmatprep.subr.bf16.mxu0 0
      %425 = vmatpush1.bf16.msra.mxu0 0
      %426 = vmatprep.subr.bf16.mxu0 0
      %427 = vmatpush1.bf16.msra.mxu0 0
      %428 = vmatprep.mubr.bf16.mxu0 0
      %429 = vmatmul.mubr.bf16.gmra.mrb[0].mxu0 %v345
      %v430 = vpop.f32.mrb[0].mxu0
      %v431 = vadd.f32 0.0, %v430
      %v432 = vpop.f32.mrb[0].mxu0
      %v433 = vpop.f32.mrb[0].mxu0
      %v434 = vadd.f32 0.0, %v433
      %v435 = vpop.f32.mrb[0].mxu0
      %436 = vmatprep.mubr.bf16.mxu0 0
      %437 = vmatmul.mubr.bf16.gmra.mrb[0].mxu0 %v348
      %v438 = vpop.f32.mrb[0].mxu0
      %v439 = vadd.f32 0.0, %v438
      %v440 = vpop.f32.mrb[0].mxu0
      %v441 = vpop.f32.mrb[0].mxu0
      %v442 = vadd.f32 0.0, %v441
      %v443 = vpop.f32.mrb[0].mxu0
      %444 = vmatprep.mubr.bf16.mxu0 0
      %445 = vmatmul.mubr.bf16.gmra.mrb[0].mxu0 %v351
      %v446 = vpop.f32.mrb[0].mxu0
      %v447 = vadd.f32 0.0, %v446
      %v448 = vpop.f32.mrb[0].mxu0
      %v449 = vpop.f32.mrb[0].mxu0
      %v450 = vadd.f32 0.0, %v449
      %v451 = vpop.f32.mrb[0].mxu0
      %452 = vmatprep.mubr.bf16.mxu0 0
      %453 = vmatmul.mubr.bf16.gmra.mrb[0].mxu0 %v354
      %v454 = vpop.f32.mrb[0].mxu0
      %v455 = vadd.f32 0.0, %v454
      %v456 = vpop.f32.mrb[0].mxu0
      %v457 = vpop.f32.mrb[0].mxu0
      %v458 = vadd.f32 0.0, %v457
      %v459 = vpop.f32.mrb[0].mxu0
      %460 = vmatprep.mubr.bf16.mxu0 0
      %461 = vmatmul.mubr.bf16.gmra.mrb[0].mxu0 %v357
      %v462 = vpop.f32.mrb[0].mxu0
      %v463 = vadd.f32 0.0, %v462
      %v464 = vpop.f32.mrb[0].mxu0
      %v465 = vpop.f32.mrb[0].mxu0
      %v466 = vadd.f32 0.0, %v465
      %v467 = vpop.f32.mrb[0].mxu0
      %468 = vmatprep.mubr.bf16.mxu0 0
      %469 = vmatmul.mubr.bf16.gmra.mrb[0].mxu0 %v360
      %v470 = vpop.f32.mrb[0].mxu0
      %v471 = vadd.f32 0.0, %v470
      %v472 = vpop.f32.mrb[0].mxu0
      %v473 = vpop.f32.mrb[0].mxu0
      %v474 = vadd.f32 0.0, %v473
      %v475 = vpop.f32.mrb[0].mxu0
      %476 = vmatprep.mubr.bf16.mxu0 0
      %477 = vmatmul.mubr.bf16.gmra.mrb[0].mxu0 %v363
      %v478 = vpop.f32.mrb[0].mxu0
      %v479 = vadd.f32 0.0, %v478
      %v480 = vpop.f32.mrb[0].mxu0
      %v481 = vpop.f32.mrb[0].mxu0
      %v482 = vadd.f32 0.0, %v481
      %v483 = vpop.f32.mrb[0].mxu0
      %484 = vmatprep.mubr.bf16.mxu0 0
      %485 = vmatmul.mubr.bf16.gmra.mrb[0].mxu0 %v366
      %v486 = vpop.f32.mrb[0].mxu0
      %v487 = vadd.f32 0.0, %v486
      %v488 = vpop.f32.mrb[0].mxu0
      %v489 = vpop.f32.mrb[0].mxu0
      %v490 = vadd.f32 0.0, %v489
      %v491 = vpop.f32.mrb[0].mxu0
      %492 = vmatprep.mubr.bf16.mxu0 0
      %493 = vmatmul.mubr.bf16.gmra.mrb[0].mxu0 %v369
      %v494 = vpop.f32.mrb[0].mxu0
      %v495 = vadd.f32 0.0, %v494
      %v496 = vpop.f32.mrb[0].mxu0
      %v497 = vpop.f32.mrb[0].mxu0
      %v498 = vadd.f32 0.0, %v497
      %v499 = vpop.f32.mrb[0].mxu0
      %500 = vmatprep.mubr.bf16.mxu0 0
      %501 = vmatmul.mubr.bf16.gmra.mrb[0].mxu0 %v372
      %v502 = vpop.f32.mrb[0].mxu0
      %v503 = vadd.f32 0.0, %v502
      %v504 = vpop.f32.mrb[0].mxu0
      %v505 = vpop.f32.mrb[0].mxu0
      %v506 = vadd.f32 0.0, %v505
      %v507 = vpop.f32.mrb[0].mxu0
      %508 = vmatprep.mubr.bf16.mxu0 0
      %509 = vmatmul.mubr.bf16.gmra.mrb[0].mxu0 %v375
      %v510 = vpop.f32.mrb[0].mxu0
      %v511 = vadd.f32 0.0, %v510
      %v512 = vpop.f32.mrb[0].mxu0
      %v513 = vpop.f32.mrb[0].mxu0
      %v514 = vadd.f32 0.0, %v513
      %v515 = vpop.f32.mrb[0].mxu0
      %516 = vmatprep.mubr.bf16.mxu0 0
      %517 = vmatmul.mubr.bf16.gmra.mrb[0].mxu0 %v378
      %v518 = vpop.f32.mrb[0].mxu0
      %v519 = vadd.f32 0.0, %v518
      %v520 = vpop.f32.mrb[0].mxu0
      %v521 = vpop.f32.mrb[0].mxu0
      %v522 = vadd.f32 0.0, %v521
      %v523 = vpop.f32.mrb[0].mxu0
      %524 = vmatprep.mubr.bf16.mxu0 0
      %525 = vmatmul.mubr.bf16.gmra.mrb[0].mxu0 %v381
      %v526 = vpop.f32.mrb[0].mxu0
      %v527 = vadd.f32 0.0, %v526
      %v528 = vpop.f32.mrb[0].mxu0
      %v529 = vpop.f32.mrb[0].mxu0
      %v530 = vadd.f32 0.0, %v529
      %v531 = vpop.f32.mrb[0].mxu0
      %532 = vmatprep.mubr.bf16.mxu0 0
      %533 = vmatmul.mubr.bf16.gmra.mrb[0].mxu0 %v384
      %v534 = vpop.f32.mrb[0].mxu0
      %v535 = vadd.f32 0.0, %v534
      %v536 = vpop.f32.mrb[0].mxu0
      %v537 = vpop.f32.mrb[0].mxu0
      %v538 = vadd.f32 0.0, %v537
      %v539 = vpop.f32.mrb[0].mxu0
      %540 = vmatprep.mubr.bf16.mxu0 0
      %541 = vmatmul.mubr.bf16.gmra.mrb[0].mxu0 %v387
      %v542 = vpop.f32.mrb[0].mxu0
      %v543 = vadd.f32 0.0, %v542
      %v544 = vpop.f32.mrb[0].mxu0
      %v545 = vpop.f32.mrb[0].mxu0
      %v546 = vadd.f32 0.0, %v545
      %v547 = vpop.f32.mrb[0].mxu0
      %548 = vmatprep.mubr.bf16.mxu0 0
      %549 = vmatmul.mubr.bf16.gmra.mrb[0].mxu0 %v390
      %v550 = vpop.f32.mrb[0].mxu0
      %v551 = vadd.f32 0.0, %v550
      %v552 = vpop.f32.mrb[0].mxu0
      %v553 = vpop.f32.mrb[0].mxu0
      %v554 = vadd.f32 0.0, %v553
      %v555 = vpop.f32.mrb[0].mxu0
      %556 = vdwg.mxu0
      %557 = vst [vmem:[#allocation2] sm:$0xff] %v431
      %558 = vst [vmem:[#allocation2 + $0x8] sm:$0xff] %v434
      %559 = vst [vmem:[#allocation2 + $0x10] sm:$0xff] %v439
      %560 = vst [vmem:[#allocation2 + $0x18] sm:$0xff] %v442
      %561 = vst [vmem:[#allocation2 + $0x20] sm:$0xff] %v447
      %562 = vst [vmem:[#allocation2 + $0x28] sm:$0xff] %v450
      %563 = vst [vmem:[#allocation2 + $0x30] sm:$0xff] %v455
      %564 = vst [vmem:[#allocation2 + $0x38] sm:$0xff] %v458
      %565 = vst [vmem:[#allocation2 + $0x40] sm:$0xff] %v463
      %566 = vst [vmem:[#allocation2 + $0x48] sm:$0xff] %v466
      %567 = vst [vmem:[#allocation2 + $0x50] sm:$0xff] %v471
      %568 = vst [vmem:[#allocation2 + $0x58] sm:$0xff] %v474
      %569 = vst [vmem:[#allocation2 + $0x60] sm:$0xff] %v479
      %570 = vst [vmem:[#allocation2 + $0x68] sm:$0xff] %v482
      %571 = vst [vmem:[#allocation2 + $0x70] sm:$0xff] %v487
      %572 = vst [vmem:[#allocation2 + $0x78] sm:$0xff] %v490
      %573 = vst [vmem:[#allocation2 + $0x80] sm:$0xff] %v495
      %574 = vst [vmem:[#allocation2 + $0x88] sm:$0xff] %v498
      %575 = vst [vmem:[#allocation2 + $0x90] sm:$0xff] %v503
      %576 = vst [vmem:[#allocation2 + $0x98] sm:$0xff] %v506
      %577 = vst [vmem:[#allocation2 + $0xa0] sm:$0xff] %v511
      %578 = vst [vmem:[#allocation2 + $0xa8] sm:$0xff] %v514
      %579 = vst [vmem:[#allocation2 + $0xb0] sm:$0xff] %v519
      %580 = vst [vmem:[#allocation2 + $0xb8] sm:$0xff] %v522
      %581 = vst [vmem:[#allocation2 + $0xc0] sm:$0xff] %v527
      %582 = vst [vmem:[#allocation2 + $0xc8] sm:$0xff] %v530
      %583 = vst [vmem:[#allocation2 + $0xd0] sm:$0xff] %v535
      %584 = vst [vmem:[#allocation2 + $0xd8] sm:$0xff] %v538
      %585 = vst [vmem:[#allocation2 + $0xe0] sm:$0xff] %v543
      %586 = vst [vmem:[#allocation2 + $0xe8] sm:$0xff] %v546
      %587 = vst [vmem:[#allocation2 + $0xf0] sm:$0xff] %v551
      %588 = vst [vmem:[#allocation2 + $0xf8] sm:$0xff] %v554
      %vm589 = vsmask.f32 3328
      %vm590 = vsmask.f32 7440
      %vm591 = vmor %vm589, %vm590
      %v593 = vshrl.u32 %v208, 16
      %v595 = vrot.slane %v593, 4
      %v596 = vshll.u32 %v208, 16
      %v598 = vrot.slane %v596, 5
      %v599 = vor.u32 %v595, %v598
      %v600 = vrot.slane %v599, 4
      %v602 = vshll.u32 %v209, 16
      %v604 = vrot.slane %v602, 5
      %v605 = vsel %vm591, %v600, %v604
      %v606 = vshrl.u32 %v209, 16
      %v608 = vrot.slane %v606, 4
      %v609 = vor.u32 %v608, %v604
      %v610 = vrot.slane %v609, 4
      %v612 = vshll.u32 %v210, 16
      %v614 = vrot.slane %v612, 5
      %v615 = vsel %vm591, %v610, %v614
      %v617 = vshrl.u32 %v211, 16
      %v619 = vrot.slane %v617, 4
      %v620 = vshll.u32 %v211, 16
      %v622 = vrot.slane %v620, 5
      %v623 = vor.u32 %v619, %v622
      %v624 = vrot.slane %v623, 4
      %v626 = vshll.u32 %v212, 16
      %v628 = vrot.slane %v626, 5
      %v629 = vsel %vm591, %v624, %v628
      %v630 = vshrl.u32 %v212, 16
      %v632 = vrot.slane %v630, 4
      %v633 = vor.u32 %v632, %v628
      %v634 = vrot.slane %v633, 4
      %v636 = vshll.u32 %v213, 16
      %v638 = vrot.slane %v636, 5
      %v639 = vsel %vm591, %v634, %v638
      %v641 = vshrl.u32 %v214, 16
      %v643 = vrot.slane %v641, 4
      %v644 = vshll.u32 %v214, 16
      %v646 = vrot.slane %v644, 5
      %v647 = vor.u32 %v643, %v646
      %v648 = vrot.slane %v647, 4
      %v650 = vshll.u32 %v215, 16
      %v652 = vrot.slane %v650, 5
      %v653 = vsel %vm591, %v648, %v652
      %v654 = vshrl.u32 %v215, 16
      %v656 = vrot.slane %v654, 4
      %v657 = vor.u32 %v656, %v652
      %v658 = vrot.slane %v657, 4
      %v660 = vshll.u32 %v216, 16
      %v662 = vrot.slane %v660, 5
      %v663 = vsel %vm591, %v658, %v662
      %v665 = vshrl.u32 %v217, 16
      %v667 = vrot.slane %v665, 4
      %v668 = vshll.u32 %v217, 16
      %v670 = vrot.slane %v668, 5
      %v671 = vor.u32 %v667, %v670
      %v672 = vrot.slane %v671, 4
      %v674 = vshll.u32 %v218, 16
      %v676 = vrot.slane %v674, 5
      %v677 = vsel %vm591, %v672, %v676
      %v678 = vshrl.u32 %v218, 16
      %v680 = vrot.slane %v678, 4
      %v681 = vor.u32 %v680, %v676
      %v682 = vrot.slane %v681, 4
      %v684 = vshll.u32 %v219, 16
      %v686 = vrot.slane %v684, 5
      %v687 = vsel %vm591, %v682, %v686
      %v689 = vshrl.u32 %v220, 16
      %v691 = vrot.slane %v689, 4
      %v692 = vshll.u32 %v220, 16
      %v694 = vrot.slane %v692, 5
      %v695 = vor.u32 %v691, %v694
      %v696 = vrot.slane %v695, 4
      %v698 = vshll.u32 %v221, 16
      %v700 = vrot.slane %v698, 5
      %v701 = vsel %vm591, %v696, %v700
      %v702 = vshrl.u32 %v221, 16
      %v704 = vrot.slane %v702, 4
      %v705 = vor.u32 %v704, %v700
      %v706 = vrot.slane %v705, 4
      %v708 = vshll.u32 %v222, 16
      %v710 = vrot.slane %v708, 5
      %v711 = vsel %vm591, %v706, %v710
      %v713 = vshrl.u32 %v223, 16
      %v715 = vrot.slane %v713, 4
      %v716 = vshll.u32 %v223, 16
      %v718 = vrot.slane %v716, 5
      %v719 = vor.u32 %v715, %v718
      %v720 = vrot.slane %v719, 4
      %v722 = vshll.u32 %v224, 16
      %v724 = vrot.slane %v722, 5
      %v725 = vsel %vm591, %v720, %v724
      %v726 = vshrl.u32 %v224, 16
      %v728 = vrot.slane %v726, 4
      %v729 = vor.u32 %v728, %v724
      %v730 = vrot.slane %v729, 4
      %v732 = vshll.u32 %v225, 16
      %v734 = vrot.slane %v732, 5
      %v735 = vsel %vm591, %v730, %v734
      %v737 = vshrl.u32 %v226, 16
      %v739 = vrot.slane %v737, 4
      %v740 = vshll.u32 %v226, 16
      %v742 = vrot.slane %v740, 5
      %v743 = vor.u32 %v739, %v742
      %v744 = vrot.slane %v743, 4
      %v746 = vshll.u32 %v227, 16
      %v748 = vrot.slane %v746, 5
      %v749 = vsel %vm591, %v744, %v748
      %v750 = vshrl.u32 %v227, 16
      %v752 = vrot.slane %v750, 4
      %v753 = vor.u32 %v752, %v748
      %v754 = vrot.slane %v753, 4
      %v756 = vshll.u32 %v228, 16
      %v758 = vrot.slane %v756, 5
      %v759 = vsel %vm591, %v754, %v758
      %v761 = vshrl.u32 %v229, 16
      %v763 = vrot.slane %v761, 4
      %v764 = vshll.u32 %v229, 16
      %v766 = vrot.slane %v764, 5
      %v767 = vor.u32 %v763, %v766
      %v768 = vrot.slane %v767, 4
      %v770 = vshll.u32 %v230, 16
      %v772 = vrot.slane %v770, 5
      %v773 = vsel %vm591, %v768, %v772
      %v774 = vshrl.u32 %v230, 16
      %v776 = vrot.slane %v774, 4
      %v777 = vor.u32 %v776, %v772
      %v778 = vrot.slane %v777, 4
      %v780 = vshll.u32 %v231, 16
      %v782 = vrot.slane %v780, 5
      %v783 = vsel %vm591, %v778, %v782
      %v785 = vshrl.u32 %v232, 16
      %v787 = vrot.slane %v785, 4
      %v788 = vshll.u32 %v232, 16
      %v790 = vrot.slane %v788, 5
      %v791 = vor.u32 %v787, %v790
      %v792 = vrot.slane %v791, 4
      %v794 = vshll.u32 %v233, 16
      %v796 = vrot.slane %v794, 5
      %v797 = vsel %vm591, %v792, %v796
      %v798 = vshrl.u32 %v233, 16
      %v800 = vrot.slane %v798, 4
      %v801 = vor.u32 %v800, %v796
      %v802 = vrot.slane %v801, 4
      %v804 = vshll.u32 %v234, 16
      %v806 = vrot.slane %v804, 5
      %v807 = vsel %vm591, %v802, %v806
      %v809 = vshrl.u32 %v235, 16
      %v811 = vrot.slane %v809, 4
      %v812 = vshll.u32 %v235, 16
      %v814 = vrot.slane %v812, 5
      %v815 = vor.u32 %v811, %v814
      %v816 = vrot.slane %v815, 4
      %v818 = vshll.u32 %v236, 16
      %v820 = vrot.slane %v818, 5
      %v821 = vsel %vm591, %v816, %v820
      %v822 = vshrl.u32 %v236, 16
      %v824 = vrot.slane %v822, 4
      %v825 = vor.u32 %v824, %v820
      %v826 = vrot.slane %v825, 4
      %v828 = vshll.u32 %v237, 16
      %v830 = vrot.slane %v828, 5
      %v831 = vsel %vm591, %v826, %v830
      %v833 = vshrl.u32 %v238, 16
      %v835 = vrot.slane %v833, 4
      %v836 = vshll.u32 %v238, 16
      %v838 = vrot.slane %v836, 5
      %v839 = vor.u32 %v835, %v838
      %v840 = vrot.slane %v839, 4
      %v842 = vshll.u32 %v239, 16
      %v844 = vrot.slane %v842, 5
      %v845 = vsel %vm591, %v840, %v844
      %v846 = vshrl.u32 %v239, 16
      %v848 = vrot.slane %v846, 4
      %v849 = vor.u32 %v848, %v844
      %v850 = vrot.slane %v849, 4
      %v852 = vshll.u32 %v240, 16
      %v854 = vrot.slane %v852, 5
      %v855 = vsel %vm591, %v850, %v854
      %v857 = vshrl.u32 %v241, 16
      %v859 = vrot.slane %v857, 4
      %v860 = vshll.u32 %v241, 16
      %v862 = vrot.slane %v860, 5
      %v863 = vor.u32 %v859, %v862
      %v864 = vrot.slane %v863, 4
      %v866 = vshll.u32 %v242, 16
      %v868 = vrot.slane %v866, 5
      %v869 = vsel %vm591, %v864, %v868
      %v870 = vshrl.u32 %v242, 16
      %v872 = vrot.slane %v870, 4
      %v873 = vor.u32 %v872, %v868
      %v874 = vrot.slane %v873, 4
      %v876 = vshll.u32 %v243, 16
      %v878 = vrot.slane %v876, 5
      %v879 = vsel %vm591, %v874, %v878
      %v881 = vshrl.u32 %v244, 16
      %v883 = vrot.slane %v881, 4
      %v884 = vshll.u32 %v244, 16
      %v886 = vrot.slane %v884, 5
      %v887 = vor.u32 %v883, %v886
      %v888 = vrot.slane %v887, 4
      %v890 = vshll.u32 %v245, 16
      %v892 = vrot.slane %v890, 5
      %v893 = vsel %vm591, %v888, %v892
      %v894 = vshrl.u32 %v245, 16
      %v896 = vrot.slane %v894, 4
      %v897 = vor.u32 %v896, %v892
      %v898 = vrot.slane %v897, 4
      %v900 = vshll.u32 %v246, 16
      %v902 = vrot.slane %v900, 5
      %v903 = vsel %vm591, %v898, %v902
      %v905 = vshrl.u32 %v247, 16
      %v907 = vrot.slane %v905, 4
      %v908 = vshll.u32 %v247, 16
      %v910 = vrot.slane %v908, 5
      %v911 = vor.u32 %v907, %v910
      %v912 = vrot.slane %v911, 4
      %v914 = vshll.u32 %v248, 16
      %v916 = vrot.slane %v914, 5
      %v917 = vsel %vm591, %v912, %v916
      %v918 = vshrl.u32 %v248, 16
      %v920 = vrot.slane %v918, 4
      %v921 = vor.u32 %v920, %v916
      %v922 = vrot.slane %v921, 4
      %v924 = vshll.u32 %v249, 16
      %v926 = vrot.slane %v924, 5
      %v927 = vsel %vm591, %v922, %v926
      %v929 = vshrl.u32 %v250, 16
      %v931 = vrot.slane %v929, 4
      %v932 = vshll.u32 %v250, 16
      %v934 = vrot.slane %v932, 5
      %v935 = vor.u32 %v931, %v934
      %v936 = vrot.slane %v935, 4
      %v938 = vshll.u32 %v251, 16
      %v940 = vrot.slane %v938, 5
      %v941 = vsel %vm591, %v936, %v940
      %v942 = vshrl.u32 %v251, 16
      %v944 = vrot.slane %v942, 4
      %v945 = vor.u32 %v944, %v940
      %v946 = vrot.slane %v945, 4
      %v948 = vshll.u32 %v252, 16
      %v950 = vrot.slane %v948, 5
      %v951 = vsel %vm591, %v946, %v950
      %v953 = vshrl.u32 %v253, 16
      %v955 = vrot.slane %v953, 4
      %v956 = vshll.u32 %v253, 16
      %v958 = vrot.slane %v956, 5
      %v959 = vor.u32 %v955, %v958
      %v960 = vrot.slane %v959, 4
      %v962 = vshll.u32 %v254, 16
      %v964 = vrot.slane %v962, 5
      %v965 = vsel %vm591, %v960, %v964
      %v966 = vshrl.u32 %v254, 16
      %v968 = vrot.slane %v966, 4
      %v969 = vor.u32 %v968, %v964
      %v970 = vrot.slane %v969, 4
      %v972 = vshll.u32 %v255, 16
      %v974 = vrot.slane %v972, 5
      %v975 = vsel %vm591, %v970, %v974
      %s976 = scalar_lea.vmem %s1, 2
      %v977 = vld [vmem:[%s976] sm:$0x3]
      %v978 = vunpack.c.l.b16 %v605
      %v979 = vunpack.c.l.b16 %v615
      %v980 = vunpack.c.l.b16 %v629
      %v981 = vunpack.c.l.b16 %v639
      %v982 = vunpack.c.l.b16 %v653
      %v983 = vunpack.c.l.b16 %v663
      %v984 = vunpack.c.l.b16 %v677
      %v985 = vunpack.c.l.b16 %v687
      %v986 = vunpack.c.l.b16 %v701
      %v987 = vunpack.c.l.b16 %v711
      %v988 = vunpack.c.l.b16 %v725
      %v989 = vunpack.c.l.b16 %v735
      %v990 = vunpack.c.l.b16 %v749
      %v991 = vunpack.c.l.b16 %v759
      %v992 = vunpack.c.l.b16 %v773
      %v993 = vunpack.c.l.b16 %v783
      %v994 = vunpack.c.l.b16 %v797
      %v995 = vunpack.c.l.b16 %v807
      %v996 = vunpack.c.l.b16 %v821
      %v997 = vunpack.c.l.b16 %v831
      %v998 = vunpack.c.l.b16 %v845
      %v999 = vunpack.c.l.b16 %v855
      %v1000 = vunpack.c.l.b16 %v869
      %v1001 = vunpack.c.l.b16 %v879
      %v1002 = vunpack.c.l.b16 %v893
      %v1003 = vunpack.c.l.b16 %v903
      %v1004 = vunpack.c.l.b16 %v917
      %v1005 = vunpack.c.l.b16 %v927
      %v1006 = vunpack.c.l.b16 %v941
      %v1007 = vunpack.c.l.b16 %v951
      %v1008 = vunpack.c.l.b16 %v965
      %v1009 = vunpack.c.l.b16 %v975
      %v1010 = vpack.c.b16 %v979, %v978
      %v1011 = vpack.c.b16 %v981, %v980
      %v1012 = vpack.c.b16 %v983, %v982
      %v1013 = vpack.c.b16 %v985, %v984
      %v1014 = vpack.c.b16 %v987, %v986
      %v1015 = vpack.c.b16 %v989, %v988
      %v1016 = vpack.c.b16 %v991, %v990
      %v1017 = vpack.c.b16 %v993, %v992
      %v1018 = vpack.c.b16 %v995, %v994
      %v1019 = vpack.c.b16 %v997, %v996
      %v1020 = vpack.c.b16 %v999, %v998
      %v1021 = vpack.c.b16 %v1001, %v1000
      %v1022 = vpack.c.b16 %v1003, %v1002
      %v1023 = vpack.c.b16 %v1005, %v1004
      %v1024 = vpack.c.b16 %v1007, %v1006
      %v1025 = vpack.c.b16 %v1009, %v1008
      %v1027 = vsel %vm343, %v1010, 0
      %v1030 = vsel %vm343, %v1011, 0
      %v1033 = vsel %vm343, %v1012, 0
      %v1036 = vsel %vm343, %v1013, 0
      %v1039 = vsel %vm343, %v1014, 0
      %v1042 = vsel %vm343, %v1015, 0
      %v1045 = vsel %vm343, %v1016, 0
      %v1048 = vsel %vm343, %v1017, 0
      %v1051 = vsel %vm343, %v1018, 0
      %v1054 = vsel %vm343, %v1019, 0
      %v1057 = vsel %vm343, %v1020, 0
      %v1060 = vsel %vm343, %v1021, 0
      %v1063 = vsel %vm343, %v1022, 0
      %v1066 = vsel %vm343, %v1023, 0
      %v1069 = vsel %vm343, %v1024, 0
      %v1072 = vsel %vm343, %v1025, 0
      %v1075 = vsel %vm392, %v977, 0
      %1077 = vmatprep.subr.bf16.mxu0 0
      %1078 = vmatpush1.bf16.msra.mxu0 %v1075
      %1079 = vmatprep.subr.bf16.mxu0 0
      %1080 = vmatpush1.bf16.msra.mxu0 0
      %1081 = vmatprep.subr.bf16.mxu0 0
      %1082 = vmatpush1.bf16.msra.mxu0 0
      %1083 = vmatprep.subr.bf16.mxu0 0
      %1084 = vmatpush1.bf16.msra.mxu0 0
      %1085 = vmatprep.subr.bf16.mxu0 0
      %1086 = vmatpush1.bf16.msra.mxu0 0
      %1087 = vmatprep.subr.bf16.mxu0 0
      %1088 = vmatpush1.bf16.msra.mxu0 0
      %1089 = vmatprep.subr.bf16.mxu0 0
      %1090 = vmatpush1.bf16.msra.mxu0 0
      %1091 = vmatprep.subr.bf16.mxu0 0
      %1092 = vmatpush1.bf16.msra.mxu0 0
      %1093 = vmatprep.subr.bf16.mxu0 0
      %1094 = vmatpush1.bf16.msra.mxu0 0
      %1095 = vmatprep.subr.bf16.mxu0 0
      %1096 = vmatpush1.bf16.msra.mxu0 0
      %1097 = vmatprep.subr.bf16.mxu0 0
      %1098 = vmatpush1.bf16.msra.mxu0 0
      %1099 = vmatprep.subr.bf16.mxu0 0
      %1100 = vmatpush1.bf16.msra.mxu0 0
      %1101 = vmatprep.subr.bf16.mxu0 0
      %1102 = vmatpush1.bf16.msra.mxu0 0
      %1103 = vmatprep.subr.bf16.mxu0 0
      %1104 = vmatpush1.bf16.msra.mxu0 0
      %1105 = vmatprep.subr.bf16.mxu0 0
      %1106 = vmatpush1.bf16.msra.mxu0 0
      %1107 = vmatprep.subr.bf16.mxu0 0
      %1108 = vmatpush1.bf16.msra.mxu0 0
      %1109 = vmatprep.mubr.bf16.mxu0 0
      %1110 = vmatmul.mubr.bf16.gmra.mrb[0].mxu0 %v1027
      %v1111 = vpop.f32.mrb[0].mxu0
      %v1112 = vadd.f32 0.0, %v1111
      %v1113 = vpop.f32.mrb[0].mxu0
      %v1114 = vpop.f32.mrb[0].mxu0
      %v1115 = vadd.f32 0.0, %v1114
      %v1116 = vpop.f32.mrb[0].mxu0
      %1117 = vmatprep.mubr.bf16.mxu0 0
      %1118 = vmatmul.mubr.bf16.gmra.mrb[0].mxu0 %v1030
      %v1119 = vpop.f32.mrb[0].mxu0
      %v1120 = vadd.f32 0.0, %v1119
      %v1121 = vpop.f32.mrb[0].mxu0
      %v1122 = vpop.f32.mrb[0].mxu0
      %v1123 = vadd.f32 0.0, %v1122
      %v1124 = vpop.f32.mrb[0].mxu0
      %1125 = vmatprep.mubr.bf16.mxu0 0
      %1126 = vmatmul.mubr.bf16.gmra.mrb[0].mxu0 %v1033
      %v1127 = vpop.f32.mrb[0].mxu0
      %v1128 = vadd.f32 0.0, %v1127
      %v1129 = vpop.f32.mrb[0].mxu0
      %v1130 = vpop.f32.mrb[0].mxu0
      %v1131 = vadd.f32 0.0, %v1130
      %v1132 = vpop.f32.mrb[0].mxu0
      %1133 = vmatprep.mubr.bf16.mxu0 0
      %1134 = vmatmul.mubr.bf16.gmra.mrb[0].mxu0 %v1036
      %v1135 = vpop.f32.mrb[0].mxu0
      %v1136 = vadd.f32 0.0, %v1135
      %v1137 = vpop.f32.mrb[0].mxu0
      %v1138 = vpop.f32.mrb[0].mxu0
      %v1139 = vadd.f32 0.0, %v1138
      %v1140 = vpop.f32.mrb[0].mxu0
      %1141 = vmatprep.mubr.bf16.mxu0 0
      %1142 = vmatmul.mubr.bf16.gmra.mrb[0].mxu0 %v1039
      %v1143 = vpop.f32.mrb[0].mxu0
      %v1144 = vadd.f32 0.0, %v1143
      %v1145 = vpop.f32.mrb[0].mxu0
      %v1146 = vpop.f32.mrb[0].mxu0
      %v1147 = vadd.f32 0.0, %v1146
      %v1148 = vpop.f32.mrb[0].mxu0
      %1149 = vmatprep.mubr.bf16.mxu0 0
      %1150 = vmatmul.mubr.bf16.gmra.mrb[0].mxu0 %v1042
      %v1151 = vpop.f32.mrb[0].mxu0
      %v1152 = vadd.f32 0.0, %v1151
      %v1153 = vpop.f32.mrb[0].mxu0
      %v1154 = vpop.f32.mrb[0].mxu0
      %v1155 = vadd.f32 0.0, %v1154
      %v1156 = vpop.f32.mrb[0].mxu0
      %1157 = vmatprep.mubr.bf16.mxu0 0
      %1158 = vmatmul.mubr.bf16.gmra.mrb[0].mxu0 %v1045
      %v1159 = vpop.f32.mrb[0].mxu0
      %v1160 = vadd.f32 0.0, %v1159
      %v1161 = vpop.f32.mrb[0].mxu0
      %v1162 = vpop.f32.mrb[0].mxu0
      %v1163 = vadd.f32 0.0, %v1162
      %v1164 = vpop.f32.mrb[0].mxu0
      %1165 = vmatprep.mubr.bf16.mxu0 0
      %1166 = vmatmul.mubr.bf16.gmra.mrb[0].mxu0 %v1048
      %v1167 = vpop.f32.mrb[0].mxu0
      %v1168 = vadd.f32 0.0, %v1167
      %v1169 = vpop.f32.mrb[0].mxu0
      %v1170 = vpop.f32.mrb[0].mxu0
      %v1171 = vadd.f32 0.0, %v1170
      %v1172 = vpop.f32.mrb[0].mxu0
      %1173 = vmatprep.mubr.bf16.mxu0 0
      %1174 = vmatmul.mubr.bf16.gmra.mrb[0].mxu0 %v1051
      %v1175 = vpop.f32.mrb[0].mxu0
      %v1176 = vadd.f32 0.0, %v1175
      %v1177 = vpop.f32.mrb[0].mxu0
      %v1178 = vpop.f32.mrb[0].mxu0
      %v1179 = vadd.f32 0.0, %v1178
      %v1180 = vpop.f32.mrb[0].mxu0
      %1181 = vmatprep.mubr.bf16.mxu0 0
      %1182 = vmatmul.mubr.bf16.gmra.mrb[0].mxu0 %v1054
      %v1183 = vpop.f32.mrb[0].mxu0
      %v1184 = vadd.f32 0.0, %v1183
      %v1185 = vpop.f32.mrb[0].mxu0
      %v1186 = vpop.f32.mrb[0].mxu0
      %v1187 = vadd.f32 0.0, %v1186
      %v1188 = vpop.f32.mrb[0].mxu0
      %1189 = vmatprep.mubr.bf16.mxu0 0
      %1190 = vmatmul.mubr.bf16.gmra.mrb[0].mxu0 %v1057
      %v1191 = vpop.f32.mrb[0].mxu0
      %v1192 = vadd.f32 0.0, %v1191
      %v1193 = vpop.f32.mrb[0].mxu0
      %v1194 = vpop.f32.mrb[0].mxu0
      %v1195 = vadd.f32 0.0, %v1194
      %v1196 = vpop.f32.mrb[0].mxu0
      %1197 = vmatprep.mubr.bf16.mxu0 0
      %1198 = vmatmul.mubr.bf16.gmra.mrb[0].mxu0 %v1060
      %v1199 = vpop.f32.mrb[0].mxu0
      %v1200 = vadd.f32 0.0, %v1199
      %v1201 = vpop.f32.mrb[0].mxu0
      %v1202 = vpop.f32.mrb[0].mxu0
      %v1203 = vadd.f32 0.0, %v1202
      %v1204 = vpop.f32.mrb[0].mxu0
      %1205 = vmatprep.mubr.bf16.mxu0 0
      %1206 = vmatmul.mubr.bf16.gmra.mrb[0].mxu0 %v1063
      %v1207 = vpop.f32.mrb[0].mxu0
      %v1208 = vadd.f32 0.0, %v1207
      %v1209 = vpop.f32.mrb[0].mxu0
      %v1210 = vpop.f32.mrb[0].mxu0
      %v1211 = vadd.f32 0.0, %v1210
      %v1212 = vpop.f32.mrb[0].mxu0
      %1213 = vmatprep.mubr.bf16.mxu0 0
      %1214 = vmatmul.mubr.bf16.gmra.mrb[0].mxu0 %v1066
      %v1215 = vpop.f32.mrb[0].mxu0
      %v1216 = vadd.f32 0.0, %v1215
      %v1217 = vpop.f32.mrb[0].mxu0
      %v1218 = vpop.f32.mrb[0].mxu0
      %v1219 = vadd.f32 0.0, %v1218
      %v1220 = vpop.f32.mrb[0].mxu0
      %1221 = vmatprep.mubr.bf16.mxu0 0
      %1222 = vmatmul.mubr.bf16.gmra.mrb[0].mxu0 %v1069
      %v1223 = vpop.f32.mrb[0].mxu0
      %v1224 = vadd.f32 0.0, %v1223
      %v1225 = vpop.f32.mrb[0].mxu0
      %v1226 = vpop.f32.mrb[0].mxu0
      %v1227 = vadd.f32 0.0, %v1226
      %v1228 = vpop.f32.mrb[0].mxu0
      %1229 = vmatprep.mubr.bf16.mxu0 0
      %1230 = vmatmul.mubr.bf16.gmra.mrb[0].mxu0 %v1072
      %v1231 = vpop.f32.mrb[0].mxu0
      %v1232 = vadd.f32 0.0, %v1231
      %v1233 = vpop.f32.mrb[0].mxu0
      %v1234 = vpop.f32.mrb[0].mxu0
      %v1235 = vadd.f32 0.0, %v1234
      %v1236 = vpop.f32.mrb[0].mxu0
      %1237 = vdwg.mxu0
      %v1238 = vld [vmem:[#allocation2] sm:$0xff]
      %v1239 = vld [vmem:[#allocation2 + $0x8] sm:$0xff]
      %v1240 = vld [vmem:[#allocation2 + $0x10] sm:$0xff]
      %v1241 = vld [vmem:[#allocation2 + $0x18] sm:$0xff]
      %v1242 = vld [vmem:[#allocation2 + $0x20] sm:$0xff]
      %v1243 = vld [vmem:[#allocation2 + $0x28] sm:$0xff]
      %v1244 = vld [vmem:[#allocation2 + $0x30] sm:$0xff]
      %v1245 = vld [vmem:[#allocation2 + $0x38] sm:$0xff]
      %v1246 = vld [vmem:[#allocation2 + $0x40] sm:$0xff]
      %v1247 = vld [vmem:[#allocation2 + $0x48] sm:$0xff]
      %v1248 = vld [vmem:[#allocation2 + $0x50] sm:$0xff]
      %v1249 = vld [vmem:[#allocation2 + $0x58] sm:$0xff]
      %v1250 = vld [vmem:[#allocation2 + $0x60] sm:$0xff]
      %v1251 = vld [vmem:[#allocation2 + $0x68] sm:$0xff]
      %v1252 = vld [vmem:[#allocation2 + $0x70] sm:$0xff]
      %v1253 = vld [vmem:[#allocation2 + $0x78] sm:$0xff]
      %v1254 = vld [vmem:[#allocation2 + $0x80] sm:$0xff]
      %v1255 = vld [vmem:[#allocation2 + $0x88] sm:$0xff]
      %v1256 = vld [vmem:[#allocation2 + $0x90] sm:$0xff]
      %v1257 = vld [vmem:[#allocation2 + $0x98] sm:$0xff]
      %v1258 = vld [vmem:[#allocation2 + $0xa0] sm:$0xff]
      %v1259 = vld [vmem:[#allocation2 + $0xa8] sm:$0xff]
      %v1260 = vld [vmem:[#allocation2 + $0xb0] sm:$0xff]
      %v1261 = vld [vmem:[#allocation2 + $0xb8] sm:$0xff]
      %v1262 = vld [vmem:[#allocation2 + $0xc0] sm:$0xff]
      %v1263 = vld [vmem:[#allocation2 + $0xc8] sm:$0xff]
      %v1264 = vld [vmem:[#allocation2 + $0xd0] sm:$0xff]
      %v1265 = vld [vmem:[#allocation2 + $0xd8] sm:$0xff]
      %v1266 = vld [vmem:[#allocation2 + $0xe0] sm:$0xff]
      %v1267 = vld [vmem:[#allocation2 + $0xe8] sm:$0xff]
      %v1268 = vld [vmem:[#allocation2 + $0xf0] sm:$0xff]
      %v1269 = vld [vmem:[#allocation2 + $0xf8] sm:$0xff]
      %v1270 = vadd.f32 %v1238, %v1112
      %v1271 = vadd.f32 %v1239, %v1115
      %v1272 = vadd.f32 %v1240, %v1120
      %v1273 = vadd.f32 %v1241, %v1123
      %v1274 = vadd.f32 %v1242, %v1128
      %v1275 = vadd.f32 %v1243, %v1131
      %v1276 = vadd.f32 %v1244, %v1136
      %v1277 = vadd.f32 %v1245, %v1139
      %v1278 = vadd.f32 %v1246, %v1144
      %v1279 = vadd.f32 %v1247, %v1147
      %v1280 = vadd.f32 %v1248, %v1152
      %v1281 = vadd.f32 %v1249, %v1155
      %v1282 = vadd.f32 %v1250, %v1160
      %v1283 = vadd.f32 %v1251, %v1163
      %v1284 = vadd.f32 %v1252, %v1168
      %v1285 = vadd.f32 %v1253, %v1171
      %v1286 = vadd.f32 %v1254, %v1176
      %v1287 = vadd.f32 %v1255, %v1179
      %v1288 = vadd.f32 %v1256, %v1184
      %v1289 = vadd.f32 %v1257, %v1187
      %v1290 = vadd.f32 %v1258, %v1192
      %v1291 = vadd.f32 %v1259, %v1195
      %v1292 = vadd.f32 %v1260, %v1200
      %v1293 = vadd.f32 %v1261, %v1203
      %v1294 = vadd.f32 %v1262, %v1208
      %v1295 = vadd.f32 %v1263, %v1211
      %v1296 = vadd.f32 %v1264, %v1216
      %v1297 = vadd.f32 %v1265, %v1219
      %v1298 = vadd.f32 %v1266, %v1224
      %v1299 = vadd.f32 %v1267, %v1227
      %v1300 = vadd.f32 %v1268, %v1232
      %v1301 = vadd.f32 %v1269, %v1235
      %1302 = vst [vmem:[#allocation2] sm:$0xff] %v1270
      %1303 = vst [vmem:[#allocation2 + $0x8] sm:$0xff] %v1271
      %1304 = vst [vmem:[#allocation2 + $0x10] sm:$0xff] %v1272
      %1305 = vst [vmem:[#allocation2 + $0x18] sm:$0xff] %v1273
      %1306 = vst [vmem:[#allocation2 + $0x20] sm:$0xff] %v1274
      %1307 = vst [vmem:[#allocation2 + $0x28] sm:$0xff] %v1275
      %1308 = vst [vmem:[#allocation2 + $0x30] sm:$0xff] %v1276
      %1309 = vst [vmem:[#allocation2 + $0x38] sm:$0xff] %v1277
      %1310 = vst [vmem:[#allocation2 + $0x40] sm:$0xff] %v1278
      %1311 = vst [vmem:[#allocation2 + $0x48] sm:$0xff] %v1279
      %1312 = vst [vmem:[#allocation2 + $0x50] sm:$0xff] %v1280
      %1313 = vst [vmem:[#allocation2 + $0x58] sm:$0xff] %v1281
      %1314 = vst [vmem:[#allocation2 + $0x60] sm:$0xff] %v1282
      %1315 = vst [vmem:[#allocation2 + $0x68] sm:$0xff] %v1283
      %1316 = vst [vmem:[#allocation2 + $0x70] sm:$0xff] %v1284
      %1317 = vst [vmem:[#allocation2 + $0x78] sm:$0xff] %v1285
      %1318 = vst [vmem:[#allocation2 + $0x80] sm:$0xff] %v1286
      %1319 = vst [vmem:[#allocation2 + $0x88] sm:$0xff] %v1287
      %1320 = vst [vmem:[#allocation2 + $0x90] sm:$0xff] %v1288
      %1321 = vst [vmem:[#allocation2 + $0x98] sm:$0xff] %v1289
      %1322 = vst [vmem:[#allocation2 + $0xa0] sm:$0xff] %v1290
      %1323 = vst [vmem:[#allocation2 + $0xa8] sm:$0xff] %v1291
      %1324 = vst [vmem:[#allocation2 + $0xb0] sm:$0xff] %v1292
      %1325 = vst [vmem:[#allocation2 + $0xb8] sm:$0xff] %v1293
      %1326 = vst [vmem:[#allocation2 + $0xc0] sm:$0xff] %v1294
      %1327 = vst [vmem:[#allocation2 + $0xc8] sm:$0xff] %v1295
      %1328 = vst [vmem:[#allocation2 + $0xd0] sm:$0xff] %v1296
      %1329 = vst [vmem:[#allocation2 + $0xd8] sm:$0xff] %v1297
      %1330 = vst [vmem:[#allocation2 + $0xe0] sm:$0xff] %v1298
      %1331 = vst [vmem:[#allocation2 + $0xe8] sm:$0xff] %v1299
      %1332 = vst [vmem:[#allocation2 + $0xf0] sm:$0xff] %v1300
      %1333 = vst [vmem:[#allocation2 + $0xf8] sm:$0xff] %v1301
      %vm1350 = vcmask 1042432
      %vm1351 = vcmask 1046532
      %vm1352 = vmor %vm1350, %vm1351
      %v1353 = vrot.slane %v208, 5
      %v1354 = vrot.slane %v1353, 4
      %v1355 = vrot.slane %v209, 5
      %v1356 = vsel %vm1352, %v1354, %v1355
      %v1357 = vrot.slane %v1355, 4
      %v1358 = vrot.slane %v210, 5
      %v1359 = vsel %vm1352, %v1357, %v1358
      %v1360 = vrot.slane %v211, 5
      %v1361 = vrot.slane %v1360, 4
      %v1362 = vrot.slane %v212, 5
      %v1363 = vsel %vm1352, %v1361, %v1362
      %v1364 = vrot.slane %v1362, 4
      %v1365 = vrot.slane %v213, 5
      %v1366 = vsel %vm1352, %v1364, %v1365
      %v1367 = vrot.slane %v214, 5
      %v1368 = vrot.slane %v1367, 4
      %v1369 = vrot.slane %v215, 5
      %v1370 = vsel %vm1352, %v1368, %v1369
      %v1371 = vrot.slane %v1369, 4
      %v1372 = vrot.slane %v216, 5
      %v1373 = vsel %vm1352, %v1371, %v1372
      %v1374 = vrot.slane %v217, 5
      %v1375 = vrot.slane %v1374, 4
      %v1376 = vrot.slane %v218, 5
      %v1377 = vsel %vm1352, %v1375, %v1376
      %v1378 = vrot.slane %v1376, 4
      %v1379 = vrot.slane %v219, 5
      %v1380 = vsel %vm1352, %v1378, %v1379
      %v1381 = vrot.slane %v220, 5
      %v1382 = vrot.slane %v1381, 4
      %v1383 = vrot.slane %v221, 5
      %v1384 = vsel %vm1352, %v1382, %v1383
      %v1385 = vrot.slane %v1383, 4
      %v1386 = vrot.slane %v222, 5
      %v1387 = vsel %vm1352, %v1385, %v1386
      %v1388 = vrot.slane %v223, 5
      %v1389 = vrot.slane %v1388, 4
      %v1390 = vrot.slane %v224, 5
      %v1391 = vsel %vm1352, %v1389, %v1390
      %v1392 = vrot.slane %v1390, 4
      %v1393 = vrot.slane %v225, 5
      %v1394 = vsel %vm1352, %v1392, %v1393
      %v1395 = vrot.slane %v226, 5
      %v1396 = vrot.slane %v1395, 4
      %v1397 = vrot.slane %v227, 5
      %v1398 = vsel %vm1352, %v1396, %v1397
      %v1399 = vrot.slane %v1397, 4
      %v1400 = vrot.slane %v228, 5
      %v1401 = vsel %vm1352, %v1399, %v1400
      %v1402 = vrot.slane %v229, 5
      %v1403 = vrot.slane %v1402, 4
      %v1404 = vrot.slane %v230, 5
      %v1405 = vsel %vm1352, %v1403, %v1404
      %v1406 = vrot.slane %v1404, 4
      %v1407 = vrot.slane %v231, 5
      %v1408 = vsel %vm1352, %v1406, %v1407
      %v1409 = vrot.slane %v232, 5
      %v1410 = vrot.slane %v1409, 4
      %v1411 = vrot.slane %v233, 5
      %v1412 = vsel %vm1352, %v1410, %v1411
      %v1413 = vrot.slane %v1411, 4
      %v1414 = vrot.slane %v234, 5
      %v1415 = vsel %vm1352, %v1413, %v1414
      %v1416 = vrot.slane %v235, 5
      %v1417 = vrot.slane %v1416, 4
      %v1418 = vrot.slane %v236, 5
      %v1419 = vsel %vm1352, %v1417, %v1418
      %v1420 = vrot.slane %v1418, 4
      %v1421 = vrot.slane %v237, 5
      %v1422 = vsel %vm1352, %v1420, %v1421
      %v1423 = vrot.slane %v238, 5
      %v1424 = vrot.slane %v1423, 4
      %v1425 = vrot.slane %v239, 5
      %v1426 = vsel %vm1352, %v1424, %v1425
      %v1427 = vrot.slane %v1425, 4
      %v1428 = vrot.slane %v240, 5
      %v1429 = vsel %vm1352, %v1427, %v1428
      %v1430 = vrot.slane %v241, 5
      %v1431 = vrot.slane %v1430, 4
      %v1432 = vrot.slane %v242, 5
      %v1433 = vsel %vm1352, %v1431, %v1432
      %v1434 = vrot.slane %v1432, 4
      %v1435 = vrot.slane %v243, 5
      %v1436 = vsel %vm1352, %v1434, %v1435
      %v1437 = vrot.slane %v244, 5
      %v1438 = vrot.slane %v1437, 4
      %v1439 = vrot.slane %v245, 5
      %v1440 = vsel %vm1352, %v1438, %v1439
      %v1441 = vrot.slane %v1439, 4
      %v1442 = vrot.slane %v246, 5
      %v1443 = vsel %vm1352, %v1441, %v1442
      %v1444 = vrot.slane %v247, 5
      %v1445 = vrot.slane %v1444, 4
      %v1446 = vrot.slane %v248, 5
      %v1447 = vsel %vm1352, %v1445, %v1446
      %v1448 = vrot.slane %v1446, 4
      %v1449 = vrot.slane %v249, 5
      %v1450 = vsel %vm1352, %v1448, %v1449
      %v1451 = vrot.slane %v250, 5
      %v1452 = vrot.slane %v1451, 4
      %v1453 = vrot.slane %v251, 5
      %v1454 = vsel %vm1352, %v1452, %v1453
      %v1455 = vrot.slane %v1453, 4
      %v1456 = vrot.slane %v252, 5
      %v1457 = vsel %vm1352, %v1455, %v1456
      %v1458 = vrot.slane %v253, 5
      %v1459 = vrot.slane %v1458, 4
      %v1460 = vrot.slane %v254, 5
      %v1461 = vsel %vm1352, %v1459, %v1460
      %v1462 = vrot.slane %v1460, 4
      %v1463 = vrot.slane %v255, 5
      %v1464 = vsel %vm1352, %v1462, %v1463
      %s1465 = scalar_lea.vmem %s1, 4
      %v1466 = vld [vmem:[%s1465] sm:$0x3]
      %v1467 = vunpack.c.l.b16 %v1356
      %v1468 = vunpack.c.l.b16 %v1359
      %v1469 = vunpack.c.l.b16 %v1363
      %v1470 = vunpack.c.l.b16 %v1366
      %v1471 = vunpack.c.l.b16 %v1370
      %v1472 = vunpack.c.l.b16 %v1373
      %v1473 = vunpack.c.l.b16 %v1377
      %v1474 = vunpack.c.l.b16 %v1380
      %v1475 = vunpack.c.l.b16 %v1384
      %v1476 = vunpack.c.l.b16 %v1387
      %v1477 = vunpack.c.l.b16 %v1391
      %v1478 = vunpack.c.l.b16 %v1394
      %v1479 = vunpack.c.l.b16 %v1398
      %v1480 = vunpack.c.l.b16 %v1401
      %v1481 = vunpack.c.l.b16 %v1405
      %v1482 = vunpack.c.l.b16 %v1408
      %v1483 = vunpack.c.l.b16 %v1412
      %v1484 = vunpack.c.l.b16 %v1415
      %v1485 = vunpack.c.l.b16 %v1419
      %v1486 = vunpack.c.l.b16 %v1422
      %v1487 = vunpack.c.l.b16 %v1426
      %v1488 = vunpack.c.l.b16 %v1429
      %v1489 = vunpack.c.l.b16 %v1433
      %v1490 = vunpack.c.l.b16 %v1436
      %v1491 = vunpack.c.l.b16 %v1440
      %v1492 = vunpack.c.l.b16 %v1443
      %v1493 = vunpack.c.l.b16 %v1447
      %v1494 = vunpack.c.l.b16 %v1450
      %v1495 = vunpack.c.l.b16 %v1454
      %v1496 = vunpack.c.l.b16 %v1457
      %v1497 = vunpack.c.l.b16 %v1461
      %v1498 = vunpack.c.l.b16 %v1464
      %v1499 = vpack.c.b16 %v1468, %v1467
      %v1500 = vpack.c.b16 %v1470, %v1469
      %v1501 = vpack.c.b16 %v1472, %v1471
      %v1502 = vpack.c.b16 %v1474, %v1473
      %v1503 = vpack.c.b16 %v1476, %v1475
      %v1504 = vpack.c.b16 %v1478, %v1477
      %v1505 = vpack.c.b16 %v1480, %v1479
      %v1506 = vpack.c.b16 %v1482, %v1481
      %v1507 = vpack.c.b16 %v1484, %v1483
      %v1508 = vpack.c.b16 %v1486, %v1485
      %v1509 = vpack.c.b16 %v1488, %v1487
      %v1510 = vpack.c.b16 %v1490, %v1489
      %v1511 = vpack.c.b16 %v1492, %v1491
      %v1512 = vpack.c.b16 %v1494, %v1493
      %v1513 = vpack.c.b16 %v1496, %v1495
      %v1514 = vpack.c.b16 %v1498, %v1497
      %v1516 = vsel %vm343, %v1499, 0
      %v1519 = vsel %vm343, %v1500, 0
      %v1522 = vsel %vm343, %v1501, 0
      %v1525 = vsel %vm343, %v1502, 0
      %v1528 = vsel %vm343, %v1503, 0
      %v1531 = vsel %vm343, %v1504, 0
      %v1534 = vsel %vm343, %v1505, 0
      %v1537 = vsel %vm343, %v1506, 0
      %v1540 = vsel %vm343, %v1507, 0
      %v1543 = vsel %vm343, %v1508, 0
      %v1546 = vsel %vm343, %v1509, 0
      %v1549 = vsel %vm343, %v1510, 0
      %v1552 = vsel %vm343, %v1511, 0
      %v1555 = vsel %vm343, %v1512, 0
      %v1558 = vsel %vm343, %v1513, 0
      %v1561 = vsel %vm343, %v1514, 0
      %v1564 = vsel %vm392, %v1466, 0
      %1566 = vmatprep.subr.bf16.mxu0 0
      %1567 = vmatpush1.bf16.msra.mxu0 %v1564
      %1568 = vmatprep.subr.bf16.mxu0 0
      %1569 = vmatpush1.bf16.msra.mxu0 0
      %1570 = vmatprep.subr.bf16.mxu0 0
      %1571 = vmatpush1.bf16.msra.mxu0 0
      %1572 = vmatprep.subr.bf16.mxu0 0
      %1573 = vmatpush1.bf16.msra.mxu0 0
      %1574 = vmatprep.subr.bf16.mxu0 0
      %1575 = vmatpush1.bf16.msra.mxu0 0
      %1576 = vmatprep.subr.bf16.mxu0 0
      %1577 = vmatpush1.bf16.msra.mxu0 0
      %1578 = vmatprep.subr.bf16.mxu0 0
      %1579 = vmatpush1.bf16.msra.mxu0 0
      %1580 = vmatprep.subr.bf16.mxu0 0
      %1581 = vmatpush1.bf16.msra.mxu0 0
      %1582 = vmatprep.subr.bf16.mxu0 0
      %1583 = vmatpush1.bf16.msra.mxu0 0
      %1584 = vmatprep.subr.bf16.mxu0 0
      %1585 = vmatpush1.bf16.msra.mxu0 0
      %1586 = vmatprep.subr.bf16.mxu0 0
      %1587 = vmatpush1.bf16.msra.mxu0 0
      %1588 = vmatprep.subr.bf16.mxu0 0
      %1589 = vmatpush1.bf16.msra.mxu0 0
      %1590 = vmatprep.subr.bf16.mxu0 0
      %1591 = vmatpush1.bf16.msra.mxu0 0
      %1592 = vmatprep.subr.bf16.mxu0 0
      %1593 = vmatpush1.bf16.msra.mxu0 0
      %1594 = vmatprep.subr.bf16.mxu0 0
      %1595 = vmatpush1.bf16.msra.mxu0 0
      %1596 = vmatprep.subr.bf16.mxu0 0
      %1597 = vmatpush1.bf16.msra.mxu0 0
      %1598 = vmatprep.mubr.bf16.mxu0 0
      %1599 = vmatmul.mubr.bf16.gmra.mrb[0].mxu0 %v1516
      %v1600 = vpop.f32.mrb[0].mxu0
      %v1601 = vadd.f32 0.0, %v1600
      %v1602 = vpop.f32.mrb[0].mxu0
      %v1603 = vpop.f32.mrb[0].mxu0
      %v1604 = vadd.f32 0.0, %v1603
      %v1605 = vpop.f32.mrb[0].mxu0
      %1606 = vmatprep.mubr.bf16.mxu0 0
      %1607 = vmatmul.mubr.bf16.gmra.mrb[0].mxu0 %v1519
      %v1608 = vpop.f32.mrb[0].mxu0
      %v1609 = vadd.f32 0.0, %v1608
      %v1610 = vpop.f32.mrb[0].mxu0
      %v1611 = vpop.f32.mrb[0].mxu0
      %v1612 = vadd.f32 0.0, %v1611
      %v1613 = vpop.f32.mrb[0].mxu0
      %1614 = vmatprep.mubr.bf16.mxu0 0
      %1615 = vmatmul.mubr.bf16.gmra.mrb[0].mxu0 %v1522
      %v1616 = vpop.f32.mrb[0].mxu0
      %v1617 = vadd.f32 0.0, %v1616
      %v1618 = vpop.f32.mrb[0].mxu0
      %v1619 = vpop.f32.mrb[0].mxu0
      %v1620 = vadd.f32 0.0, %v1619
      %v1621 = vpop.f32.mrb[0].mxu0
      %1622 = vmatprep.mubr.bf16.mxu0 0
      %1623 = vmatmul.mubr.bf16.gmra.mrb[0].mxu0 %v1525
      %v1624 = vpop.f32.mrb[0].mxu0
      %v1625 = vadd.f32 0.0, %v1624
      %v1626 = vpop.f32.mrb[0].mxu0
      %v1627 = vpop.f32.mrb[0].mxu0
      %v1628 = vadd.f32 0.0, %v1627
      %v1629 = vpop.f32.mrb[0].mxu0
      %1630 = vmatprep.mubr.bf16.mxu0 0
      %1631 = vmatmul.mubr.bf16.gmra.mrb[0].mxu0 %v1528
      %v1632 = vpop.f32.mrb[0].mxu0
      %v1633 = vadd.f32 0.0, %v1632
      %v1634 = vpop.f32.mrb[0].mxu0
      %v1635 = vpop.f32.mrb[0].mxu0
      %v1636 = vadd.f32 0.0, %v1635
      %v1637 = vpop.f32.mrb[0].mxu0
      %1638 = vmatprep.mubr.bf16.mxu0 0
      %1639 = vmatmul.mubr.bf16.gmra.mrb[0].mxu0 %v1531
      %v1640 = vpop.f32.mrb[0].mxu0
      %v1641 = vadd.f32 0.0, %v1640
      %v1642 = vpop.f32.mrb[0].mxu0
      %v1643 = vpop.f32.mrb[0].mxu0
      %v1644 = vadd.f32 0.0, %v1643
      %v1645 = vpop.f32.mrb[0].mxu0
      %1646 = vmatprep.mubr.bf16.mxu0 0
      %1647 = vmatmul.mubr.bf16.gmra.mrb[0].mxu0 %v1534
      %v1648 = vpop.f32.mrb[0].mxu0
      %v1649 = vadd.f32 0.0, %v1648
      %v1650 = vpop.f32.mrb[0].mxu0
      %v1651 = vpop.f32.mrb[0].mxu0
      %v1652 = vadd.f32 0.0, %v1651
      %v1653 = vpop.f32.mrb[0].mxu0
      %1654 = vmatprep.mubr.bf16.mxu0 0
      %1655 = vmatmul.mubr.bf16.gmra.mrb[0].mxu0 %v1537
      %v1656 = vpop.f32.mrb[0].mxu0
      %v1657 = vadd.f32 0.0, %v1656
      %v1658 = vpop.f32.mrb[0].mxu0
      %v1659 = vpop.f32.mrb[0].mxu0
      %v1660 = vadd.f32 0.0, %v1659
      %v1661 = vpop.f32.mrb[0].mxu0
      %1662 = vmatprep.mubr.bf16.mxu0 0
      %1663 = vmatmul.mubr.bf16.gmra.mrb[0].mxu0 %v1540
      %v1664 = vpop.f32.mrb[0].mxu0
      %v1665 = vadd.f32 0.0, %v1664
      %v1666 = vpop.f32.mrb[0].mxu0
      %v1667 = vpop.f32.mrb[0].mxu0
      %v1668 = vadd.f32 0.0, %v1667
      %v1669 = vpop.f32.mrb[0].mxu0
      %1670 = vmatprep.mubr.bf16.mxu0 0
      %1671 = vmatmul.mubr.bf16.gmra.mrb[0].mxu0 %v1543
      %v1672 = vpop.f32.mrb[0].mxu0
      %v1673 = vadd.f32 0.0, %v1672
      %v1674 = vpop.f32.mrb[0].mxu0
      %v1675 = vpop.f32.mrb[0].mxu0
      %v1676 = vadd.f32 0.0, %v1675
      %v1677 = vpop.f32.mrb[0].mxu0
      %1678 = vmatprep.mubr.bf16.mxu0 0
      %1679 = vmatmul.mubr.bf16.gmra.mrb[0].mxu0 %v1546
      %v1680 = vpop.f32.mrb[0].mxu0
      %v1681 = vadd.f32 0.0, %v1680
      %v1682 = vpop.f32.mrb[0].mxu0
      %v1683 = vpop.f32.mrb[0].mxu0
      %v1684 = vadd.f32 0.0, %v1683
      %v1685 = vpop.f32.mrb[0].mxu0
      %1686 = vmatprep.mubr.bf16.mxu0 0
      %1687 = vmatmul.mubr.bf16.gmra.mrb[0].mxu0 %v1549
      %v1688 = vpop.f32.mrb[0].mxu0
      %v1689 = vadd.f32 0.0, %v1688
      %v1690 = vpop.f32.mrb[0].mxu0
      %v1691 = vpop.f32.mrb[0].mxu0
      %v1692 = vadd.f32 0.0, %v1691
      %v1693 = vpop.f32.mrb[0].mxu0
      %1694 = vmatprep.mubr.bf16.mxu0 0
      %1695 = vmatmul.mubr.bf16.gmra.mrb[0].mxu0 %v1552
      %v1696 = vpop.f32.mrb[0].mxu0
      %v1697 = vadd.f32 0.0, %v1696
      %v1698 = vpop.f32.mrb[0].mxu0
      %v1699 = vpop.f32.mrb[0].mxu0
      %v1700 = vadd.f32 0.0, %v1699
      %v1701 = vpop.f32.mrb[0].mxu0
      %1702 = vmatprep.mubr.bf16.mxu0 0
      %1703 = vmatmul.mubr.bf16.gmra.mrb[0].mxu0 %v1555
      %v1704 = vpop.f32.mrb[0].mxu0
      %v1705 = vadd.f32 0.0, %v1704
      %v1706 = vpop.f32.mrb[0].mxu0
      %v1707 = vpop.f32.mrb[0].mxu0
      %v1708 = vadd.f32 0.0, %v1707
      %v1709 = vpop.f32.mrb[0].mxu0
      %1710 = vmatprep.mubr.bf16.mxu0 0
      %1711 = vmatmul.mubr.bf16.gmra.mrb[0].mxu0 %v1558
      %v1712 = vpop.f32.mrb[0].mxu0
      %v1713 = vadd.f32 0.0, %v1712
      %v1714 = vpop.f32.mrb[0].mxu0
      %v1715 = vpop.f32.mrb[0].mxu0
      %v1716 = vadd.f32 0.0, %v1715
      %v1717 = vpop.f32.mrb[0].mxu0
      %1718 = vmatprep.mubr.bf16.mxu0 0
      %1719 = vmatmul.mubr.bf16.gmra.mrb[0].mxu0 %v1561
      %v1720 = vpop.f32.mrb[0].mxu0
      %v1721 = vadd.f32 0.0, %v1720
      %v1722 = vpop.f32.mrb[0].mxu0
      %v1723 = vpop.f32.mrb[0].mxu0
      %v1724 = vadd.f32 0.0, %v1723
      %v1725 = vpop.f32.mrb[0].mxu0
      %1726 = vdwg.mxu0
      %v1727 = vld [vmem:[#allocation2] sm:$0xff]
      %v1728 = vld [vmem:[#allocation2 + $0x8] sm:$0xff]
      %v1729 = vld [vmem:[#allocation2 + $0x10] sm:$0xff]
      %v1730 = vld [vmem:[#allocation2 + $0x18] sm:$0xff]
      %v1731 = vld [vmem:[#allocation2 + $0x20] sm:$0xff]
      %v1732 = vld [vmem:[#allocation2 + $0x28] sm:$0xff]
      %v1733 = vld [vmem:[#allocation2 + $0x30] sm:$0xff]
      %v1734 = vld [vmem:[#allocation2 + $0x38] sm:$0xff]
      %v1735 = vld [vmem:[#allocation2 + $0x40] sm:$0xff]
      %v1736 = vld [vmem:[#allocation2 + $0x48] sm:$0xff]
      %v1737 = vld [vmem:[#allocation2 + $0x50] sm:$0xff]
      %v1738 = vld [vmem:[#allocation2 + $0x58] sm:$0xff]
      %v1739 = vld [vmem:[#allocation2 + $0x60] sm:$0xff]
      %v1740 = vld [vmem:[#allocation2 + $0x68] sm:$0xff]
      %v1741 = vld [vmem:[#allocation2 + $0x70] sm:$0xff]
      %v1742 = vld [vmem:[#allocation2 + $0x78] sm:$0xff]
      %v1743 = vld [vmem:[#allocation2 + $0x80] sm:$0xff]
      %v1744 = vld [vmem:[#allocation2 + $0x88] sm:$0xff]
      %v1745 = vld [vmem:[#allocation2 + $0x90] sm:$0xff]
      %v1746 = vld [vmem:[#allocation2 + $0x98] sm:$0xff]
      %v1747 = vld [vmem:[#allocation2 + $0xa0] sm:$0xff]
      %v1748 = vld [vmem:[#allocation2 + $0xa8] sm:$0xff]
      %v1749 = vld [vmem:[#allocation2 + $0xb0] sm:$0xff]
      %v1750 = vld [vmem:[#allocation2 + $0xb8] sm:$0xff]
      %v1751 = vld [vmem:[#allocation2 + $0xc0] sm:$0xff]
      %v1752 = vld [vmem:[#allocation2 + $0xc8] sm:$0xff]
      %v1753 = vld [vmem:[#allocation2 + $0xd0] sm:$0xff]
      %v1754 = vld [vmem:[#allocation2 + $0xd8] sm:$0xff]
      %v1755 = vld [vmem:[#allocation2 + $0xe0] sm:$0xff]
      %v1756 = vld [vmem:[#allocation2 + $0xe8] sm:$0xff]
      %v1757 = vld [vmem:[#allocation2 + $0xf0] sm:$0xff]
      %v1758 = vld [vmem:[#allocation2 + $0xf8] sm:$0xff]
      %v1759 = vadd.f32 %v1727, %v1601
      %v1760 = vadd.f32 %v1728, %v1604
      %v1761 = vadd.f32 %v1729, %v1609
      %v1762 = vadd.f32 %v1730, %v1612
      %v1763 = vadd.f32 %v1731, %v1617
      %v1764 = vadd.f32 %v1732, %v1620
      %v1765 = vadd.f32 %v1733, %v1625
      %v1766 = vadd.f32 %v1734, %v1628
      %v1767 = vadd.f32 %v1735, %v1633
      %v1768 = vadd.f32 %v1736, %v1636
      %v1769 = vadd.f32 %v1737, %v1641
      %v1770 = vadd.f32 %v1738, %v1644
      %v1771 = vadd.f32 %v1739, %v1649
      %v1772 = vadd.f32 %v1740, %v1652
      %v1773 = vadd.f32 %v1741, %v1657
      %v1774 = vadd.f32 %v1742, %v1660
      %v1775 = vadd.f32 %v1743, %v1665
      %v1776 = vadd.f32 %v1744, %v1668
      %v1777 = vadd.f32 %v1745, %v1673
      %v1778 = vadd.f32 %v1746, %v1676
      %v1779 = vadd.f32 %v1747, %v1681
      %v1780 = vadd.f32 %v1748, %v1684
      %v1781 = vadd.f32 %v1749, %v1689
      %v1782 = vadd.f32 %v1750, %v1692
      %v1783 = vadd.f32 %v1751, %v1697
      %v1784 = vadd.f32 %v1752, %v1700
      %v1785 = vadd.f32 %v1753, %v1705
      %v1786 = vadd.f32 %v1754, %v1708
      %v1787 = vadd.f32 %v1755, %v1713
      %v1788 = vadd.f32 %v1756, %v1716
      %v1789 = vadd.f32 %v1757, %v1721
      %v1790 = vadd.f32 %v1758, %v1724
      %1791 = vst [vmem:[#allocation2] sm:$0xff] %v1759
      %1792 = vst [vmem:[#allocation2 + $0x8] sm:$0xff] %v1760
      %1793 = vst [vmem:[#allocation2 + $0x10] sm:$0xff] %v1761
      %1794 = vst [vmem:[#allocation2 + $0x18] sm:$0xff] %v1762
      %1795 = vst [vmem:[#allocation2 + $0x20] sm:$0xff] %v1763
      %1796 = vst [vmem:[#allocation2 + $0x28] sm:$0xff] %v1764
      %1797 = vst [vmem:[#allocation2 + $0x30] sm:$0xff] %v1765
      %1798 = vst [vmem:[#allocation2 + $0x38] sm:$0xff] %v1766
      %1799 = vst [vmem:[#allocation2 + $0x40] sm:$0xff] %v1767
      %1800 = vst [vmem:[#allocation2 + $0x48] sm:$0xff] %v1768
      %1801 = vst [vmem:[#allocation2 + $0x50] sm:$0xff] %v1769
      %1802 = vst [vmem:[#allocation2 + $0x58] sm:$0xff] %v1770
      %1803 = vst [vmem:[#allocation2 + $0x60] sm:$0xff] %v1771
      %1804 = vst [vmem:[#allocation2 + $0x68] sm:$0xff] %v1772
      %1805 = vst [vmem:[#allocation2 + $0x70] sm:$0xff] %v1773
      %1806 = vst [vmem:[#allocation2 + $0x78] sm:$0xff] %v1774
      %1807 = vst [vmem:[#allocation2 + $0x80] sm:$0xff] %v1775
      %1808 = vst [vmem:[#allocation2 + $0x88] sm:$0xff] %v1776
      %1809 = vst [vmem:[#allocation2 + $0x90] sm:$0xff] %v1777
      %1810 = vst [vmem:[#allocation2 + $0x98] sm:$0xff] %v1778
      %1811 = vst [vmem:[#allocation2 + $0xa0] sm:$0xff] %v1779
      %1812 = vst [vmem:[#allocation2 + $0xa8] sm:$0xff] %v1780
      %1813 = vst [vmem:[#allocation2 + $0xb0] sm:$0xff] %v1781
      %1814 = vst [vmem:[#allocation2 + $0xb8] sm:$0xff] %v1782
      %1815 = vst [vmem:[#allocation2 + $0xc0] sm:$0xff] %v1783
      %1816 = vst [vmem:[#allocation2 + $0xc8] sm:$0xff] %v1784
      %1817 = vst [vmem:[#allocation2 + $0xd0] sm:$0xff] %v1785
      %1818 = vst [vmem:[#allocation2 + $0xd8] sm:$0xff] %v1786
      %1819 = vst [vmem:[#allocation2 + $0xe0] sm:$0xff] %v1787
      %1820 = vst [vmem:[#allocation2 + $0xe8] sm:$0xff] %v1788
      %1821 = vst [vmem:[#allocation2 + $0xf0] sm:$0xff] %v1789
      %1822 = vst [vmem:[#allocation2 + $0xf8] sm:$0xff] %v1790
      %s1823 = scalar_lea.vmem %s1, 6
      %v1824 = vld [vmem:[%s1823] sm:$0x3]
      %v1827 = vunpack.c.l.b16 %v256
      %v1828 = vunpack.c.l.b16 %v257
      %v1829 = vpack.c.b16 %v1828, %v1827
      %v1831 = vsel %vm343, %v1829, 0
      %v1834 = vsel %vm392, %v1824, 0
      %1836 = vmatprep.subr.bf16.mxu0 0
      %1837 = vmatpush1.bf16.msra.mxu0 %v1834
      %1838 = vmatprep.subr.bf16.mxu0 0
      %1839 = vmatpush1.bf16.msra.mxu0 0
      %1840 = vmatprep.subr.bf16.mxu0 0
      %1841 = vmatpush1.bf16.msra.mxu0 0
      %1842 = vmatprep.subr.bf16.mxu0 0
      %1843 = vmatpush1.bf16.msra.mxu0 0
      %1844 = vmatprep.subr.bf16.mxu0 0
      %1845 = vmatpush1.bf16.msra.mxu0 0
      %1846 = vmatprep.subr.bf16.mxu0 0
      %1847 = vmatpush1.bf16.msra.mxu0 0
      %1848 = vmatprep.subr.bf16.mxu0 0
      %1849 = vmatpush1.bf16.msra.mxu0 0
      %1850 = vmatprep.subr.bf16.mxu0 0
      %1851 = vmatpush1.bf16.msra.mxu0 0
      %1852 = vmatprep.subr.bf16.mxu0 0
      %1853 = vmatpush1.bf16.msra.mxu0 0
      %1854 = vmatprep.subr.bf16.mxu0 0
      %1855 = vmatpush1.bf16.msra.mxu0 0
      %1856 = vmatprep.subr.bf16.mxu0 0
      %1857 = vmatpush1.bf16.msra.mxu0 0
      %1858 = vmatprep.subr.bf16.mxu0 0
      %1859 = vmatpush1.bf16.msra.mxu0 0
      %1860 = vmatprep.subr.bf16.mxu0 0
      %1861 = vmatpush1.bf16.msra.mxu0 0
      %1862 = vmatprep.subr.bf16.mxu0 0
      %1863 = vmatpush1.bf16.msra.mxu0 0
      %1864 = vmatprep.subr.bf16.mxu0 0
      %1865 = vmatpush1.bf16.msra.mxu0 0
      %1866 = vmatprep.subr.bf16.mxu0 0
      %1867 = vmatpush1.bf16.msra.mxu0 0
      %1868 = vmatprep.mubr.bf16.mxu0 0
      %1869 = vmatmul.mubr.bf16.gmra.mrb[0].mxu0 %v348
      %v1870 = vpop.f32.mrb[0].mxu0
      %v1871 = vadd.f32 0.0, %v1870
      %v1872 = vpop.f32.mrb[0].mxu0
      %v1873 = vpop.f32.mrb[0].mxu0
      %v1874 = vadd.f32 0.0, %v1873
      %v1875 = vpop.f32.mrb[0].mxu0
      %1876 = vmatprep.mubr.bf16.mxu0 0
      %1877 = vmatmul.mubr.bf16.gmra.mrb[0].mxu0 %v351
      %v1878 = vpop.f32.mrb[0].mxu0
      %v1879 = vadd.f32 0.0, %v1878
      %v1880 = vpop.f32.mrb[0].mxu0
      %v1881 = vpop.f32.mrb[0].mxu0
      %v1882 = vadd.f32 0.0, %v1881
      %v1883 = vpop.f32.mrb[0].mxu0
      %1884 = vmatprep.mubr.bf16.mxu0 0
      %1885 = vmatmul.mubr.bf16.gmra.mrb[0].mxu0 %v354
      %v1886 = vpop.f32.mrb[0].mxu0
      %v1887 = vadd.f32 0.0, %v1886
      %v1888 = vpop.f32.mrb[0].mxu0
      %v1889 = vpop.f32.mrb[0].mxu0
      %v1890 = vadd.f32 0.0, %v1889
      %v1891 = vpop.f32.mrb[0].mxu0
      %1892 = vmatprep.mubr.bf16.mxu0 0
      %1893 = vmatmul.mubr.bf16.gmra.mrb[0].mxu0 %v357
      %v1894 = vpop.f32.mrb[0].mxu0
      %v1895 = vadd.f32 0.0, %v1894
      %v1896 = vpop.f32.mrb[0].mxu0
      %v1897 = vpop.f32.mrb[0].mxu0
      %v1898 = vadd.f32 0.0, %v1897
      %v1899 = vpop.f32.mrb[0].mxu0
      %1900 = vmatprep.mubr.bf16.mxu0 0
      %1901 = vmatmul.mubr.bf16.gmra.mrb[0].mxu0 %v360
      %v1902 = vpop.f32.mrb[0].mxu0
      %v1903 = vadd.f32 0.0, %v1902
      %v1904 = vpop.f32.mrb[0].mxu0
      %v1905 = vpop.f32.mrb[0].mxu0
      %v1906 = vadd.f32 0.0, %v1905
      %v1907 = vpop.f32.mrb[0].mxu0
      %1908 = vmatprep.mubr.bf16.mxu0 0
      %1909 = vmatmul.mubr.bf16.gmra.mrb[0].mxu0 %v363
      %v1910 = vpop.f32.mrb[0].mxu0
      %v1911 = vadd.f32 0.0, %v1910
      %v1912 = vpop.f32.mrb[0].mxu0
      %v1913 = vpop.f32.mrb[0].mxu0
      %v1914 = vadd.f32 0.0, %v1913
      %v1915 = vpop.f32.mrb[0].mxu0
      %1916 = vmatprep.mubr.bf16.mxu0 0
      %1917 = vmatmul.mubr.bf16.gmra.mrb[0].mxu0 %v366
      %v1918 = vpop.f32.mrb[0].mxu0
      %v1919 = vadd.f32 0.0, %v1918
      %v1920 = vpop.f32.mrb[0].mxu0
      %v1921 = vpop.f32.mrb[0].mxu0
      %v1922 = vadd.f32 0.0, %v1921
      %v1923 = vpop.f32.mrb[0].mxu0
      %1924 = vmatprep.mubr.bf16.mxu0 0
      %1925 = vmatmul.mubr.bf16.gmra.mrb[0].mxu0 %v369
      %v1926 = vpop.f32.mrb[0].mxu0
      %v1927 = vadd.f32 0.0, %v1926
      %v1928 = vpop.f32.mrb[0].mxu0
      %v1929 = vpop.f32.mrb[0].mxu0
      %v1930 = vadd.f32 0.0, %v1929
      %v1931 = vpop.f32.mrb[0].mxu0
      %1932 = vmatprep.mubr.bf16.mxu0 0
      %1933 = vmatmul.mubr.bf16.gmra.mrb[0].mxu0 %v372
      %v1934 = vpop.f32.mrb[0].mxu0
      %v1935 = vadd.f32 0.0, %v1934
      %v1936 = vpop.f32.mrb[0].mxu0
      %v1937 = vpop.f32.mrb[0].mxu0
      %v1938 = vadd.f32 0.0, %v1937
      %v1939 = vpop.f32.mrb[0].mxu0
      %1940 = vmatprep.mubr.bf16.mxu0 0
      %1941 = vmatmul.mubr.bf16.gmra.mrb[0].mxu0 %v375
      %v1942 = vpop.f32.mrb[0].mxu0
      %v1943 = vadd.f32 0.0, %v1942
      %v1944 = vpop.f32.mrb[0].mxu0
      %v1945 = vpop.f32.mrb[0].mxu0
      %v1946 = vadd.f32 0.0, %v1945
      %v1947 = vpop.f32.mrb[0].mxu0
      %1948 = vmatprep.mubr.bf16.mxu0 0
      %1949 = vmatmul.mubr.bf16.gmra.mrb[0].mxu0 %v378
      %v1950 = vpop.f32.mrb[0].mxu0
      %v1951 = vadd.f32 0.0, %v1950
      %v1952 = vpop.f32.mrb[0].mxu0
      %v1953 = vpop.f32.mrb[0].mxu0
      %v1954 = vadd.f32 0.0, %v1953
      %v1955 = vpop.f32.mrb[0].mxu0
      %1956 = vmatprep.mubr.bf16.mxu0 0
      %1957 = vmatmul.mubr.bf16.gmra.mrb[0].mxu0 %v381
      %v1958 = vpop.f32.mrb[0].mxu0
      %v1959 = vadd.f32 0.0, %v1958
      %v1960 = vpop.f32.mrb[0].mxu0
      %v1961 = vpop.f32.mrb[0].mxu0
      %v1962 = vadd.f32 0.0, %v1961
      %v1963 = vpop.f32.mrb[0].mxu0
      %1964 = vmatprep.mubr.bf16.mxu0 0
      %1965 = vmatmul.mubr.bf16.gmra.mrb[0].mxu0 %v384
      %v1966 = vpop.f32.mrb[0].mxu0
      %v1967 = vadd.f32 0.0, %v1966
      %v1968 = vpop.f32.mrb[0].mxu0
      %v1969 = vpop.f32.mrb[0].mxu0
      %v1970 = vadd.f32 0.0, %v1969
      %v1971 = vpop.f32.mrb[0].mxu0
      %1972 = vmatprep.mubr.bf16.mxu0 0
      %1973 = vmatmul.mubr.bf16.gmra.mrb[0].mxu0 %v387
      %v1974 = vpop.f32.mrb[0].mxu0
      %v1975 = vadd.f32 0.0, %v1974
      %v1976 = vpop.f32.mrb[0].mxu0
      %v1977 = vpop.f32.mrb[0].mxu0
      %v1978 = vadd.f32 0.0, %v1977
      %v1979 = vpop.f32.mrb[0].mxu0
      %1980 = vmatprep.mubr.bf16.mxu0 0
      %1981 = vmatmul.mubr.bf16.gmra.mrb[0].mxu0 %v390
      %v1982 = vpop.f32.mrb[0].mxu0
      %v1983 = vadd.f32 0.0, %v1982
      %v1984 = vpop.f32.mrb[0].mxu0
      %v1985 = vpop.f32.mrb[0].mxu0
      %v1986 = vadd.f32 0.0, %v1985
      %v1987 = vpop.f32.mrb[0].mxu0
      %1988 = vmatprep.mubr.bf16.mxu0 0
      %1989 = vmatmul.mubr.bf16.gmra.mrb[0].mxu0 %v1831
      %v1990 = vpop.f32.mrb[0].mxu0
      %v1991 = vadd.f32 0.0, %v1990
      %v1992 = vpop.f32.mrb[0].mxu0
      %v1993 = vpop.f32.mrb[0].mxu0
      %v1994 = vadd.f32 0.0, %v1993
      %v1995 = vpop.f32.mrb[0].mxu0
      %1996 = vdwg.mxu0
      %v1997 = vld [vmem:[#allocation2] sm:$0xff]
      %v1998 = vld [vmem:[#allocation2 + $0x8] sm:$0xff]
      %v1999 = vld [vmem:[#allocation2 + $0x10] sm:$0xff]
      %v2000 = vld [vmem:[#allocation2 + $0x18] sm:$0xff]
      %v2001 = vld [vmem:[#allocation2 + $0x20] sm:$0xff]
      %v2002 = vld [vmem:[#allocation2 + $0x28] sm:$0xff]
      %v2003 = vld [vmem:[#allocation2 + $0x30] sm:$0xff]
      %v2004 = vld [vmem:[#allocation2 + $0x38] sm:$0xff]
      %v2005 = vld [vmem:[#allocation2 + $0x40] sm:$0xff]
      %v2006 = vld [vmem:[#allocation2 + $0x48] sm:$0xff]
      %v2007 = vld [vmem:[#allocation2 + $0x50] sm:$0xff]
      %v2008 = vld [vmem:[#allocation2 + $0x58] sm:$0xff]
      %v2009 = vld [vmem:[#allocation2 + $0x60] sm:$0xff]
      %v2010 = vld [vmem:[#allocation2 + $0x68] sm:$0xff]
      %v2011 = vld [vmem:[#allocation2 + $0x70] sm:$0xff]
      %v2012 = vld [vmem:[#allocation2 + $0x78] sm:$0xff]
      %v2013 = vld [vmem:[#allocation2 + $0x80] sm:$0xff]
      %v2014 = vld [vmem:[#allocation2 + $0x88] sm:$0xff]
      %v2015 = vld [vmem:[#allocation2 + $0x90] sm:$0xff]
      %v2016 = vld [vmem:[#allocation2 + $0x98] sm:$0xff]
      %v2017 = vld [vmem:[#allocation2 + $0xa0] sm:$0xff]
      %v2018 = vld [vmem:[#allocation2 + $0xa8] sm:$0xff]
      %v2019 = vld [vmem:[#allocation2 + $0xb0] sm:$0xff]
      %v2020 = vld [vmem:[#allocation2 + $0xb8] sm:$0xff]
      %v2021 = vld [vmem:[#allocation2 + $0xc0] sm:$0xff]
      %v2022 = vld [vmem:[#allocation2 + $0xc8] sm:$0xff]
      %v2023 = vld [vmem:[#allocation2 + $0xd0] sm:$0xff]
      %v2024 = vld [vmem:[#allocation2 + $0xd8] sm:$0xff]
      %v2025 = vld [vmem:[#allocation2 + $0xe0] sm:$0xff]
      %v2026 = vld [vmem:[#allocation2 + $0xe8] sm:$0xff]
      %v2027 = vld [vmem:[#allocation2 + $0xf0] sm:$0xff]
      %v2028 = vld [vmem:[#allocation2 + $0xf8] sm:$0xff]
      %v2029 = vadd.f32 %v1997, %v1871
      %v2030 = vadd.f32 %v1998, %v1874
      %v2031 = vadd.f32 %v1999, %v1879
      %v2032 = vadd.f32 %v2000, %v1882
      %v2033 = vadd.f32 %v2001, %v1887
      %v2034 = vadd.f32 %v2002, %v1890
      %v2035 = vadd.f32 %v2003, %v1895
      %v2036 = vadd.f32 %v2004, %v1898
      %v2037 = vadd.f32 %v2005, %v1903
      %v2038 = vadd.f32 %v2006, %v1906
      %v2039 = vadd.f32 %v2007, %v1911
      %v2040 = vadd.f32 %v2008, %v1914
      %v2041 = vadd.f32 %v2009, %v1919
      %v2042 = vadd.f32 %v2010, %v1922
      %v2043 = vadd.f32 %v2011, %v1927
      %v2044 = vadd.f32 %v2012, %v1930
      %v2045 = vadd.f32 %v2013, %v1935
      %v2046 = vadd.f32 %v2014, %v1938
      %v2047 = vadd.f32 %v2015, %v1943
      %v2048 = vadd.f32 %v2016, %v1946
      %v2049 = vadd.f32 %v2017, %v1951
      %v2050 = vadd.f32 %v2018, %v1954
      %v2051 = vadd.f32 %v2019, %v1959
      %v2052 = vadd.f32 %v2020, %v1962
      %v2053 = vadd.f32 %v2021, %v1967
      %v2054 = vadd.f32 %v2022, %v1970
      %v2055 = vadd.f32 %v2023, %v1975
      %v2056 = vadd.f32 %v2024, %v1978
      %v2057 = vadd.f32 %v2025, %v1983
      %v2058 = vadd.f32 %v2026, %v1986
      %v2059 = vadd.f32 %v2027, %v1991
      %v2060 = vadd.f32 %v2028, %v1994
      %2061 = vst [vmem:[#allocation2] sm:$0xff] %v2029
      %2062 = vst [vmem:[#allocation2 + $0x8] sm:$0xff] %v2030
      %2063 = vst [vmem:[#allocation2 + $0x10] sm:$0xff] %v2031
      %2064 = vst [vmem:[#allocation2 + $0x18] sm:$0xff] %v2032
      %2065 = vst [vmem:[#allocation2 + $0x20] sm:$0xff] %v2033
      %2066 = vst [vmem:[#allocation2 + $0x28] sm:$0xff] %v2034
      %2067 = vst [vmem:[#allocation2 + $0x30] sm:$0xff] %v2035
      %2068 = vst [vmem:[#allocation2 + $0x38] sm:$0xff] %v2036
      %2069 = vst [vmem:[#allocation2 + $0x40] sm:$0xff] %v2037
      %2070 = vst [vmem:[#allocation2 + $0x48] sm:$0xff] %v2038
      %2071 = vst [vmem:[#allocation2 + $0x50] sm:$0xff] %v2039
      %2072 = vst [vmem:[#allocation2 + $0x58] sm:$0xff] %v2040
      %2073 = vst [vmem:[#allocation2 + $0x60] sm:$0xff] %v2041
      %2074 = vst [vmem:[#allocation2 + $0x68] sm:$0xff] %v2042
      %2075 = vst [vmem:[#allocation2 + $0x70] sm:$0xff] %v2043
      %2076 = vst [vmem:[#allocation2 + $0x78] sm:$0xff] %v2044
      %2077 = vst [vmem:[#allocation2 + $0x80] sm:$0xff] %v2045
      %2078 = vst [vmem:[#allocation2 + $0x88] sm:$0xff] %v2046
      %2079 = vst [vmem:[#allocation2 + $0x90] sm:$0xff] %v2047
      %2080 = vst [vmem:[#allocation2 + $0x98] sm:$0xff] %v2048
      %2081 = vst [vmem:[#allocation2 + $0xa0] sm:$0xff] %v2049
      %2082 = vst [vmem:[#allocation2 + $0xa8] sm:$0xff] %v2050
      %2083 = vst [vmem:[#allocation2 + $0xb0] sm:$0xff] %v2051
      %2084 = vst [vmem:[#allocation2 + $0xb8] sm:$0xff] %v2052
      %2085 = vst [vmem:[#allocation2 + $0xc0] sm:$0xff] %v2053
      %2086 = vst [vmem:[#allocation2 + $0xc8] sm:$0xff] %v2054
      %2087 = vst [vmem:[#allocation2 + $0xd0] sm:$0xff] %v2055
      %2088 = vst [vmem:[#allocation2 + $0xd8] sm:$0xff] %v2056
      %2089 = vst [vmem:[#allocation2 + $0xe0] sm:$0xff] %v2057
      %2090 = vst [vmem:[#allocation2 + $0xe8] sm:$0xff] %v2058
      %2091 = vst [vmem:[#allocation2 + $0xf0] sm:$0xff] %v2059
      %2092 = vst [vmem:[#allocation2 + $0xf8] sm:$0xff] %v2060
      %v2094 = vshrl.u32 %v256, 16
      %v2096 = vrot.slane %v2094, 4
      %v2097 = vshll.u32 %v256, 16
      %v2099 = vrot.slane %v2097, 5
      %v2100 = vor.u32 %v2096, %v2099
      %v2101 = vrot.slane %v2100, 4
      %v2103 = vshll.u32 %v257, 16
      %v2105 = vrot.slane %v2103, 5
      %v2106 = vsel %vm591, %v2101, %v2105
      %v2107 = vshrl.u32 %v257, 16
      %v2109 = vrot.slane %v2107, 4
      %v2110 = vor.u32 %v2109, %v2105
      %v2111 = vrot.slane %v2110, 4
      %v2113 = vshll.u32 %v258, 16
      %v2115 = vrot.slane %v2113, 5
      %v2116 = vsel %vm591, %v2111, %v2115
      %s2117 = scalar_lea.vmem %s1, 8
      %v2118 = vld [vmem:[%s2117] sm:$0x3]
      %v2119 = vunpack.c.l.b16 %v2106
      %v2120 = vunpack.c.l.b16 %v2116
      %v2121 = vpack.c.b16 %v2120, %v2119
      %v2123 = vsel %vm343, %v2121, 0
      %v2126 = vsel %vm392, %v2118, 0
      %2128 = vmatprep.subr.bf16.mxu0 0
      %2129 = vmatpush1.bf16.msra.mxu0 %v2126
      %2130 = vmatprep.subr.bf16.mxu0 0
      %2131 = vmatpush1.bf16.msra.mxu0 0
      %2132 = vmatprep.subr.bf16.mxu0 0
      %2133 = vmatpush1.bf16.msra.mxu0 0
      %2134 = vmatprep.subr.bf16.mxu0 0
      %2135 = vmatpush1.bf16.msra.mxu0 0
      %2136 = vmatprep.subr.bf16.mxu0 0
      %2137 = vmatpush1.bf16.msra.mxu0 0
      %2138 = vmatprep.subr.bf16.mxu0 0
      %2139 = vmatpush1.bf16.msra.mxu0 0
      %2140 = vmatprep.subr.bf16.mxu0 0
      %2141 = vmatpush1.bf16.msra.mxu0 0
      %2142 = vmatprep.subr.bf16.mxu0 0
      %2143 = vmatpush1.bf16.msra.mxu0 0
      %2144 = vmatprep.subr.bf16.mxu0 0
      %2145 = vmatpush1.bf16.msra.mxu0 0
      %2146 = vmatprep.subr.bf16.mxu0 0
      %2147 = vmatpush1.bf16.msra.mxu0 0
      %2148 = vmatprep.subr.bf16.mxu0 0
      %2149 = vmatpush1.bf16.msra.mxu0 0
      %2150 = vmatprep.subr.bf16.mxu0 0
      %2151 = vmatpush1.bf16.msra.mxu0 0
      %2152 = vmatprep.subr.bf16.mxu0 0
      %2153 = vmatpush1.bf16.msra.mxu0 0
      %2154 = vmatprep.subr.bf16.mxu0 0
      %2155 = vmatpush1.bf16.msra.mxu0 0
      %2156 = vmatprep.subr.bf16.mxu0 0
      %2157 = vmatpush1.bf16.msra.mxu0 0
      %2158 = vmatprep.subr.bf16.mxu0 0
      %2159 = vmatpush1.bf16.msra.mxu0 0
      %2160 = vmatprep.mubr.bf16.mxu0 0
      %2161 = vmatmul.mubr.bf16.gmra.mrb[0].mxu0 %v1030
      %v2162 = vpop.f32.mrb[0].mxu0
      %v2163 = vadd.f32 0.0, %v2162
      %v2164 = vpop.f32.mrb[0].mxu0
      %v2165 = vpop.f32.mrb[0].mxu0
      %v2166 = vadd.f32 0.0, %v2165
      %v2167 = vpop.f32.mrb[0].mxu0
      %2168 = vmatprep.mubr.bf16.mxu0 0
      %2169 = vmatmul.mubr.bf16.gmra.mrb[0].mxu0 %v1033
      %v2170 = vpop.f32.mrb[0].mxu0
      %v2171 = vadd.f32 0.0, %v2170
      %v2172 = vpop.f32.mrb[0].mxu0
      %v2173 = vpop.f32.mrb[0].mxu0
      %v2174 = vadd.f32 0.0, %v2173
      %v2175 = vpop.f32.mrb[0].mxu0
      %2176 = vmatprep.mubr.bf16.mxu0 0
      %2177 = vmatmul.mubr.bf16.gmra.mrb[0].mxu0 %v1036
      %v2178 = vpop.f32.mrb[0].mxu0
      %v2179 = vadd.f32 0.0, %v2178
      %v2180 = vpop.f32.mrb[0].mxu0
      %v2181 = vpop.f32.mrb[0].mxu0
      %v2182 = vadd.f32 0.0, %v2181
      %v2183 = vpop.f32.mrb[0].mxu0
      %2184 = vmatprep.mubr.bf16.mxu0 0
      %2185 = vmatmul.mubr.bf16.gmra.mrb[0].mxu0 %v1039
      %v2186 = vpop.f32.mrb[0].mxu0
      %v2187 = vadd.f32 0.0, %v2186
      %v2188 = vpop.f32.mrb[0].mxu0
      %v2189 = vpop.f32.mrb[0].mxu0
      %v2190 = vadd.f32 0.0, %v2189
      %v2191 = vpop.f32.mrb[0].mxu0
      %2192 = vmatprep.mubr.bf16.mxu0 0
      %2193 = vmatmul.mubr.bf16.gmra.mrb[0].mxu0 %v1042
      %v2194 = vpop.f32.mrb[0].mxu0
      %v2195 = vadd.f32 0.0, %v2194
      %v2196 = vpop.f32.mrb[0].mxu0
      %v2197 = vpop.f32.mrb[0].mxu0
      %v2198 = vadd.f32 0.0, %v2197
      %v2199 = vpop.f32.mrb[0].mxu0
      %2200 = vmatprep.mubr.bf16.mxu0 0
      %2201 = vmatmul.mubr.bf16.gmra.mrb[0].mxu0 %v1045
      %v2202 = vpop.f32.mrb[0].mxu0
      %v2203 = vadd.f32 0.0, %v2202
      %v2204 = vpop.f32.mrb[0].mxu0
      %v2205 = vpop.f32.mrb[0].mxu0
      %v2206 = vadd.f32 0.0, %v2205
      %v2207 = vpop.f32.mrb[0].mxu0
      %2208 = vmatprep.mubr.bf16.mxu0 0
      %2209 = vmatmul.mubr.bf16.gmra.mrb[0].mxu0 %v1048
      %v2210 = vpop.f32.mrb[0].mxu0
      %v2211 = vadd.f32 0.0, %v2210
      %v2212 = vpop.f32.mrb[0].mxu0
      %v2213 = vpop.f32.mrb[0].mxu0
      %v2214 = vadd.f32 0.0, %v2213
      %v2215 = vpop.f32.mrb[0].mxu0
      %2216 = vmatprep.mubr.bf16.mxu0 0
      %2217 = vmatmul.mubr.bf16.gmra.mrb[0].mxu0 %v1051
      %v2218 = vpop.f32.mrb[0].mxu0
      %v2219 = vadd.f32 0.0, %v2218
      %v2220 = vpop.f32.mrb[0].mxu0
      %v2221 = vpop.f32.mrb[0].mxu0
      %v2222 = vadd.f32 0.0, %v2221
      %v2223 = vpop.f32.mrb[0].mxu0
      %2224 = vmatprep.mubr.bf16.mxu0 0
      %2225 = vmatmul.mubr.bf16.gmra.mrb[0].mxu0 %v1054
      %v2226 = vpop.f32.mrb[0].mxu0
      %v2227 = vadd.f32 0.0, %v2226
      %v2228 = vpop.f32.mrb[0].mxu0
      %v2229 = vpop.f32.mrb[0].mxu0
      %v2230 = vadd.f32 0.0, %v2229
      %v2231 = vpop.f32.mrb[0].mxu0
      %2232 = vmatprep.mubr.bf16.mxu0 0
      %2233 = vmatmul.mubr.bf16.gmra.mrb[0].mxu0 %v1057
      %v2234 = vpop.f32.mrb[0].mxu0
      %v2235 = vadd.f32 0.0, %v2234
      %v2236 = vpop.f32.mrb[0].mxu0
      %v2237 = vpop.f32.mrb[0].mxu0
      %v2238 = vadd.f32 0.0, %v2237
      %v2239 = vpop.f32.mrb[0].mxu0
      %2240 = vmatprep.mubr.bf16.mxu0 0
      %2241 = vmatmul.mubr.bf16.gmra.mrb[0].mxu0 %v1060
      %v2242 = vpop.f32.mrb[0].mxu0
      %v2243 = vadd.f32 0.0, %v2242
      %v2244 = vpop.f32.mrb[0].mxu0
      %v2245 = vpop.f32.mrb[0].mxu0
      %v2246 = vadd.f32 0.0, %v2245
      %v2247 = vpop.f32.mrb[0].mxu0
      %2248 = vmatprep.mubr.bf16.mxu0 0
      %2249 = vmatmul.mubr.bf16.gmra.mrb[0].mxu0 %v1063
      %v2250 = vpop.f32.mrb[0].mxu0
      %v2251 = vadd.f32 0.0, %v2250
      %v2252 = vpop.f32.mrb[0].mxu0
      %v2253 = vpop.f32.mrb[0].mxu0
      %v2254 = vadd.f32 0.0, %v2253
      %v2255 = vpop.f32.mrb[0].mxu0
      %2256 = vmatprep.mubr.bf16.mxu0 0
      %2257 = vmatmul.mubr.bf16.gmra.mrb[0].mxu0 %v1066
      %v2258 = vpop.f32.mrb[0].mxu0
      %v2259 = vadd.f32 0.0, %v2258
      %v2260 = vpop.f32.mrb[0].mxu0
      %v2261 = vpop.f32.mrb[0].mxu0
      %v2262 = vadd.f32 0.0, %v2261
      %v2263 = vpop.f32.mrb[0].mxu0
      %2264 = vmatprep.mubr.bf16.mxu0 0
      %2265 = vmatmul.mubr.bf16.gmra.mrb[0].mxu0 %v1069
      %v2266 = vpop.f32.mrb[0].mxu0
      %v2267 = vadd.f32 0.0, %v2266
      %v2268 = vpop.f32.mrb[0].mxu0
      %v2269 = vpop.f32.mrb[0].mxu0
      %v2270 = vadd.f32 0.0, %v2269
      %v2271 = vpop.f32.mrb[0].mxu0
      %2272 = vmatprep.mubr.bf16.mxu0 0
      %2273 = vmatmul.mubr.bf16.gmra.mrb[0].mxu0 %v1072
      %v2274 = vpop.f32.mrb[0].mxu0
      %v2275 = vadd.f32 0.0, %v2274
      %v2276 = vpop.f32.mrb[0].mxu0
      %v2277 = vpop.f32.mrb[0].mxu0
      %v2278 = vadd.f32 0.0, %v2277
      %v2279 = vpop.f32.mrb[0].mxu0
      %2280 = vmatprep.mubr.bf16.mxu0 0
      %2281 = vmatmul.mubr.bf16.gmra.mrb[0].mxu0 %v2123
      %v2282 = vpop.f32.mrb[0].mxu0
      %v2283 = vadd.f32 0.0, %v2282
      %v2284 = vpop.f32.mrb[0].mxu0
      %v2285 = vpop.f32.mrb[0].mxu0
      %v2286 = vadd.f32 0.0, %v2285
      %v2287 = vpop.f32.mrb[0].mxu0
      %2288 = vdwg.mxu0
      %v2289 = vld [vmem:[#allocation2] sm:$0xff]
      %v2290 = vld [vmem:[#allocation2 + $0x8] sm:$0xff]
      %v2291 = vld [vmem:[#allocation2 + $0x10] sm:$0xff]
      %v2292 = vld [vmem:[#allocation2 + $0x18] sm:$0xff]
      %v2293 = vld [vmem:[#allocation2 + $0x20] sm:$0xff]
      %v2294 = vld [vmem:[#allocation2 + $0x28] sm:$0xff]
      %v2295 = vld [vmem:[#allocation2 + $0x30] sm:$0xff]
      %v2296 = vld [vmem:[#allocation2 + $0x38] sm:$0xff]
      %v2297 = vld [vmem:[#allocation2 + $0x40] sm:$0xff]
      %v2298 = vld [vmem:[#allocation2 + $0x48] sm:$0xff]
      %v2299 = vld [vmem:[#allocation2 + $0x50] sm:$0xff]
      %v2300 = vld [vmem:[#allocation2 + $0x58] sm:$0xff]
      %v2301 = vld [vmem:[#allocation2 + $0x60] sm:$0xff]
      %v2302 = vld [vmem:[#allocation2 + $0x68] sm:$0xff]
      %v2303 = vld [vmem:[#allocation2 + $0x70] sm:$0xff]
      %v2304 = vld [vmem:[#allocation2 + $0x78] sm:$0xff]
      %v2305 = vld [vmem:[#allocation2 + $0x80] sm:$0xff]
      %v2306 = vld [vmem:[#allocation2 + $0x88] sm:$0xff]
      %v2307 = vld [vmem:[#allocation2 + $0x90] sm:$0xff]
      %v2308 = vld [vmem:[#allocation2 + $0x98] sm:$0xff]
      %v2309 = vld [vmem:[#allocation2 + $0xa0] sm:$0xff]
      %v2310 = vld [vmem:[#allocation2 + $0xa8] sm:$0xff]
      %v2311 = vld [vmem:[#allocation2 + $0xb0] sm:$0xff]
      %v2312 = vld [vmem:[#allocation2 + $0xb8] sm:$0xff]
      %v2313 = vld [vmem:[#allocation2 + $0xc0] sm:$0xff]
      %v2314 = vld [vmem:[#allocation2 + $0xc8] sm:$0xff]
      %v2315 = vld [vmem:[#allocation2 + $0xd0] sm:$0xff]
      %v2316 = vld [vmem:[#allocation2 + $0xd8] sm:$0xff]
      %v2317 = vld [vmem:[#allocation2 + $0xe0] sm:$0xff]
      %v2318 = vld [vmem:[#allocation2 + $0xe8] sm:$0xff]
      %v2319 = vld [vmem:[#allocation2 + $0xf0] sm:$0xff]
      %v2320 = vld [vmem:[#allocation2 + $0xf8] sm:$0xff]
      %v2321 = vadd.f32 %v2289, %v2163
      %v2322 = vadd.f32 %v2290, %v2166
      %v2323 = vadd.f32 %v2291, %v2171
      %v2324 = vadd.f32 %v2292, %v2174
      %v2325 = vadd.f32 %v2293, %v2179
      %v2326 = vadd.f32 %v2294, %v2182
      %v2327 = vadd.f32 %v2295, %v2187
      %v2328 = vadd.f32 %v2296, %v2190
      %v2329 = vadd.f32 %v2297, %v2195
      %v2330 = vadd.f32 %v2298, %v2198
      %v2331 = vadd.f32 %v2299, %v2203
      %v2332 = vadd.f32 %v2300, %v2206
      %v2333 = vadd.f32 %v2301, %v2211
      %v2334 = vadd.f32 %v2302, %v2214
      %v2335 = vadd.f32 %v2303, %v2219
      %v2336 = vadd.f32 %v2304, %v2222
      %v2337 = vadd.f32 %v2305, %v2227
      %v2338 = vadd.f32 %v2306, %v2230
      %v2339 = vadd.f32 %v2307, %v2235
      %v2340 = vadd.f32 %v2308, %v2238
      %v2341 = vadd.f32 %v2309, %v2243
      %v2342 = vadd.f32 %v2310, %v2246
      %v2343 = vadd.f32 %v2311, %v2251
      %v2344 = vadd.f32 %v2312, %v2254
      %v2345 = vadd.f32 %v2313, %v2259
      %v2346 = vadd.f32 %v2314, %v2262
      %v2347 = vadd.f32 %v2315, %v2267
      %v2348 = vadd.f32 %v2316, %v2270
      %v2349 = vadd.f32 %v2317, %v2275
      %v2350 = vadd.f32 %v2318, %v2278
      %v2351 = vadd.f32 %v2319, %v2283
      %v2352 = vadd.f32 %v2320, %v2286
      %2353 = vst [vmem:[#allocation2] sm:$0xff] %v2321
      %2354 = vst [vmem:[#allocation2 + $0x8] sm:$0xff] %v2322
      %2355 = vst [vmem:[#allocation2 + $0x10] sm:$0xff] %v2323
      %2356 = vst [vmem:[#allocation2 + $0x18] sm:$0xff] %v2324
      %2357 = vst [vmem:[#allocation2 + $0x20] sm:$0xff] %v2325
      %2358 = vst [vmem:[#allocation2 + $0x28] sm:$0xff] %v2326
      %2359 = vst [vmem:[#allocation2 + $0x30] sm:$0xff] %v2327
      %2360 = vst [vmem:[#allocation2 + $0x38] sm:$0xff] %v2328
      %2361 = vst [vmem:[#allocation2 + $0x40] sm:$0xff] %v2329
      %2362 = vst [vmem:[#allocation2 + $0x48] sm:$0xff] %v2330
      %2363 = vst [vmem:[#allocation2 + $0x50] sm:$0xff] %v2331
      %2364 = vst [vmem:[#allocation2 + $0x58] sm:$0xff] %v2332
      %2365 = vst [vmem:[#allocation2 + $0x60] sm:$0xff] %v2333
      %2366 = vst [vmem:[#allocation2 + $0x68] sm:$0xff] %v2334
      %2367 = vst [vmem:[#allocation2 + $0x70] sm:$0xff] %v2335
      %2368 = vst [vmem:[#allocation2 + $0x78] sm:$0xff] %v2336
      %2369 = vst [vmem:[#allocation2 + $0x80] sm:$0xff] %v2337
      %2370 = vst [vmem:[#allocation2 + $0x88] sm:$0xff] %v2338
      %2371 = vst [vmem:[#allocation2 + $0x90] sm:$0xff] %v2339
      %2372 = vst [vmem:[#allocation2 + $0x98] sm:$0xff] %v2340
      %2373 = vst [vmem:[#allocation2 + $0xa0] sm:$0xff] %v2341
      %2374 = vst [vmem:[#allocation2 + $0xa8] sm:$0xff] %v2342
      %2375 = vst [vmem:[#allocation2 + $0xb0] sm:$0xff] %v2343
      %2376 = vst [vmem:[#allocation2 + $0xb8] sm:$0xff] %v2344
      %2377 = vst [vmem:[#allocation2 + $0xc0] sm:$0xff] %v2345
      %2378 = vst [vmem:[#allocation2 + $0xc8] sm:$0xff] %v2346
      %2379 = vst [vmem:[#allocation2 + $0xd0] sm:$0xff] %v2347
      %2380 = vst [vmem:[#allocation2 + $0xd8] sm:$0xff] %v2348
      %2381 = vst [vmem:[#allocation2 + $0xe0] sm:$0xff] %v2349
      %2382 = vst [vmem:[#allocation2 + $0xe8] sm:$0xff] %v2350
      %2383 = vst [vmem:[#allocation2 + $0xf0] sm:$0xff] %v2351
      %2384 = vst [vmem:[#allocation2 + $0xf8] sm:$0xff] %v2352
      %v2386 = vrot.slane %v256, 5
      %v2387 = vrot.slane %v2386, 4
      %v2388 = vrot.slane %v257, 5
      %v2389 = vsel %vm1352, %v2387, %v2388
      %v2390 = vrot.slane %v2388, 4
      %v2391 = vrot.slane %v258, 5
      %v2392 = vsel %vm1352, %v2390, %v2391
      %s2393 = scalar_lea.vmem %s1, 10
      %v2394 = vld [vmem:[%s2393] sm:$0x3]
      %v2395 = vunpack.c.l.b16 %v2389
      %v2396 = vunpack.c.l.b16 %v2392
      %v2397 = vpack.c.b16 %v2396, %v2395
      %v2399 = vsel %vm343, %v2397, 0
      %v2402 = vsel %vm392, %v2394, 0
      %2404 = vmatprep.subr.bf16.mxu0 0
      %2405 = vmatpush1.bf16.msra.mxu0 %v2402
      %2406 = vmatprep.subr.bf16.mxu0 0
      %2407 = vmatpush1.bf16.msra.mxu0 0
      %2408 = vmatprep.subr.bf16.mxu0 0
      %2409 = vmatpush1.bf16.msra.mxu0 0
      %2410 = vmatprep.subr.bf16.mxu0 0
      %2411 = vmatpush1.bf16.msra.mxu0 0
      %2412 = vmatprep.subr.bf16.mxu0 0
      %2413 = vmatpush1.bf16.msra.mxu0 0
      %2414 = vmatprep.subr.bf16.mxu0 0
      %2415 = vmatpush1.bf16.msra.mxu0 0
      %2416 = vmatprep.subr.bf16.mxu0 0
      %2417 = vmatpush1.bf16.msra.mxu0 0
      %2418 = vmatprep.subr.bf16.mxu0 0
      %2419 = vmatpush1.bf16.msra.mxu0 0
      %2420 = vmatprep.subr.bf16.mxu0 0
      %2421 = vmatpush1.bf16.msra.mxu0 0
      %2422 = vmatprep.subr.bf16.mxu0 0
      %2423 = vmatpush1.bf16.msra.mxu0 0
      %2424 = vmatprep.subr.bf16.mxu0 0
      %2425 = vmatpush1.bf16.msra.mxu0 0
      %2426 = vmatprep.subr.bf16.mxu0 0
      %2427 = vmatpush1.bf16.msra.mxu0 0
      %2428 = vmatprep.subr.bf16.mxu0 0
      %2429 = vmatpush1.bf16.msra.mxu0 0
      %2430 = vmatprep.subr.bf16.mxu0 0
      %2431 = vmatpush1.bf16.msra.mxu0 0
      %2432 = vmatprep.subr.bf16.mxu0 0
      %2433 = vmatpush1.bf16.msra.mxu0 0
      %2434 = vmatprep.subr.bf16.mxu0 0
      %2435 = vmatpush1.bf16.msra.mxu0 0
      %2436 = vmatprep.mubr.bf16.mxu0 0
      %2437 = vmatmul.mubr.bf16.gmra.mrb[0].mxu0 %v1519
      %v2438 = vpop.f32.mrb[0].mxu0
      %v2439 = vadd.f32 0.0, %v2438
      %v2440 = vpop.f32.mrb[0].mxu0
      %v2441 = vpop.f32.mrb[0].mxu0
      %v2442 = vadd.f32 0.0, %v2441
      %v2443 = vpop.f32.mrb[0].mxu0
      %2444 = vmatprep.mubr.bf16.mxu0 0
      %2445 = vmatmul.mubr.bf16.gmra.mrb[0].mxu0 %v1522
      %v2446 = vpop.f32.mrb[0].mxu0
      %v2447 = vadd.f32 0.0, %v2446
      %v2448 = vpop.f32.mrb[0].mxu0
      %v2449 = vpop.f32.mrb[0].mxu0
      %v2450 = vadd.f32 0.0, %v2449
      %v2451 = vpop.f32.mrb[0].mxu0
      %2452 = vmatprep.mubr.bf16.mxu0 0
      %2453 = vmatmul.mubr.bf16.gmra.mrb[0].mxu0 %v1525
      %v2454 = vpop.f32.mrb[0].mxu0
      %v2455 = vadd.f32 0.0, %v2454
      %v2456 = vpop.f32.mrb[0].mxu0
      %v2457 = vpop.f32.mrb[0].mxu0
      %v2458 = vadd.f32 0.0, %v2457
      %v2459 = vpop.f32.mrb[0].mxu0
      %2460 = vmatprep.mubr.bf16.mxu0 0
      %2461 = vmatmul.mubr.bf16.gmra.mrb[0].mxu0 %v1528
      %v2462 = vpop.f32.mrb[0].mxu0
      %v2463 = vadd.f32 0.0, %v2462
      %v2464 = vpop.f32.mrb[0].mxu0
      %v2465 = vpop.f32.mrb[0].mxu0
      %v2466 = vadd.f32 0.0, %v2465
      %v2467 = vpop.f32.mrb[0].mxu0
      %2468 = vmatprep.mubr.bf16.mxu0 0
      %2469 = vmatmul.mubr.bf16.gmra.mrb[0].mxu0 %v1531
      %v2470 = vpop.f32.mrb[0].mxu0
      %v2471 = vadd.f32 0.0, %v2470
      %v2472 = vpop.f32.mrb[0].mxu0
      %v2473 = vpop.f32.mrb[0].mxu0
      %v2474 = vadd.f32 0.0, %v2473
      %v2475 = vpop.f32.mrb[0].mxu0
      %2476 = vmatprep.mubr.bf16.mxu0 0
      %2477 = vmatmul.mubr.bf16.gmra.mrb[0].mxu0 %v1534
      %v2478 = vpop.f32.mrb[0].mxu0
      %v2479 = vadd.f32 0.0, %v2478
      %v2480 = vpop.f32.mrb[0].mxu0
      %v2481 = vpop.f32.mrb[0].mxu0
      %v2482 = vadd.f32 0.0, %v2481
      %v2483 = vpop.f32.mrb[0].mxu0
      %2484 = vmatprep.mubr.bf16.mxu0 0
      %2485 = vmatmul.mubr.bf16.gmra.mrb[0].mxu0 %v1537
      %v2486 = vpop.f32.mrb[0].mxu0
      %v2487 = vadd.f32 0.0, %v2486
      %v2488 = vpop.f32.mrb[0].mxu0
      %v2489 = vpop.f32.mrb[0].mxu0
      %v2490 = vadd.f32 0.0, %v2489
      %v2491 = vpop.f32.mrb[0].mxu0
      %2492 = vmatprep.mubr.bf16.mxu0 0
      %2493 = vmatmul.mubr.bf16.gmra.mrb[0].mxu0 %v1540
      %v2494 = vpop.f32.mrb[0].mxu0
      %v2495 = vadd.f32 0.0, %v2494
      %v2496 = vpop.f32.mrb[0].mxu0
      %v2497 = vpop.f32.mrb[0].mxu0
      %v2498 = vadd.f32 0.0, %v2497
      %v2499 = vpop.f32.mrb[0].mxu0
      %2500 = vmatprep.mubr.bf16.mxu0 0
      %2501 = vmatmul.mubr.bf16.gmra.mrb[0].mxu0 %v1543
      %v2502 = vpop.f32.mrb[0].mxu0
      %v2503 = vadd.f32 0.0, %v2502
      %v2504 = vpop.f32.mrb[0].mxu0
      %v2505 = vpop.f32.mrb[0].mxu0
      %v2506 = vadd.f32 0.0, %v2505
      %v2507 = vpop.f32.mrb[0].mxu0
      %2508 = vmatprep.mubr.bf16.mxu0 0
      %2509 = vmatmul.mubr.bf16.gmra.mrb[0].mxu0 %v1546
      %v2510 = vpop.f32.mrb[0].mxu0
      %v2511 = vadd.f32 0.0, %v2510
      %v2512 = vpop.f32.mrb[0].mxu0
      %v2513 = vpop.f32.mrb[0].mxu0
      %v2514 = vadd.f32 0.0, %v2513
      %v2515 = vpop.f32.mrb[0].mxu0
      %2516 = vmatprep.mubr.bf16.mxu0 0
      %2517 = vmatmul.mubr.bf16.gmra.mrb[0].mxu0 %v1549
      %v2518 = vpop.f32.mrb[0].mxu0
      %v2519 = vadd.f32 0.0, %v2518
      %v2520 = vpop.f32.mrb[0].mxu0
      %v2521 = vpop.f32.mrb[0].mxu0
      %v2522 = vadd.f32 0.0, %v2521
      %v2523 = vpop.f32.mrb[0].mxu0
      %2524 = vmatprep.mubr.bf16.mxu0 0
      %2525 = vmatmul.mubr.bf16.gmra.mrb[0].mxu0 %v1552
      %v2526 = vpop.f32.mrb[0].mxu0
      %v2527 = vadd.f32 0.0, %v2526
      %v2528 = vpop.f32.mrb[0].mxu0
      %v2529 = vpop.f32.mrb[0].mxu0
      %v2530 = vadd.f32 0.0, %v2529
      %v2531 = vpop.f32.mrb[0].mxu0
      %2532 = vmatprep.mubr.bf16.mxu0 0
      %2533 = vmatmul.mubr.bf16.gmra.mrb[0].mxu0 %v1555
      %v2534 = vpop.f32.mrb[0].mxu0
      %v2535 = vadd.f32 0.0, %v2534
      %v2536 = vpop.f32.mrb[0].mxu0
      %v2537 = vpop.f32.mrb[0].mxu0
      %v2538 = vadd.f32 0.0, %v2537
      %v2539 = vpop.f32.mrb[0].mxu0
      %2540 = vmatprep.mubr.bf16.mxu0 0
      %2541 = vmatmul.mubr.bf16.gmra.mrb[0].mxu0 %v1558
      %v2542 = vpop.f32.mrb[0].mxu0
      %v2543 = vadd.f32 0.0, %v2542
      %v2544 = vpop.f32.mrb[0].mxu0
      %v2545 = vpop.f32.mrb[0].mxu0
      %v2546 = vadd.f32 0.0, %v2545
      %v2547 = vpop.f32.mrb[0].mxu0
      %2548 = vmatprep.mubr.bf16.mxu0 0
      %2549 = vmatmul.mubr.bf16.gmra.mrb[0].mxu0 %v1561
      %v2550 = vpop.f32.mrb[0].mxu0
      %v2551 = vadd.f32 0.0, %v2550
      %v2552 = vpop.f32.mrb[0].mxu0
      %v2553 = vpop.f32.mrb[0].mxu0
      %v2554 = vadd.f32 0.0, %v2553
      %v2555 = vpop.f32.mrb[0].mxu0
      %2556 = vmatprep.mubr.bf16.mxu0 0
      %2557 = vmatmul.mubr.bf16.gmra.mrb[0].mxu0 %v2399
      %v2558 = vpop.f32.mrb[0].mxu0
      %v2559 = vadd.f32 0.0, %v2558
      %v2560 = vpop.f32.mrb[0].mxu0
      %v2561 = vpop.f32.mrb[0].mxu0
      %v2562 = vadd.f32 0.0, %v2561
      %v2563 = vpop.f32.mrb[0].mxu0
      %2564 = vdwg.mxu0
      %v2565 = vld [vmem:[#allocation2] sm:$0xff]
      %v2566 = vld [vmem:[#allocation2 + $0x8] sm:$0xff]
      %v2567 = vld [vmem:[#allocation2 + $0x10] sm:$0xff]
      %v2568 = vld [vmem:[#allocation2 + $0x18] sm:$0xff]
      %v2569 = vld [vmem:[#allocation2 + $0x20] sm:$0xff]
      %v2570 = vld [vmem:[#allocation2 + $0x28] sm:$0xff]
      %v2571 = vld [vmem:[#allocation2 + $0x30] sm:$0xff]
      %v2572 = vld [vmem:[#allocation2 + $0x38] sm:$0xff]
      %v2573 = vld [vmem:[#allocation2 + $0x40] sm:$0xff]
      %v2574 = vld [vmem:[#allocation2 + $0x48] sm:$0xff]
      %v2575 = vld [vmem:[#allocation2 + $0x50] sm:$0xff]
      %v2576 = vld [vmem:[#allocation2 + $0x58] sm:$0xff]
      %v2577 = vld [vmem:[#allocation2 + $0x60] sm:$0xff]
      %v2578 = vld [vmem:[#allocation2 + $0x68] sm:$0xff]
      %v2579 = vld [vmem:[#allocation2 + $0x70] sm:$0xff]
      %v2580 = vld [vmem:[#allocation2 + $0x78] sm:$0xff]
      %v2581 = vld [vmem:[#allocation2 + $0x80] sm:$0xff]
      %v2582 = vld [vmem:[#allocation2 + $0x88] sm:$0xff]
      %v2583 = vld [vmem:[#allocation2 + $0x90] sm:$0xff]
      %v2584 = vld [vmem:[#allocation2 + $0x98] sm:$0xff]
      %v2585 = vld [vmem:[#allocation2 + $0xa0] sm:$0xff]
      %v2586 = vld [vmem:[#allocation2 + $0xa8] sm:$0xff]
      %v2587 = vld [vmem:[#allocation2 + $0xb0] sm:$0xff]
      %v2588 = vld [vmem:[#allocation2 + $0xb8] sm:$0xff]
      %v2589 = vld [vmem:[#allocation2 + $0xc0] sm:$0xff]
      %v2590 = vld [vmem:[#allocation2 + $0xc8] sm:$0xff]
      %v2591 = vld [vmem:[#allocation2 + $0xd0] sm:$0xff]
      %v2592 = vld [vmem:[#allocation2 + $0xd8] sm:$0xff]
      %v2593 = vld [vmem:[#allocation2 + $0xe0] sm:$0xff]
      %v2594 = vld [vmem:[#allocation2 + $0xe8] sm:$0xff]
      %v2595 = vld [vmem:[#allocation2 + $0xf0] sm:$0xff]
      %v2596 = vld [vmem:[#allocation2 + $0xf8] sm:$0xff]
      %v2597 = vadd.f32 %v2565, %v2439
      %v2598 = vadd.f32 %v2566, %v2442
      %v2599 = vadd.f32 %v2567, %v2447
      %v2600 = vadd.f32 %v2568, %v2450
      %v2601 = vadd.f32 %v2569, %v2455
      %v2602 = vadd.f32 %v2570, %v2458
      %v2603 = vadd.f32 %v2571, %v2463
      %v2604 = vadd.f32 %v2572, %v2466
      %v2605 = vadd.f32 %v2573, %v2471
      %v2606 = vadd.f32 %v2574, %v2474
      %v2607 = vadd.f32 %v2575, %v2479
      %v2608 = vadd.f32 %v2576, %v2482
      %v2609 = vadd.f32 %v2577, %v2487
      %v2610 = vadd.f32 %v2578, %v2490
      %v2611 = vadd.f32 %v2579, %v2495
      %v2612 = vadd.f32 %v2580, %v2498
      %v2613 = vadd.f32 %v2581, %v2503
      %v2614 = vadd.f32 %v2582, %v2506
      %v2615 = vadd.f32 %v2583, %v2511
      %v2616 = vadd.f32 %v2584, %v2514
      %v2617 = vadd.f32 %v2585, %v2519
      %v2618 = vadd.f32 %v2586, %v2522
      %v2619 = vadd.f32 %v2587, %v2527
      %v2620 = vadd.f32 %v2588, %v2530
      %v2621 = vadd.f32 %v2589, %v2535
      %v2622 = vadd.f32 %v2590, %v2538
      %v2623 = vadd.f32 %v2591, %v2543
      %v2624 = vadd.f32 %v2592, %v2546
      %v2625 = vadd.f32 %v2593, %v2551
      %v2626 = vadd.f32 %v2594, %v2554
      %v2627 = vadd.f32 %v2595, %v2559
      %v2628 = vadd.f32 %v2596, %v2562
      %2629 = vst [vmem:[#allocation2] sm:$0xff] %v2597
      %2630 = vst [vmem:[#allocation2 + $0x8] sm:$0xff] %v2598
      %2631 = vst [vmem:[#allocation2 + $0x10] sm:$0xff] %v2599
      %2632 = vst [vmem:[#allocation2 + $0x18] sm:$0xff] %v2600
      %2633 = vst [vmem:[#allocation2 + $0x20] sm:$0xff] %v2601
      %2634 = vst [vmem:[#allocation2 + $0x28] sm:$0xff] %v2602
      %2635 = vst [vmem:[#allocation2 + $0x30] sm:$0xff] %v2603
      %2636 = vst [vmem:[#allocation2 + $0x38] sm:$0xff] %v2604
      %2637 = vst [vmem:[#allocation2 + $0x40] sm:$0xff] %v2605
      %2638 = vst [vmem:[#allocation2 + $0x48] sm:$0xff] %v2606
      %2639 = vst [vmem:[#allocation2 + $0x50] sm:$0xff] %v2607
      %2640 = vst [vmem:[#allocation2 + $0x58] sm:$0xff] %v2608
      %2641 = vst [vmem:[#allocation2 + $0x60] sm:$0xff] %v2609
      %2642 = vst [vmem:[#allocation2 + $0x68] sm:$0xff] %v2610
      %2643 = vst [vmem:[#allocation2 + $0x70] sm:$0xff] %v2611
      %2644 = vst [vmem:[#allocation2 + $0x78] sm:$0xff] %v2612
      %2645 = vst [vmem:[#allocation2 + $0x80] sm:$0xff] %v2613
      %2646 = vst [vmem:[#allocation2 + $0x88] sm:$0xff] %v2614
      %2647 = vst [vmem:[#allocation2 + $0x90] sm:$0xff] %v2615
      %2648 = vst [vmem:[#allocation2 + $0x98] sm:$0xff] %v2616
      %2649 = vst [vmem:[#allocation2 + $0xa0] sm:$0xff] %v2617
      %2650 = vst [vmem:[#allocation2 + $0xa8] sm:$0xff] %v2618
      %2651 = vst [vmem:[#allocation2 + $0xb0] sm:$0xff] %v2619
      %2652 = vst [vmem:[#allocation2 + $0xb8] sm:$0xff] %v2620
      %2653 = vst [vmem:[#allocation2 + $0xc0] sm:$0xff] %v2621
      %2654 = vst [vmem:[#allocation2 + $0xc8] sm:$0xff] %v2622
      %2655 = vst [vmem:[#allocation2 + $0xd0] sm:$0xff] %v2623
      %2656 = vst [vmem:[#allocation2 + $0xd8] sm:$0xff] %v2624
      %2657 = vst [vmem:[#allocation2 + $0xe0] sm:$0xff] %v2625
      %2658 = vst [vmem:[#allocation2 + $0xe8] sm:$0xff] %v2626
      %2659 = vst [vmem:[#allocation2 + $0xf0] sm:$0xff] %v2627
      %2660 = vst [vmem:[#allocation2 + $0xf8] sm:$0xff] %v2628
      %s2661 = scalar_lea.vmem %s1, 12
      %v2662 = vld [vmem:[%s2661] sm:$0x3]
      %v2665 = vunpack.c.l.b16 %v259
      %v2666 = vunpack.c.l.b16 %v260
      %v2667 = vpack.c.b16 %v2666, %v2665
      %v2669 = vsel %vm343, %v2667, 0
      %v2672 = vsel %vm392, %v2662, 0
      %2674 = vmatprep.subr.bf16.mxu0 0
      %2675 = vmatpush1.bf16.msra.mxu0 %v2672
      %2676 = vmatprep.subr.bf16.mxu0 0
      %2677 = vmatpush1.bf16.msra.mxu0 0
      %2678 = vmatprep.subr.bf16.mxu0 0
      %2679 = vmatpush1.bf16.msra.mxu0 0
      %2680 = vmatprep.subr.bf16.mxu0 0
      %2681 = vmatpush1.bf16.msra.mxu0 0
      %2682 = vmatprep.subr.bf16.mxu0 0
      %2683 = vmatpush1.bf16.msra.mxu0 0
      %2684 = vmatprep.subr.bf16.mxu0 0
      %2685 = vmatpush1.bf16.msra.mxu0 0
      %2686 = vmatprep.subr.bf16.mxu0 0
      %2687 = vmatpush1.bf16.msra.mxu0 0
      %2688 = vmatprep.subr.bf16.mxu0 0
      %2689 = vmatpush1.bf16.msra.mxu0 0
      %2690 = vmatprep.subr.bf16.mxu0 0
      %2691 = vmatpush1.bf16.msra.mxu0 0
      %2692 = vmatprep.subr.bf16.mxu0 0
      %2693 = vmatpush1.bf16.msra.mxu0 0
      %2694 = vmatprep.subr.bf16.mxu0 0
      %2695 = vmatpush1.bf16.msra.mxu0 0
      %2696 = vmatprep.subr.bf16.mxu0 0
      %2697 = vmatpush1.bf16.msra.mxu0 0
      %2698 = vmatprep.subr.bf16.mxu0 0
      %2699 = vmatpush1.bf16.msra.mxu0 0
      %2700 = vmatprep.subr.bf16.mxu0 0
      %2701 = vmatpush1.bf16.msra.mxu0 0
      %2702 = vmatprep.subr.bf16.mxu0 0
      %2703 = vmatpush1.bf16.msra.mxu0 0
      %2704 = vmatprep.subr.bf16.mxu0 0
      %2705 = vmatpush1.bf16.msra.mxu0 0
      %2706 = vmatprep.mubr.bf16.mxu0 0
      %2707 = vmatmul.mubr.bf16.gmra.mrb[0].mxu0 %v351
      %v2708 = vpop.f32.mrb[0].mxu0
      %v2709 = vadd.f32 0.0, %v2708
      %v2710 = vpop.f32.mrb[0].mxu0
      %v2711 = vpop.f32.mrb[0].mxu0
      %v2712 = vadd.f32 0.0, %v2711
      %v2713 = vpop.f32.mrb[0].mxu0
      %2714 = vmatprep.mubr.bf16.mxu0 0
      %2715 = vmatmul.mubr.bf16.gmra.mrb[0].mxu0 %v354
      %v2716 = vpop.f32.mrb[0].mxu0
      %v2717 = vadd.f32 0.0, %v2716
      %v2718 = vpop.f32.mrb[0].mxu0
      %v2719 = vpop.f32.mrb[0].mxu0
      %v2720 = vadd.f32 0.0, %v2719
      %v2721 = vpop.f32.mrb[0].mxu0
      %2722 = vmatprep.mubr.bf16.mxu0 0
      %2723 = vmatmul.mubr.bf16.gmra.mrb[0].mxu0 %v357
      %v2724 = vpop.f32.mrb[0].mxu0
      %v2725 = vadd.f32 0.0, %v2724
      %v2726 = vpop.f32.mrb[0].mxu0
      %v2727 = vpop.f32.mrb[0].mxu0
      %v2728 = vadd.f32 0.0, %v2727
      %v2729 = vpop.f32.mrb[0].mxu0
      %2730 = vmatprep.mubr.bf16.mxu0 0
      %2731 = vmatmul.mubr.bf16.gmra.mrb[0].mxu0 %v360
      %v2732 = vpop.f32.mrb[0].mxu0
      %v2733 = vadd.f32 0.0, %v2732
      %v2734 = vpop.f32.mrb[0].mxu0
      %v2735 = vpop.f32.mrb[0].mxu0
      %v2736 = vadd.f32 0.0, %v2735
      %v2737 = vpop.f32.mrb[0].mxu0
      %2738 = vmatprep.mubr.bf16.mxu0 0
      %2739 = vmatmul.mubr.bf16.gmra.mrb[0].mxu0 %v363
      %v2740 = vpop.f32.mrb[0].mxu0
      %v2741 = vadd.f32 0.0, %v2740
      %v2742 = vpop.f32.mrb[0].mxu0
      %v2743 = vpop.f32.mrb[0].mxu0
      %v2744 = vadd.f32 0.0, %v2743
      %v2745 = vpop.f32.mrb[0].mxu0
      %2746 = vmatprep.mubr.bf16.mxu0 0
      %2747 = vmatmul.mubr.bf16.gmra.mrb[0].mxu0 %v366
      %v2748 = vpop.f32.mrb[0].mxu0
      %v2749 = vadd.f32 0.0, %v2748
      %v2750 = vpop.f32.mrb[0].mxu0
      %v2751 = vpop.f32.mrb[0].mxu0
      %v2752 = vadd.f32 0.0, %v2751
      %v2753 = vpop.f32.mrb[0].mxu0
      %2754 = vmatprep.mubr.bf16.mxu0 0
      %2755 = vmatmul.mubr.bf16.gmra.mrb[0].mxu0 %v369
      %v2756 = vpop.f32.mrb[0].mxu0
      %v2757 = vadd.f32 0.0, %v2756
      %v2758 = vpop.f32.mrb[0].mxu0
      %v2759 = vpop.f32.mrb[0].mxu0
      %v2760 = vadd.f32 0.0, %v2759
      %v2761 = vpop.f32.mrb[0].mxu0
      %2762 = vmatprep.mubr.bf16.mxu0 0
      %2763 = vmatmul.mubr.bf16.gmra.mrb[0].mxu0 %v372
      %v2764 = vpop.f32.mrb[0].mxu0
      %v2765 = vadd.f32 0.0, %v2764
      %v2766 = vpop.f32.mrb[0].mxu0
      %v2767 = vpop.f32.mrb[0].mxu0
      %v2768 = vadd.f32 0.0, %v2767
      %v2769 = vpop.f32.mrb[0].mxu0
      %2770 = vmatprep.mubr.bf16.mxu0 0
      %2771 = vmatmul.mubr.bf16.gmra.mrb[0].mxu0 %v375
      %v2772 = vpop.f32.mrb[0].mxu0
      %v2773 = vadd.f32 0.0, %v2772
      %v2774 = vpop.f32.mrb[0].mxu0
      %v2775 = vpop.f32.mrb[0].mxu0
      %v2776 = vadd.f32 0.0, %v2775
      %v2777 = vpop.f32.mrb[0].mxu0
      %2778 = vmatprep.mubr.bf16.mxu0 0
      %2779 = vmatmul.mubr.bf16.gmra.mrb[0].mxu0 %v378
      %v2780 = vpop.f32.mrb[0].mxu0
      %v2781 = vadd.f32 0.0, %v2780
      %v2782 = vpop.f32.mrb[0].mxu0
      %v2783 = vpop.f32.mrb[0].mxu0
      %v2784 = vadd.f32 0.0, %v2783
      %v2785 = vpop.f32.mrb[0].mxu0
      %2786 = vmatprep.mubr.bf16.mxu0 0
      %2787 = vmatmul.mubr.bf16.gmra.mrb[0].mxu0 %v381
      %v2788 = vpop.f32.mrb[0].mxu0
      %v2789 = vadd.f32 0.0, %v2788
      %v2790 = vpop.f32.mrb[0].mxu0
      %v2791 = vpop.f32.mrb[0].mxu0
      %v2792 = vadd.f32 0.0, %v2791
      %v2793 = vpop.f32.mrb[0].mxu0
      %2794 = vmatprep.mubr.bf16.mxu0 0
      %2795 = vmatmul.mubr.bf16.gmra.mrb[0].mxu0 %v384
      %v2796 = vpop.f32.mrb[0].mxu0
      %v2797 = vadd.f32 0.0, %v2796
      %v2798 = vpop.f32.mrb[0].mxu0
      %v2799 = vpop.f32.mrb[0].mxu0
      %v2800 = vadd.f32 0.0, %v2799
      %v2801 = vpop.f32.mrb[0].mxu0
      %2802 = vmatprep.mubr.bf16.mxu0 0
      %2803 = vmatmul.mubr.bf16.gmra.mrb[0].mxu0 %v387
      %v2804 = vpop.f32.mrb[0].mxu0
      %v2805 = vadd.f32 0.0, %v2804
      %v2806 = vpop.f32.mrb[0].mxu0
      %v2807 = vpop.f32.mrb[0].mxu0
      %v2808 = vadd.f32 0.0, %v2807
      %v2809 = vpop.f32.mrb[0].mxu0
      %2810 = vmatprep.mubr.bf16.mxu0 0
      %2811 = vmatmul.mubr.bf16.gmra.mrb[0].mxu0 %v390
      %v2812 = vpop.f32.mrb[0].mxu0
      %v2813 = vadd.f32 0.0, %v2812
      %v2814 = vpop.f32.mrb[0].mxu0
      %v2815 = vpop.f32.mrb[0].mxu0
      %v2816 = vadd.f32 0.0, %v2815
      %v2817 = vpop.f32.mrb[0].mxu0
      %2818 = vmatprep.mubr.bf16.mxu0 0
      %2819 = vmatmul.mubr.bf16.gmra.mrb[0].mxu0 %v1831
      %v2820 = vpop.f32.mrb[0].mxu0
      %v2821 = vadd.f32 0.0, %v2820
      %v2822 = vpop.f32.mrb[0].mxu0
      %v2823 = vpop.f32.mrb[0].mxu0
      %v2824 = vadd.f32 0.0, %v2823
      %v2825 = vpop.f32.mrb[0].mxu0
      %2826 = vmatprep.mubr.bf16.mxu0 0
      %2827 = vmatmul.mubr.bf16.gmra.mrb[0].mxu0 %v2669
      %v2828 = vpop.f32.mrb[0].mxu0
      %v2829 = vadd.f32 0.0, %v2828
      %v2830 = vpop.f32.mrb[0].mxu0
      %v2831 = vpop.f32.mrb[0].mxu0
      %v2832 = vadd.f32 0.0, %v2831
      %v2833 = vpop.f32.mrb[0].mxu0
      %2834 = vdwg.mxu0
      %v2835 = vld [vmem:[#allocation2] sm:$0xff]
      %v2836 = vld [vmem:[#allocation2 + $0x8] sm:$0xff]
      %v2837 = vld [vmem:[#allocation2 + $0x10] sm:$0xff]
      %v2838 = vld [vmem:[#allocation2 + $0x18] sm:$0xff]
      %v2839 = vld [vmem:[#allocation2 + $0x20] sm:$0xff]
      %v2840 = vld [vmem:[#allocation2 + $0x28] sm:$0xff]
      %v2841 = vld [vmem:[#allocation2 + $0x30] sm:$0xff]
      %v2842 = vld [vmem:[#allocation2 + $0x38] sm:$0xff]
      %v2843 = vld [vmem:[#allocation2 + $0x40] sm:$0xff]
      %v2844 = vld [vmem:[#allocation2 + $0x48] sm:$0xff]
      %v2845 = vld [vmem:[#allocation2 + $0x50] sm:$0xff]
      %v2846 = vld [vmem:[#allocation2 + $0x58] sm:$0xff]
      %v2847 = vld [vmem:[#allocation2 + $0x60] sm:$0xff]
      %v2848 = vld [vmem:[#allocation2 + $0x68] sm:$0xff]
      %v2849 = vld [vmem:[#allocation2 + $0x70] sm:$0xff]
      %v2850 = vld [vmem:[#allocation2 + $0x78] sm:$0xff]
      %v2851 = vld [vmem:[#allocation2 + $0x80] sm:$0xff]
      %v2852 = vld [vmem:[#allocation2 + $0x88] sm:$0xff]
      %v2853 = vld [vmem:[#allocation2 + $0x90] sm:$0xff]
      %v2854 = vld [vmem:[#allocation2 + $0x98] sm:$0xff]
      %v2855 = vld [vmem:[#allocation2 + $0xa0] sm:$0xff]
      %v2856 = vld [vmem:[#allocation2 + $0xa8] sm:$0xff]
      %v2857 = vld [vmem:[#allocation2 + $0xb0] sm:$0xff]
      %v2858 = vld [vmem:[#allocation2 + $0xb8] sm:$0xff]
      %v2859 = vld [vmem:[#allocation2 + $0xc0] sm:$0xff]
      %v2860 = vld [vmem:[#allocation2 + $0xc8] sm:$0xff]
      %v2861 = vld [vmem:[#allocation2 + $0xd0] sm:$0xff]
      %v2862 = vld [vmem:[#allocation2 + $0xd8] sm:$0xff]
      %v2863 = vld [vmem:[#allocation2 + $0xe0] sm:$0xff]
      %v2864 = vld [vmem:[#allocation2 + $0xe8] sm:$0xff]
      %v2865 = vld [vmem:[#allocation2 + $0xf0] sm:$0xff]
      %v2866 = vld [vmem:[#allocation2 + $0xf8] sm:$0xff]
      %v2867 = vadd.f32 %v2835, %v2709
      %v2868 = vadd.f32 %v2836, %v2712
      %v2869 = vadd.f32 %v2837, %v2717
      %v2870 = vadd.f32 %v2838, %v2720
      %v2871 = vadd.f32 %v2839, %v2725
      %v2872 = vadd.f32 %v2840, %v2728
      %v2873 = vadd.f32 %v2841, %v2733
      %v2874 = vadd.f32 %v2842, %v2736
      %v2875 = vadd.f32 %v2843, %v2741
      %v2876 = vadd.f32 %v2844, %v2744
      %v2877 = vadd.f32 %v2845, %v2749
      %v2878 = vadd.f32 %v2846, %v2752
      %v2879 = vadd.f32 %v2847, %v2757
      %v2880 = vadd.f32 %v2848, %v2760
      %v2881 = vadd.f32 %v2849, %v2765
      %v2882 = vadd.f32 %v2850, %v2768
      %v2883 = vadd.f32 %v2851, %v2773
      %v2884 = vadd.f32 %v2852, %v2776
      %v2885 = vadd.f32 %v2853, %v2781
      %v2886 = vadd.f32 %v2854, %v2784
      %v2887 = vadd.f32 %v2855, %v2789
      %v2888 = vadd.f32 %v2856, %v2792
      %v2889 = vadd.f32 %v2857, %v2797
      %v2890 = vadd.f32 %v2858, %v2800
      %v2891 = vadd.f32 %v2859, %v2805
      %v2892 = vadd.f32 %v2860, %v2808
      %v2893 = vadd.f32 %v2861, %v2813
      %v2894 = vadd.f32 %v2862, %v2816
      %v2895 = vadd.f32 %v2863, %v2821
      %v2896 = vadd.f32 %v2864, %v2824
      %v2897 = vadd.f32 %v2865, %v2829
      %v2898 = vadd.f32 %v2866, %v2832
      %2899 = vst [vmem:[#allocation2] sm:$0xff] %v2867
      %2900 = vst [vmem:[#allocation2 + $0x8] sm:$0xff] %v2868
      %2901 = vst [vmem:[#allocation2 + $0x10] sm:$0xff] %v2869
      %2902 = vst [vmem:[#allocation2 + $0x18] sm:$0xff] %v2870
      %2903 = vst [vmem:[#allocation2 + $0x20] sm:$0xff] %v2871
      %2904 = vst [vmem:[#allocation2 + $0x28] sm:$0xff] %v2872
      %2905 = vst [vmem:[#allocation2 + $0x30] sm:$0xff] %v2873
      %2906 = vst [vmem:[#allocation2 + $0x38] sm:$0xff] %v2874
      %2907 = vst [vmem:[#allocation2 + $0x40] sm:$0xff] %v2875
      %2908 = vst [vmem:[#allocation2 + $0x48] sm:$0xff] %v2876
      %2909 = vst [vmem:[#allocation2 + $0x50] sm:$0xff] %v2877
      %2910 = vst [vmem:[#allocation2 + $0x58] sm:$0xff] %v2878
      %2911 = vst [vmem:[#allocation2 + $0x60] sm:$0xff] %v2879
      %2912 = vst [vmem:[#allocation2 + $0x68] sm:$0xff] %v2880
      %2913 = vst [vmem:[#allocation2 + $0x70] sm:$0xff] %v2881
      %2914 = vst [vmem:[#allocation2 + $0x78] sm:$0xff] %v2882
      %2915 = vst [vmem:[#allocation2 + $0x80] sm:$0xff] %v2883
      %2916 = vst [vmem:[#allocation2 + $0x88] sm:$0xff] %v2884
      %2917 = vst [vmem:[#allocation2 + $0x90] sm:$0xff] %v2885
      %2918 = vst [vmem:[#allocation2 + $0x98] sm:$0xff] %v2886
      %2919 = vst [vmem:[#allocation2 + $0xa0] sm:$0xff] %v2887
      %2920 = vst [vmem:[#allocation2 + $0xa8] sm:$0xff] %v2888
      %2921 = vst [vmem:[#allocation2 + $0xb0] sm:$0xff] %v2889
      %2922 = vst [vmem:[#allocation2 + $0xb8] sm:$0xff] %v2890
      %2923 = vst [vmem:[#allocation2 + $0xc0] sm:$0xff] %v2891
      %2924 = vst [vmem:[#allocation2 + $0xc8] sm:$0xff] %v2892
      %2925 = vst [vmem:[#allocation2 + $0xd0] sm:$0xff] %v2893
      %2926 = vst [vmem:[#allocation2 + $0xd8] sm:$0xff] %v2894
      %2927 = vst [vmem:[#allocation2 + $0xe0] sm:$0xff] %v2895
      %2928 = vst [vmem:[#allocation2 + $0xe8] sm:$0xff] %v2896
      %2929 = vst [vmem:[#allocation2 + $0xf0] sm:$0xff] %v2897
      %2930 = vst [vmem:[#allocation2 + $0xf8] sm:$0xff] %v2898
      %v2932 = vshrl.u32 %v259, 16
      %v2934 = vrot.slane %v2932, 4
      %v2935 = vshll.u32 %v259, 16
      %v2937 = vrot.slane %v2935, 5
      %v2938 = vor.u32 %v2934, %v2937
      %v2939 = vrot.slane %v2938, 4
      %v2941 = vshll.u32 %v260, 16
      %v2943 = vrot.slane %v2941, 5
      %v2944 = vsel %vm591, %v2939, %v2943
      %v2945 = vshrl.u32 %v260, 16
      %v2947 = vrot.slane %v2945, 4
      %v2948 = vor.u32 %v2947, %v2943
      %v2949 = vrot.slane %v2948, 4
      %v2951 = vshll.u32 %v261, 16
      %v2953 = vrot.slane %v2951, 5
      %v2954 = vsel %vm591, %v2949, %v2953
      %s2955 = scalar_lea.vmem %s1, 14
      %v2956 = vld [vmem:[%s2955] sm:$0x3]
      %v2957 = vunpack.c.l.b16 %v2944
      %v2958 = vunpack.c.l.b16 %v2954
      %v2959 = vpack.c.b16 %v2958, %v2957
      %v2961 = vsel %vm343, %v2959, 0
      %v2964 = vsel %vm392, %v2956, 0
      %2966 = vmatprep.subr.bf16.mxu0 0
      %2967 = vmatpush1.bf16.msra.mxu0 %v2964
      %2968 = vmatprep.subr.bf16.mxu0 0
      %2969 = vmatpush1.bf16.msra.mxu0 0
      %2970 = vmatprep.subr.bf16.mxu0 0
      %2971 = vmatpush1.bf16.msra.mxu0 0
      %2972 = vmatprep.subr.bf16.mxu0 0
      %2973 = vmatpush1.bf16.msra.mxu0 0
      %2974 = vmatprep.subr.bf16.mxu0 0
      %2975 = vmatpush1.bf16.msra.mxu0 0
      %2976 = vmatprep.subr.bf16.mxu0 0
      %2977 = vmatpush1.bf16.msra.mxu0 0
      %2978 = vmatprep.subr.bf16.mxu0 0
      %2979 = vmatpush1.bf16.msra.mxu0 0
      %2980 = vmatprep.subr.bf16.mxu0 0
      %2981 = vmatpush1.bf16.msra.mxu0 0
      %2982 = vmatprep.subr.bf16.mxu0 0
      %2983 = vmatpush1.bf16.msra.mxu0 0
      %2984 = vmatprep.subr.bf16.mxu0 0
      %2985 = vmatpush1.bf16.msra.mxu0 0
      %2986 = vmatprep.subr.bf16.mxu0 0
      %2987 = vmatpush1.bf16.msra.mxu0 0
      %2988 = vmatprep.subr.bf16.mxu0 0
      %2989 = vmatpush1.bf16.msra.mxu0 0
      %2990 = vmatprep.subr.bf16.mxu0 0
      %2991 = vmatpush1.bf16.msra.mxu0 0
      %2992 = vmatprep.subr.bf16.mxu0 0
      %2993 = vmatpush1.bf16.msra.mxu0 0
      %2994 = vmatprep.subr.bf16.mxu0 0
      %2995 = vmatpush1.bf16.msra.mxu0 0
      %2996 = vmatprep.subr.bf16.mxu0 0
      %2997 = vmatpush1.bf16.msra.mxu0 0
      %2998 = vmatprep.mubr.bf16.mxu0 0
      %2999 = vmatmul.mubr.bf16.gmra.mrb[0].mxu0 %v1033
      %v3000 = vpop.f32.mrb[0].mxu0
      %v3001 = vadd.f32 0.0, %v3000
      %v3002 = vpop.f32.mrb[0].mxu0
      %v3003 = vpop.f32.mrb[0].mxu0
      %v3004 = vadd.f32 0.0, %v3003
      %v3005 = vpop.f32.mrb[0].mxu0
      %3006 = vmatprep.mubr.bf16.mxu0 0
      %3007 = vmatmul.mubr.bf16.gmra.mrb[0].mxu0 %v1036
      %v3008 = vpop.f32.mrb[0].mxu0
      %v3009 = vadd.f32 0.0, %v3008
      %v3010 = vpop.f32.mrb[0].mxu0
      %v3011 = vpop.f32.mrb[0].mxu0
      %v3012 = vadd.f32 0.0, %v3011
      %v3013 = vpop.f32.mrb[0].mxu0
      %3014 = vmatprep.mubr.bf16.mxu0 0
      %3015 = vmatmul.mubr.bf16.gmra.mrb[0].mxu0 %v1039
      %v3016 = vpop.f32.mrb[0].mxu0
      %v3017 = vadd.f32 0.0, %v3016
      %v3018 = vpop.f32.mrb[0].mxu0
      %v3019 = vpop.f32.mrb[0].mxu0
      %v3020 = vadd.f32 0.0, %v3019
      %v3021 = vpop.f32.mrb[0].mxu0
      %3022 = vmatprep.mubr.bf16.mxu0 0
      %3023 = vmatmul.mubr.bf16.gmra.mrb[0].mxu0 %v1042
      %v3024 = vpop.f32.mrb[0].mxu0
      %v3025 = vadd.f32 0.0, %v3024
      %v3026 = vpop.f32.mrb[0].mxu0
      %v3027 = vpop.f32.mrb[0].mxu0
      %v3028 = vadd.f32 0.0, %v3027
      %v3029 = vpop.f32.mrb[0].mxu0
      %3030 = vmatprep.mubr.bf16.mxu0 0
      %3031 = vmatmul.mubr.bf16.gmra.mrb[0].mxu0 %v1045
      %v3032 = vpop.f32.mrb[0].mxu0
      %v3033 = vadd.f32 0.0, %v3032
      %v3034 = vpop.f32.mrb[0].mxu0
      %v3035 = vpop.f32.mrb[0].mxu0
      %v3036 = vadd.f32 0.0, %v3035
      %v3037 = vpop.f32.mrb[0].mxu0
      %3038 = vmatprep.mubr.bf16.mxu0 0
      %3039 = vmatmul.mubr.bf16.gmra.mrb[0].mxu0 %v1048
      %v3040 = vpop.f32.mrb[0].mxu0
      %v3041 = vadd.f32 0.0, %v3040
      %v3042 = vpop.f32.mrb[0].mxu0
      %v3043 = vpop.f32.mrb[0].mxu0
      %v3044 = vadd.f32 0.0, %v3043
      %v3045 = vpop.f32.mrb[0].mxu0
      %3046 = vmatprep.mubr.bf16.mxu0 0
      %3047 = vmatmul.mubr.bf16.gmra.mrb[0].mxu0 %v1051
      %v3048 = vpop.f32.mrb[0].mxu0
      %v3049 = vadd.f32 0.0, %v3048
      %v3050 = vpop.f32.mrb[0].mxu0
      %v3051 = vpop.f32.mrb[0].mxu0
      %v3052 = vadd.f32 0.0, %v3051
      %v3053 = vpop.f32.mrb[0].mxu0
      %3054 = vmatprep.mubr.bf16.mxu0 0
      %3055 = vmatmul.mubr.bf16.gmra.mrb[0].mxu0 %v1054
      %v3056 = vpop.f32.mrb[0].mxu0
      %v3057 = vadd.f32 0.0, %v3056
      %v3058 = vpop.f32.mrb[0].mxu0
      %v3059 = vpop.f32.mrb[0].mxu0
      %v3060 = vadd.f32 0.0, %v3059
      %v3061 = vpop.f32.mrb[0].mxu0
      %3062 = vmatprep.mubr.bf16.mxu0 0
      %3063 = vmatmul.mubr.bf16.gmra.mrb[0].mxu0 %v1057
      %v3064 = vpop.f32.mrb[0].mxu0
      %v3065 = vadd.f32 0.0, %v3064
      %v3066 = vpop.f32.mrb[0].mxu0
      %v3067 = vpop.f32.mrb[0].mxu0
      %v3068 = vadd.f32 0.0, %v3067
      %v3069 = vpop.f32.mrb[0].mxu0
      %3070 = vmatprep.mubr.bf16.mxu0 0
      %3071 = vmatmul.mubr.bf16.gmra.mrb[0].mxu0 %v1060
      %v3072 = vpop.f32.mrb[0].mxu0
      %v3073 = vadd.f32 0.0, %v3072
      %v3074 = vpop.f32.mrb[0].mxu0
      %v3075 = vpop.f32.mrb[0].mxu0
      %v3076 = vadd.f32 0.0, %v3075
      %v3077 = vpop.f32.mrb[0].mxu0
      %3078 = vmatprep.mubr.bf16.mxu0 0
      %3079 = vmatmul.mubr.bf16.gmra.mrb[0].mxu0 %v1063
      %v3080 = vpop.f32.mrb[0].mxu0
      %v3081 = vadd.f32 0.0, %v3080
      %v3082 = vpop.f32.mrb[0].mxu0
      %v3083 = vpop.f32.mrb[0].mxu0
      %v3084 = vadd.f32 0.0, %v3083
      %v3085 = vpop.f32.mrb[0].mxu0
      %3086 = vmatprep.mubr.bf16.mxu0 0
      %3087 = vmatmul.mubr.bf16.gmra.mrb[0].mxu0 %v1066
      %v3088 = vpop.f32.mrb[0].mxu0
      %v3089 = vadd.f32 0.0, %v3088
      %v3090 = vpop.f32.mrb[0].mxu0
      %v3091 = vpop.f32.mrb[0].mxu0
      %v3092 = vadd.f32 0.0, %v3091
      %v3093 = vpop.f32.mrb[0].mxu0
      %3094 = vmatprep.mubr.bf16.mxu0 0
      %3095 = vmatmul.mubr.bf16.gmra.mrb[0].mxu0 %v1069
      %v3096 = vpop.f32.mrb[0].mxu0
      %v3097 = vadd.f32 0.0, %v3096
      %v3098 = vpop.f32.mrb[0].mxu0
      %v3099 = vpop.f32.mrb[0].mxu0
      %v3100 = vadd.f32 0.0, %v3099
      %v3101 = vpop.f32.mrb[0].mxu0
      %3102 = vmatprep.mubr.bf16.mxu0 0
      %3103 = vmatmul.mubr.bf16.gmra.mrb[0].mxu0 %v1072
      %v3104 = vpop.f32.mrb[0].mxu0
      %v3105 = vadd.f32 0.0, %v3104
      %v3106 = vpop.f32.mrb[0].mxu0
      %v3107 = vpop.f32.mrb[0].mxu0
      %v3108 = vadd.f32 0.0, %v3107
      %v3109 = vpop.f32.mrb[0].mxu0
      %3110 = vmatprep.mubr.bf16.mxu0 0
      %3111 = vmatmul.mubr.bf16.gmra.mrb[0].mxu0 %v2123
      %v3112 = vpop.f32.mrb[0].mxu0
      %v3113 = vadd.f32 0.0, %v3112
      %v3114 = vpop.f32.mrb[0].mxu0
      %v3115 = vpop.f32.mrb[0].mxu0
      %v3116 = vadd.f32 0.0, %v3115
      %v3117 = vpop.f32.mrb[0].mxu0
      %3118 = vmatprep.mubr.bf16.mxu0 0
      %3119 = vmatmul.mubr.bf16.gmra.mrb[0].mxu0 %v2961
      %v3120 = vpop.f32.mrb[0].mxu0
      %v3121 = vadd.f32 0.0, %v3120
      %v3122 = vpop.f32.mrb[0].mxu0
      %v3123 = vpop.f32.mrb[0].mxu0
      %v3124 = vadd.f32 0.0, %v3123
      %v3125 = vpop.f32.mrb[0].mxu0
      %3126 = vdwg.mxu0
      %v3127 = vld [vmem:[#allocation2] sm:$0xff]
      %v3128 = vld [vmem:[#allocation2 + $0x8] sm:$0xff]
      %v3129 = vld [vmem:[#allocation2 + $0x10] sm:$0xff]
      %v3130 = vld [vmem:[#allocation2 + $0x18] sm:$0xff]
      %v3131 = vld [vmem:[#allocation2 + $0x20] sm:$0xff]
      %v3132 = vld [vmem:[#allocation2 + $0x28] sm:$0xff]
      %v3133 = vld [vmem:[#allocation2 + $0x30] sm:$0xff]
      %v3134 = vld [vmem:[#allocation2 + $0x38] sm:$0xff]
      %v3135 = vld [vmem:[#allocation2 + $0x40] sm:$0xff]
      %v3136 = vld [vmem:[#allocation2 + $0x48] sm:$0xff]
      %v3137 = vld [vmem:[#allocation2 + $0x50] sm:$0xff]
      %v3138 = vld [vmem:[#allocation2 + $0x58] sm:$0xff]
      %v3139 = vld [vmem:[#allocation2 + $0x60] sm:$0xff]
      %v3140 = vld [vmem:[#allocation2 + $0x68] sm:$0xff]
      %v3141 = vld [vmem:[#allocation2 + $0x70] sm:$0xff]
      %v3142 = vld [vmem:[#allocation2 + $0x78] sm:$0xff]
      %v3143 = vld [vmem:[#allocation2 + $0x80] sm:$0xff]
      %v3144 = vld [vmem:[#allocation2 + $0x88] sm:$0xff]
      %v3145 = vld [vmem:[#allocation2 + $0x90] sm:$0xff]
      %v3146 = vld [vmem:[#allocation2 + $0x98] sm:$0xff]
      %v3147 = vld [vmem:[#allocation2 + $0xa0] sm:$0xff]
      %v3148 = vld [vmem:[#allocation2 + $0xa8] sm:$0xff]
      %v3149 = vld [vmem:[#allocation2 + $0xb0] sm:$0xff]
      %v3150 = vld [vmem:[#allocation2 + $0xb8] sm:$0xff]
      %v3151 = vld [vmem:[#allocation2 + $0xc0] sm:$0xff]
      %v3152 = vld [vmem:[#allocation2 + $0xc8] sm:$0xff]
      %v3153 = vld [vmem:[#allocation2 + $0xd0] sm:$0xff]
      %v3154 = vld [vmem:[#allocation2 + $0xd8] sm:$0xff]
      %v3155 = vld [vmem:[#allocation2 + $0xe0] sm:$0xff]
      %v3156 = vld [vmem:[#allocation2 + $0xe8] sm:$0xff]
      %v3157 = vld [vmem:[#allocation2 + $0xf0] sm:$0xff]
      %v3158 = vld [vmem:[#allocation2 + $0xf8] sm:$0xff]
      %v3159 = vadd.f32 %v3127, %v3001
      %v3160 = vadd.f32 %v3128, %v3004
      %v3161 = vadd.f32 %v3129, %v3009
      %v3162 = vadd.f32 %v3130, %v3012
      %v3163 = vadd.f32 %v3131, %v3017
      %v3164 = vadd.f32 %v3132, %v3020
      %v3165 = vadd.f32 %v3133, %v3025
      %v3166 = vadd.f32 %v3134, %v3028
      %v3167 = vadd.f32 %v3135, %v3033
      %v3168 = vadd.f32 %v3136, %v3036
      %v3169 = vadd.f32 %v3137, %v3041
      %v3170 = vadd.f32 %v3138, %v3044
      %v3171 = vadd.f32 %v3139, %v3049
      %v3172 = vadd.f32 %v3140, %v3052
      %v3173 = vadd.f32 %v3141, %v3057
      %v3174 = vadd.f32 %v3142, %v3060
      %v3175 = vadd.f32 %v3143, %v3065
      %v3176 = vadd.f32 %v3144, %v3068
      %v3177 = vadd.f32 %v3145, %v3073
      %v3178 = vadd.f32 %v3146, %v3076
      %v3179 = vadd.f32 %v3147, %v3081
      %v3180 = vadd.f32 %v3148, %v3084
      %v3181 = vadd.f32 %v3149, %v3089
      %v3182 = vadd.f32 %v3150, %v3092
      %v3183 = vadd.f32 %v3151, %v3097
      %v3184 = vadd.f32 %v3152, %v3100
      %v3185 = vadd.f32 %v3153, %v3105
      %v3186 = vadd.f32 %v3154, %v3108
      %v3187 = vadd.f32 %v3155, %v3113
      %v3188 = vadd.f32 %v3156, %v3116
      %v3189 = vadd.f32 %v3157, %v3121
      %v3190 = vadd.f32 %v3158, %v3124
      %3191 = vst [vmem:[#allocation2] sm:$0xff] %v3159
      %3192 = vst [vmem:[#allocation2 + $0x8] sm:$0xff] %v3160
      %3193 = vst [vmem:[#allocation2 + $0x10] sm:$0xff] %v3161
      %3194 = vst [vmem:[#allocation2 + $0x18] sm:$0xff] %v3162
      %3195 = vst [vmem:[#allocation2 + $0x20] sm:$0xff] %v3163
      %3196 = vst [vmem:[#allocation2 + $0x28] sm:$0xff] %v3164
      %3197 = vst [vmem:[#allocation2 + $0x30] sm:$0xff] %v3165
      %3198 = vst [vmem:[#allocation2 + $0x38] sm:$0xff] %v3166
      %3199 = vst [vmem:[#allocation2 + $0x40] sm:$0xff] %v3167
      %3200 = vst [vmem:[#allocation2 + $0x48] sm:$0xff] %v3168
      %3201 = vst [vmem:[#allocation2 + $0x50] sm:$0xff] %v3169
      %3202 = vst [vmem:[#allocation2 + $0x58] sm:$0xff] %v3170
      %3203 = vst [vmem:[#allocation2 + $0x60] sm:$0xff] %v3171
      %3204 = vst [vmem:[#allocation2 + $0x68] sm:$0xff] %v3172
      %3205 = vst [vmem:[#allocation2 + $0x70] sm:$0xff] %v3173
      %3206 = vst [vmem:[#allocation2 + $0x78] sm:$0xff] %v3174
      %3207 = vst [vmem:[#allocation2 + $0x80] sm:$0xff] %v3175
      %3208 = vst [vmem:[#allocation2 + $0x88] sm:$0xff] %v3176
      %3209 = vst [vmem:[#allocation2 + $0x90] sm:$0xff] %v3177
      %3210 = vst [vmem:[#allocation2 + $0x98] sm:$0xff] %v3178
      %3211 = vst [vmem:[#allocation2 + $0xa0] sm:$0xff] %v3179
      %3212 = vst [vmem:[#allocation2 + $0xa8] sm:$0xff] %v3180
      %3213 = vst [vmem:[#allocation2 + $0xb0] sm:$0xff] %v3181
      %3214 = vst [vmem:[#allocation2 + $0xb8] sm:$0xff] %v3182
      %3215 = vst [vmem:[#allocation2 + $0xc0] sm:$0xff] %v3183
      %3216 = vst [vmem:[#allocation2 + $0xc8] sm:$0xff] %v3184
      %3217 = vst [vmem:[#allocation2 + $0xd0] sm:$0xff] %v3185
      %3218 = vst [vmem:[#allocation2 + $0xd8] sm:$0xff] %v3186
      %3219 = vst [vmem:[#allocation2 + $0xe0] sm:$0xff] %v3187
      %3220 = vst [vmem:[#allocation2 + $0xe8] sm:$0xff] %v3188
      %3221 = vst [vmem:[#allocation2 + $0xf0] sm:$0xff] %v3189
      %3222 = vst [vmem:[#allocation2 + $0xf8] sm:$0xff] %v3190
      %v3224 = vrot.slane %v259, 5
      %v3225 = vrot.slane %v3224, 4
      %v3226 = vrot.slane %v260, 5
      %v3227 = vsel %vm1352, %v3225, %v3226
      %v3228 = vrot.slane %v3226, 4
      %v3229 = vrot.slane %v261, 5
      %v3230 = vsel %vm1352, %v3228, %v3229
      %s3231 = scalar_lea.vmem %s1, 16
      %v3232 = vld [vmem:[%s3231] sm:$0x3]
      %v3233 = vunpack.c.l.b16 %v3227
      %v3234 = vunpack.c.l.b16 %v3230
      %v3235 = vpack.c.b16 %v3234, %v3233
      %v3237 = vsel %vm343, %v3235, 0
      %v3240 = vsel %vm392, %v3232, 0
      %3242 = vmatprep.subr.bf16.mxu0 0
      %3243 = vmatpush1.bf16.msra.mxu0 %v3240
      %3244 = vmatprep.subr.bf16.mxu0 0
      %3245 = vmatpush1.bf16.msra.mxu0 0
      %3246 = vmatprep.subr.bf16.mxu0 0
      %3247 = vmatpush1.bf16.msra.mxu0 0
      %3248 = vmatprep.subr.bf16.mxu0 0
      %3249 = vmatpush1.bf16.msra.mxu0 0
      %3250 = vmatprep.subr.bf16.mxu0 0
      %3251 = vmatpush1.bf16.msra.mxu0 0
      %3252 = vmatprep.subr.bf16.mxu0 0
      %3253 = vmatpush1.bf16.msra.mxu0 0
      %3254 = vmatprep.subr.bf16.mxu0 0
      %3255 = vmatpush1.bf16.msra.mxu0 0
      %3256 = vmatprep.subr.bf16.mxu0 0
      %3257 = vmatpush1.bf16.msra.mxu0 0
      %3258 = vmatprep.subr.bf16.mxu0 0
      %3259 = vmatpush1.bf16.msra.mxu0 0
      %3260 = vmatprep.subr.bf16.mxu0 0
      %3261 = vmatpush1.bf16.msra.mxu0 0
      %3262 = vmatprep.subr.bf16.mxu0 0
      %3263 = vmatpush1.bf16.msra.mxu0 0
      %3264 = vmatprep.subr.bf16.mxu0 0
      %3265 = vmatpush1.bf16.msra.mxu0 0
      %3266 = vmatprep.subr.bf16.mxu0 0
      %3267 = vmatpush1.bf16.msra.mxu0 0
      %3268 = vmatprep.subr.bf16.mxu0 0
      %3269 = vmatpush1.bf16.msra.mxu0 0
      %3270 = vmatprep.subr.bf16.mxu0 0
      %3271 = vmatpush1.bf16.msra.mxu0 0
      %3272 = vmatprep.subr.bf16.mxu0 0
      %3273 = vmatpush1.bf16.msra.mxu0 0
      %3274 = vmatprep.mubr.bf16.mxu0 0
      %3275 = vmatmul.mubr.bf16.gmra.mrb[0].mxu0 %v1522
      %v3276 = vpop.f32.mrb[0].mxu0
      %v3277 = vadd.f32 0.0, %v3276
      %v3278 = vpop.f32.mrb[0].mxu0
      %v3279 = vpop.f32.mrb[0].mxu0
      %v3280 = vadd.f32 0.0, %v3279
      %v3281 = vpop.f32.mrb[0].mxu0
      %3282 = vmatprep.mubr.bf16.mxu0 0
      %3283 = vmatmul.mubr.bf16.gmra.mrb[0].mxu0 %v1525
      %v3284 = vpop.f32.mrb[0].mxu0
      %v3285 = vadd.f32 0.0, %v3284
      %v3286 = vpop.f32.mrb[0].mxu0
      %v3287 = vpop.f32.mrb[0].mxu0
      %v3288 = vadd.f32 0.0, %v3287
      %v3289 = vpop.f32.mrb[0].mxu0
      %3290 = vmatprep.mubr.bf16.mxu0 0
      %3291 = vmatmul.mubr.bf16.gmra.mrb[0].mxu0 %v1528
      %v3292 = vpop.f32.mrb[0].mxu0
      %v3293 = vadd.f32 0.0, %v3292
      %v3294 = vpop.f32.mrb[0].mxu0
      %v3295 = vpop.f32.mrb[0].mxu0
      %v3296 = vadd.f32 0.0, %v3295
      %v3297 = vpop.f32.mrb[0].mxu0
      %3298 = vmatprep.mubr.bf16.mxu0 0
      %3299 = vmatmul.mubr.bf16.gmra.mrb[0].mxu0 %v1531
      %v3300 = vpop.f32.mrb[0].mxu0
      %v3301 = vadd.f32 0.0, %v3300
      %v3302 = vpop.f32.mrb[0].mxu0
      %v3303 = vpop.f32.mrb[0].mxu0
      %v3304 = vadd.f32 0.0, %v3303
      %v3305 = vpop.f32.mrb[0].mxu0
      %3306 = vmatprep.mubr.bf16.mxu0 0
      %3307 = vmatmul.mubr.bf16.gmra.mrb[0].mxu0 %v1534
      %v3308 = vpop.f32.mrb[0].mxu0
      %v3309 = vadd.f32 0.0, %v3308
      %v3310 = vpop.f32.mrb[0].mxu0
      %v3311 = vpop.f32.mrb[0].mxu0
      %v3312 = vadd.f32 0.0, %v3311
      %v3313 = vpop.f32.mrb[0].mxu0
      %3314 = vmatprep.mubr.bf16.mxu0 0
      %3315 = vmatmul.mubr.bf16.gmra.mrb[0].mxu0 %v1537
      %v3316 = vpop.f32.mrb[0].mxu0
      %v3317 = vadd.f32 0.0, %v3316
      %v3318 = vpop.f32.mrb[0].mxu0
      %v3319 = vpop.f32.mrb[0].mxu0
      %v3320 = vadd.f32 0.0, %v3319
      %v3321 = vpop.f32.mrb[0].mxu0
      %3322 = vmatprep.mubr.bf16.mxu0 0
      %3323 = vmatmul.mubr.bf16.gmra.mrb[0].mxu0 %v1540
      %v3324 = vpop.f32.mrb[0].mxu0
      %v3325 = vadd.f32 0.0, %v3324
      %v3326 = vpop.f32.mrb[0].mxu0
      %v3327 = vpop.f32.mrb[0].mxu0
      %v3328 = vadd.f32 0.0, %v3327
      %v3329 = vpop.f32.mrb[0].mxu0
      %3330 = vmatprep.mubr.bf16.mxu0 0
      %3331 = vmatmul.mubr.bf16.gmra.mrb[0].mxu0 %v1543
      %v3332 = vpop.f32.mrb[0].mxu0
      %v3333 = vadd.f32 0.0, %v3332
      %v3334 = vpop.f32.mrb[0].mxu0
      %v3335 = vpop.f32.mrb[0].mxu0
      %v3336 = vadd.f32 0.0, %v3335
      %v3337 = vpop.f32.mrb[0].mxu0
      %3338 = vmatprep.mubr.bf16.mxu0 0
      %3339 = vmatmul.mubr.bf16.gmra.mrb[0].mxu0 %v1546
      %v3340 = vpop.f32.mrb[0].mxu0
      %v3341 = vadd.f32 0.0, %v3340
      %v3342 = vpop.f32.mrb[0].mxu0
      %v3343 = vpop.f32.mrb[0].mxu0
      %v3344 = vadd.f32 0.0, %v3343
      %v3345 = vpop.f32.mrb[0].mxu0
      %3346 = vmatprep.mubr.bf16.mxu0 0
      %3347 = vmatmul.mubr.bf16.gmra.mrb[0].mxu0 %v1549
      %v3348 = vpop.f32.mrb[0].mxu0
      %v3349 = vadd.f32 0.0, %v3348
      %v3350 = vpop.f32.mrb[0].mxu0
      %v3351 = vpop.f32.mrb[0].mxu0
      %v3352 = vadd.f32 0.0, %v3351
      %v3353 = vpop.f32.mrb[0].mxu0
      %3354 = vmatprep.mubr.bf16.mxu0 0
      %3355 = vmatmul.mubr.bf16.gmra.mrb[0].mxu0 %v1552
      %v3356 = vpop.f32.mrb[0].mxu0
      %v3357 = vadd.f32 0.0, %v3356
      %v3358 = vpop.f32.mrb[0].mxu0
      %v3359 = vpop.f32.mrb[0].mxu0
      %v3360 = vadd.f32 0.0, %v3359
      %v3361 = vpop.f32.mrb[0].mxu0
      %3362 = vmatprep.mubr.bf16.mxu0 0
      %3363 = vmatmul.mubr.bf16.gmra.mrb[0].mxu0 %v1555
      %v3364 = vpop.f32.mrb[0].mxu0
      %v3365 = vadd.f32 0.0, %v3364
      %v3366 = vpop.f32.mrb[0].mxu0
      %v3367 = vpop.f32.mrb[0].mxu0
      %v3368 = vadd.f32 0.0, %v3367
      %v3369 = vpop.f32.mrb[0].mxu0
      %3370 = vmatprep.mubr.bf16.mxu0 0
      %3371 = vmatmul.mubr.bf16.gmra.mrb[0].mxu0 %v1558
      %v3372 = vpop.f32.mrb[0].mxu0
      %v3373 = vadd.f32 0.0, %v3372
      %v3374 = vpop.f32.mrb[0].mxu0
      %v3375 = vpop.f32.mrb[0].mxu0
      %v3376 = vadd.f32 0.0, %v3375
      %v3377 = vpop.f32.mrb[0].mxu0
      %3378 = vmatprep.mubr.bf16.mxu0 0
      %3379 = vmatmul.mubr.bf16.gmra.mrb[0].mxu0 %v1561
      %v3380 = vpop.f32.mrb[0].mxu0
      %v3381 = vadd.f32 0.0, %v3380
      %v3382 = vpop.f32.mrb[0].mxu0
      %v3383 = vpop.f32.mrb[0].mxu0
      %v3384 = vadd.f32 0.0, %v3383
      %v3385 = vpop.f32.mrb[0].mxu0
      %3386 = vmatprep.mubr.bf16.mxu0 0
      %3387 = vmatmul.mubr.bf16.gmra.mrb[0].mxu0 %v2399
      %v3388 = vpop.f32.mrb[0].mxu0
      %v3389 = vadd.f32 0.0, %v3388
      %v3390 = vpop.f32.mrb[0].mxu0
      %v3391 = vpop.f32.mrb[0].mxu0
      %v3392 = vadd.f32 0.0, %v3391
      %v3393 = vpop.f32.mrb[0].mxu0
      %3394 = vmatprep.mubr.bf16.mxu0 0
      %3395 = vmatmul.mubr.bf16.gmra.mrb[0].mxu0 %v3237
      %v3396 = vpop.f32.mrb[0].mxu0
      %v3397 = vadd.f32 0.0, %v3396
      %v3398 = vpop.f32.mrb[0].mxu0
      %v3399 = vpop.f32.mrb[0].mxu0
      %v3400 = vadd.f32 0.0, %v3399
      %v3401 = vpop.f32.mrb[0].mxu0
      %3402 = vdwg.mxu0
      %v3403 = vld [vmem:[#allocation2] sm:$0xff]
      %v3404 = vld [vmem:[#allocation2 + $0x8] sm:$0xff]
      %v3405 = vld [vmem:[#allocation2 + $0x10] sm:$0xff]
      %v3406 = vld [vmem:[#allocation2 + $0x18] sm:$0xff]
      %v3407 = vld [vmem:[#allocation2 + $0x20] sm:$0xff]
      %v3408 = vld [vmem:[#allocation2 + $0x28] sm:$0xff]
      %v3409 = vld [vmem:[#allocation2 + $0x30] sm:$0xff]
      %v3410 = vld [vmem:[#allocation2 + $0x38] sm:$0xff]
      %v3411 = vld [vmem:[#allocation2 + $0x40] sm:$0xff]
      %v3412 = vld [vmem:[#allocation2 + $0x48] sm:$0xff]
      %v3413 = vld [vmem:[#allocation2 + $0x50] sm:$0xff]
      %v3414 = vld [vmem:[#allocation2 + $0x58] sm:$0xff]
      %v3415 = vld [vmem:[#allocation2 + $0x60] sm:$0xff]
      %v3416 = vld [vmem:[#allocation2 + $0x68] sm:$0xff]
      %v3417 = vld [vmem:[#allocation2 + $0x70] sm:$0xff]
      %v3418 = vld [vmem:[#allocation2 + $0x78] sm:$0xff]
      %v3419 = vld [vmem:[#allocation2 + $0x80] sm:$0xff]
      %v3420 = vld [vmem:[#allocation2 + $0x88] sm:$0xff]
      %v3421 = vld [vmem:[#allocation2 + $0x90] sm:$0xff]
      %v3422 = vld [vmem:[#allocation2 + $0x98] sm:$0xff]
      %v3423 = vld [vmem:[#allocation2 + $0xa0] sm:$0xff]
      %v3424 = vld [vmem:[#allocation2 + $0xa8] sm:$0xff]
      %v3425 = vld [vmem:[#allocation2 + $0xb0] sm:$0xff]
      %v3426 = vld [vmem:[#allocation2 + $0xb8] sm:$0xff]
      %v3427 = vld [vmem:[#allocation2 + $0xc0] sm:$0xff]
      %v3428 = vld [vmem:[#allocation2 + $0xc8] sm:$0xff]
      %v3429 = vld [vmem:[#allocation2 + $0xd0] sm:$0xff]
      %v3430 = vld [vmem:[#allocation2 + $0xd8] sm:$0xff]
      %v3431 = vld [vmem:[#allocation2 + $0xe0] sm:$0xff]
      %v3432 = vld [vmem:[#allocation2 + $0xe8] sm:$0xff]
      %v3433 = vld [vmem:[#allocation2 + $0xf0] sm:$0xff]
      %v3434 = vld [vmem:[#allocation2 + $0xf8] sm:$0xff]
      %v3435 = vadd.f32 %v3403, %v3277
      %v3436 = vadd.f32 %v3404, %v3280
      %v3437 = vadd.f32 %v3405, %v3285
      %v3438 = vadd.f32 %v3406, %v3288
      %v3439 = vadd.f32 %v3407, %v3293
      %v3440 = vadd.f32 %v3408, %v3296
      %v3441 = vadd.f32 %v3409, %v3301
      %v3442 = vadd.f32 %v3410, %v3304
      %v3443 = vadd.f32 %v3411, %v3309
      %v3444 = vadd.f32 %v3412, %v3312
      %v3445 = vadd.f32 %v3413, %v3317
      %v3446 = vadd.f32 %v3414, %v3320
      %v3447 = vadd.f32 %v3415, %v3325
      %v3448 = vadd.f32 %v3416, %v3328
      %v3449 = vadd.f32 %v3417, %v3333
      %v3450 = vadd.f32 %v3418, %v3336
      %v3451 = vadd.f32 %v3419, %v3341
      %v3452 = vadd.f32 %v3420, %v3344
      %v3453 = vadd.f32 %v3421, %v3349
      %v3454 = vadd.f32 %v3422, %v3352
      %v3455 = vadd.f32 %v3423, %v3357
      %v3456 = vadd.f32 %v3424, %v3360
      %v3457 = vadd.f32 %v3425, %v3365
      %v3458 = vadd.f32 %v3426, %v3368
      %v3459 = vadd.f32 %v3427, %v3373
      %v3460 = vadd.f32 %v3428, %v3376
      %v3461 = vadd.f32 %v3429, %v3381
      %v3462 = vadd.f32 %v3430, %v3384
      %v3463 = vadd.f32 %v3431, %v3389
      %v3464 = vadd.f32 %v3432, %v3392
      %v3465 = vadd.f32 %v3433, %v3397
      %v3466 = vadd.f32 %v3434, %v3400
      %3467 = vst [vmem:[#allocation2] sm:$0xff] %v3435
      %3468 = vst [vmem:[#allocation2 + $0x8] sm:$0xff] %v3436
      %3469 = vst [vmem:[#allocation2 + $0x10] sm:$0xff] %v3437
      %3470 = vst [vmem:[#allocation2 + $0x18] sm:$0xff] %v3438
      %3471 = vst [vmem:[#allocation2 + $0x20] sm:$0xff] %v3439
      %3472 = vst [vmem:[#allocation2 + $0x28] sm:$0xff] %v3440
      %3473 = vst [vmem:[#allocation2 + $0x30] sm:$0xff] %v3441
      %3474 = vst [vmem:[#allocation2 + $0x38] sm:$0xff] %v3442
      %3475 = vst [vmem:[#allocation2 + $0x40] sm:$0xff] %v3443
      %3476 = vst [vmem:[#allocation2 + $0x48] sm:$0xff] %v3444
      %3477 = vst [vmem:[#allocation2 + $0x50] sm:$0xff] %v3445
      %3478 = vst [vmem:[#allocation2 + $0x58] sm:$0xff] %v3446
      %3479 = vst [vmem:[#allocation2 + $0x60] sm:$0xff] %v3447
      %3480 = vst [vmem:[#allocation2 + $0x68] sm:$0xff] %v3448
      %3481 = vst [vmem:[#allocation2 + $0x70] sm:$0xff] %v3449
      %3482 = vst [vmem:[#allocation2 + $0x78] sm:$0xff] %v3450
      %3483 = vst [vmem:[#allocation2 + $0x80] sm:$0xff] %v3451
      %3484 = vst [vmem:[#allocation2 + $0x88] sm:$0xff] %v3452
      %3485 = vst [vmem:[#allocation2 + $0x90] sm:$0xff] %v3453
      %3486 = vst [vmem:[#allocation2 + $0x98] sm:$0xff] %v3454
      %3487 = vst [vmem:[#allocation2 + $0xa0] sm:$0xff] %v3455
      %3488 = vst [vmem:[#allocation2 + $0xa8] sm:$0xff] %v3456
      %3489 = vst [vmem:[#allocation2 + $0xb0] sm:$0xff] %v3457
      %3490 = vst [vmem:[#allocation2 + $0xb8] sm:$0xff] %v3458
      %3491 = vst [vmem:[#allocation2 + $0xc0] sm:$0xff] %v3459
      %3492 = vst [vmem:[#allocation2 + $0xc8] sm:$0xff] %v3460
      %3493 = vst [vmem:[#allocation2 + $0xd0] sm:$0xff] %v3461
      %3494 = vst [vmem:[#allocation2 + $0xd8] sm:$0xff] %v3462
      %3495 = vst [vmem:[#allocation2 + $0xe0] sm:$0xff] %v3463
      %3496 = vst [vmem:[#allocation2 + $0xe8] sm:$0xff] %v3464
      %3497 = vst [vmem:[#allocation2 + $0xf0] sm:$0xff] %v3465
      %3498 = vst [vmem:[#allocation2 + $0xf8] sm:$0xff] %v3466
      %v3499 = vld [vmem:[#allocation2] sm:$0xff]
      %v3500 = vld [vmem:[#allocation2 + $0x8] sm:$0xff]
      %v3501 = vld [vmem:[#allocation2 + $0x10] sm:$0xff]
      %v3502 = vld [vmem:[#allocation2 + $0x18] sm:$0xff]
      %v3503 = vld [vmem:[#allocation2 + $0x20] sm:$0xff]
      %v3504 = vld [vmem:[#allocation2 + $0x28] sm:$0xff]
      %v3505 = vld [vmem:[#allocation2 + $0x30] sm:$0xff]
      %v3506 = vld [vmem:[#allocation2 + $0x38] sm:$0xff]
      %v3507 = vld [vmem:[#allocation2 + $0x40] sm:$0xff]
      %v3508 = vld [vmem:[#allocation2 + $0x48] sm:$0xff]
      %v3509 = vld [vmem:[#allocation2 + $0x50] sm:$0xff]
      %v3510 = vld [vmem:[#allocation2 + $0x58] sm:$0xff]
      %v3511 = vld [vmem:[#allocation2 + $0x60] sm:$0xff]
      %v3512 = vld [vmem:[#allocation2 + $0x68] sm:$0xff]
      %v3513 = vld [vmem:[#allocation2 + $0x70] sm:$0xff]
      %v3514 = vld [vmem:[#allocation2 + $0x78] sm:$0xff]
      %v3515 = vld [vmem:[#allocation2 + $0x80] sm:$0xff]
      %v3516 = vld [vmem:[#allocation2 + $0x88] sm:$0xff]
      %v3517 = vld [vmem:[#allocation2 + $0x90] sm:$0xff]
      %v3518 = vld [vmem:[#allocation2 + $0x98] sm:$0xff]
      %v3519 = vld [vmem:[#allocation2 + $0xa0] sm:$0xff]
      %v3520 = vld [vmem:[#allocation2 + $0xa8] sm:$0xff]
      %v3521 = vld [vmem:[#allocation2 + $0xb0] sm:$0xff]
      %v3522 = vld [vmem:[#allocation2 + $0xb8] sm:$0xff]
      %v3523 = vld [vmem:[#allocation2 + $0xc0] sm:$0xff]
      %v3524 = vld [vmem:[#allocation2 + $0xc8] sm:$0xff]
      %v3525 = vld [vmem:[#allocation2 + $0xd0] sm:$0xff]
      %v3526 = vld [vmem:[#allocation2 + $0xd8] sm:$0xff]
      %v3527 = vld [vmem:[#allocation2 + $0xe0] sm:$0xff]
      %v3528 = vld [vmem:[#allocation2 + $0xe8] sm:$0xff]
      %v3529 = vld [vmem:[#allocation2 + $0xf0] sm:$0xff]
      %v3530 = vld [vmem:[#allocation2 + $0xf8] sm:$0xff]
      %v3531 = vld [vmem:[%s2] sm:$0x1]
      %v3533 = vlaneseq
      %v3534 = vshrl.u32 %v3533, 7
      %v3535 = vsub.s32 0, %v3534
      %v3536 = vrot.slane %v3531, %v3535
      %v3538 = vadd.f32 %v3499, %v3536
      %v3539 = vadd.f32 %v3500, %v3536
      %v3540 = vadd.f32 %v3501, %v3536
      %v3541 = vadd.f32 %v3502, %v3536
      %v3542 = vadd.f32 %v3503, %v3536
      %v3543 = vadd.f32 %v3504, %v3536
      %v3544 = vadd.f32 %v3505, %v3536
      %v3545 = vadd.f32 %v3506, %v3536
      %v3546 = vadd.f32 %v3507, %v3536
      %v3547 = vadd.f32 %v3508, %v3536
      %v3548 = vadd.f32 %v3509, %v3536
      %v3549 = vadd.f32 %v3510, %v3536
      %v3550 = vadd.f32 %v3511, %v3536
      %v3551 = vadd.f32 %v3512, %v3536
      %v3552 = vadd.f32 %v3513, %v3536
      %v3553 = vadd.f32 %v3514, %v3536
      %v3554 = vadd.f32 %v3515, %v3536
      %v3555 = vadd.f32 %v3516, %v3536
      %v3556 = vadd.f32 %v3517, %v3536
      %v3557 = vadd.f32 %v3518, %v3536
      %v3558 = vadd.f32 %v3519, %v3536
      %v3559 = vadd.f32 %v3520, %v3536
      %v3560 = vadd.f32 %v3521, %v3536
      %v3561 = vadd.f32 %v3522, %v3536
      %v3562 = vadd.f32 %v3523, %v3536
      %v3563 = vadd.f32 %v3524, %v3536
      %v3564 = vadd.f32 %v3525, %v3536
      %v3565 = vadd.f32 %v3526, %v3536
      %v3566 = vadd.f32 %v3527, %v3536
      %v3567 = vadd.f32 %v3528, %v3536
      %v3568 = vadd.f32 %v3529, %v3536
      %v3569 = vadd.f32 %v3530, %v3536
      %v3570 = vmul.f32 %v3538, 0.1
      %v3571 = vmul.f32 %v3539, 0.1
      %v3572 = vmul.f32 %v3540, 0.1
      %v3573 = vmul.f32 %v3541, 0.1
      %v3574 = vmul.f32 %v3542, 0.1
      %v3575 = vmul.f32 %v3543, 0.1
      %v3576 = vmul.f32 %v3544, 0.1
      %v3577 = vmul.f32 %v3545, 0.1
      %v3578 = vmul.f32 %v3546, 0.1
      %v3579 = vmul.f32 %v3547, 0.1
      %v3580 = vmul.f32 %v3548, 0.1
      %v3581 = vmul.f32 %v3549, 0.1
      %v3582 = vmul.f32 %v3550, 0.1
      %v3583 = vmul.f32 %v3551, 0.1
      %v3584 = vmul.f32 %v3552, 0.1
      %v3585 = vmul.f32 %v3553, 0.1
      %v3586 = vmul.f32 %v3554, 0.1
      %v3587 = vmul.f32 %v3555, 0.1
      %v3588 = vmul.f32 %v3556, 0.1
      %v3589 = vmul.f32 %v3557, 0.1
      %v3590 = vmul.f32 %v3558, 0.1
      %v3591 = vmul.f32 %v3559, 0.1
      %v3592 = vmul.f32 %v3560, 0.1
      %v3593 = vmul.f32 %v3561, 0.1
      %v3594 = vmul.f32 %v3562, 0.1
      %v3595 = vmul.f32 %v3563, 0.1
      %v3596 = vmul.f32 %v3564, 0.1
      %v3597 = vmul.f32 %v3565, 0.1
      %v3598 = vmul.f32 %v3566, 0.1
      %v3599 = vmul.f32 %v3567, 0.1
      %v3600 = vmul.f32 %v3568, 0.1
      %v3601 = vmul.f32 %v3569, 0.1
      %v3602 = vmax.f32 %v3538, %v3570
      %v3603 = vmax.f32 %v3539, %v3571
      %v3604 = vmax.f32 %v3540, %v3572
      %v3605 = vmax.f32 %v3541, %v3573
      %v3606 = vmax.f32 %v3542, %v3574
      %v3607 = vmax.f32 %v3543, %v3575
      %v3608 = vmax.f32 %v3544, %v3576
      %v3609 = vmax.f32 %v3545, %v3577
      %v3610 = vmax.f32 %v3546, %v3578
      %v3611 = vmax.f32 %v3547, %v3579
      %v3612 = vmax.f32 %v3548, %v3580
      %v3613 = vmax.f32 %v3549, %v3581
      %v3614 = vmax.f32 %v3550, %v3582
      %v3615 = vmax.f32 %v3551, %v3583
      %v3616 = vmax.f32 %v3552, %v3584
      %v3617 = vmax.f32 %v3553, %v3585
      %v3618 = vmax.f32 %v3554, %v3586
      %v3619 = vmax.f32 %v3555, %v3587
      %v3620 = vmax.f32 %v3556, %v3588
      %v3621 = vmax.f32 %v3557, %v3589
      %v3622 = vmax.f32 %v3558, %v3590
      %v3623 = vmax.f32 %v3559, %v3591
      %v3624 = vmax.f32 %v3560, %v3592
      %v3625 = vmax.f32 %v3561, %v3593
      %v3626 = vmax.f32 %v3562, %v3594
      %v3627 = vmax.f32 %v3563, %v3595
      %v3628 = vmax.f32 %v3564, %v3596
      %v3629 = vmax.f32 %v3565, %v3597
      %v3630 = vmax.f32 %v3566, %v3598
      %v3631 = vmax.f32 %v3567, %v3599
      %v3632 = vmax.f32 %v3568, %v3600
      %v3633 = vmax.f32 %v3569, %v3601
      %v3634 = vpack.c.bf16 %v3603, %v3602
      %v3635 = vpack.c.bf16 %v3605, %v3604
      %v3636 = vpack.c.bf16 %v3607, %v3606
      %v3637 = vpack.c.bf16 %v3609, %v3608
      %v3638 = vpack.c.bf16 %v3611, %v3610
      %v3639 = vpack.c.bf16 %v3613, %v3612
      %v3640 = vpack.c.bf16 %v3615, %v3614
      %v3641 = vpack.c.bf16 %v3617, %v3616
      %v3642 = vpack.c.bf16 %v3619, %v3618
      %v3643 = vpack.c.bf16 %v3621, %v3620
      %v3644 = vpack.c.bf16 %v3623, %v3622
      %v3645 = vpack.c.bf16 %v3625, %v3624
      %v3646 = vpack.c.bf16 %v3627, %v3626
      %v3647 = vpack.c.bf16 %v3629, %v3628
      %v3648 = vpack.c.bf16 %v3631, %v3630
      %v3649 = vpack.c.bf16 %v3633, %v3632
      %v3666 = vunpack.c.l.b16 %v3634
      %v3667 = vunpack.c.h.b16 %v3634
      %v3668 = vunpack.c.l.b16 %v3635
      %v3669 = vunpack.c.h.b16 %v3635
      %v3670 = vunpack.c.l.b16 %v3636
      %v3671 = vunpack.c.h.b16 %v3636
      %v3672 = vunpack.c.l.b16 %v3637
      %v3673 = vunpack.c.h.b16 %v3637
      %v3674 = vunpack.c.l.b16 %v3638
      %v3675 = vunpack.c.h.b16 %v3638
      %v3676 = vunpack.c.l.b16 %v3639
      %v3677 = vunpack.c.h.b16 %v3639
      %v3678 = vunpack.c.l.b16 %v3640
      %v3679 = vunpack.c.h.b16 %v3640
      %v3680 = vunpack.c.l.b16 %v3641
      %v3681 = vunpack.c.h.b16 %v3641
      %v3682 = vunpack.c.l.b16 %v3642
      %v3683 = vunpack.c.h.b16 %v3642
      %v3684 = vunpack.c.l.b16 %v3643
      %v3685 = vunpack.c.h.b16 %v3643
      %v3686 = vunpack.c.l.b16 %v3644
      %v3687 = vunpack.c.h.b16 %v3644
      %v3688 = vunpack.c.l.b16 %v3645
      %v3689 = vunpack.c.h.b16 %v3645
      %v3690 = vunpack.c.l.b16 %v3646
      %v3691 = vunpack.c.h.b16 %v3646
      %v3692 = vunpack.c.l.b16 %v3647
      %v3693 = vunpack.c.h.b16 %v3647
      %v3694 = vunpack.c.l.b16 %v3648
      %v3695 = vunpack.c.h.b16 %v3648
      %v3696 = vunpack.c.l.b16 %v3649
      %v3697 = vunpack.c.h.b16 %v3649
      %v3698 = vpack.c.b16 %v3666, %v3666
      %v3699 = vpack.c.b16 %v3667, %v3667
      %v3700 = vpack.c.b16 %v3668, %v3668
      %v3701 = vpack.c.b16 %v3669, %v3669
      %v3702 = vpack.c.b16 %v3670, %v3670
      %v3703 = vpack.c.b16 %v3671, %v3671
      %v3704 = vpack.c.b16 %v3672, %v3672
      %v3705 = vpack.c.b16 %v3673, %v3673
      %v3706 = vpack.c.b16 %v3674, %v3674
      %v3707 = vpack.c.b16 %v3675, %v3675
      %v3708 = vpack.c.b16 %v3676, %v3676
      %v3709 = vpack.c.b16 %v3677, %v3677
      %v3710 = vpack.c.b16 %v3678, %v3678
      %v3711 = vpack.c.b16 %v3679, %v3679
      %v3712 = vpack.c.b16 %v3680, %v3680
      %v3713 = vpack.c.b16 %v3681, %v3681
      %v3714 = vpack.c.b16 %v3682, %v3682
      %v3715 = vpack.c.b16 %v3683, %v3683
      %v3716 = vpack.c.b16 %v3684, %v3684
      %v3717 = vpack.c.b16 %v3685, %v3685
      %v3718 = vpack.c.b16 %v3686, %v3686
      %v3719 = vpack.c.b16 %v3687, %v3687
      %v3720 = vpack.c.b16 %v3688, %v3688
      %v3721 = vpack.c.b16 %v3689, %v3689
      %v3722 = vpack.c.b16 %v3690, %v3690
      %v3723 = vpack.c.b16 %v3691, %v3691
      %v3724 = vpack.c.b16 %v3692, %v3692
      %v3725 = vpack.c.b16 %v3693, %v3693
      %v3726 = vpack.c.b16 %v3694, %v3694
      %v3727 = vpack.c.b16 %v3695, %v3695
      %v3728 = vpack.c.b16 %v3696, %v3696
      %v3729 = vpack.c.b16 %v3697, %v3697
      %3762 = vst [vmem:[%s206] sm:$0xf] %v3698
      %3763 = vst [vmem:[%s206 + $0x4] sm:$0xf] %v3699
      %3764 = vst [vmem:[%s206 + $0x8] sm:$0xf] %v3700
      %3765 = vst [vmem:[%s206 + $0xc] sm:$0xf] %v3701
      %3766 = vst [vmem:[%s206 + $0x10] sm:$0xf] %v3702
      %3767 = vst [vmem:[%s206 + $0x14] sm:$0xf] %v3703
      %3768 = vst [vmem:[%s206 + $0x18] sm:$0xf] %v3704
      %3769 = vst [vmem:[%s206 + $0x1c] sm:$0xf] %v3705
      %3770 = vst [vmem:[%s206 + $0x20] sm:$0xf] %v3706
      %3771 = vst [vmem:[%s206 + $0x24] sm:$0xf] %v3707
      %3772 = vst [vmem:[%s206 + $0x28] sm:$0xf] %v3708
      %3773 = vst [vmem:[%s206 + $0x2c] sm:$0xf] %v3709
      %3774 = vst [vmem:[%s206 + $0x30] sm:$0xf] %v3710
      %3775 = vst [vmem:[%s206 + $0x34] sm:$0xf] %v3711
      %3776 = vst [vmem:[%s206 + $0x38] sm:$0xf] %v3712
      %3777 = vst [vmem:[%s206 + $0x3c] sm:$0xf] %v3713
      %3778 = vst [vmem:[%s206 + $0x40] sm:$0xf] %v3714
      %3779 = vst [vmem:[%s206 + $0x44] sm:$0xf] %v3715
      %3780 = vst [vmem:[%s206 + $0x48] sm:$0xf] %v3716
      %3781 = vst [vmem:[%s206 + $0x4c] sm:$0xf] %v3717
      %3782 = vst [vmem:[%s206 + $0x50] sm:$0xf] %v3718
      %3783 = vst [vmem:[%s206 + $0x54] sm:$0xf] %v3719
      %3784 = vst [vmem:[%s206 + $0x58] sm:$0xf] %v3720
      %3785 = vst [vmem:[%s206 + $0x5c] sm:$0xf] %v3721
      %3786 = vst [vmem:[%s206 + $0x60] sm:$0xf] %v3722
      %3787 = vst [vmem:[%s206 + $0x64] sm:$0xf] %v3723
      %3788 = vst [vmem:[%s206 + $0x68] sm:$0xf] %v3724
      %3789 = vst [vmem:[%s206 + $0x6c] sm:$0xf] %v3725
      %3790 = vst [vmem:[%s206 + $0x70] sm:$0xf] %v3726
      %3791 = vst [vmem:[%s206 + $0x74] sm:$0xf] %v3727
      %3792 = vst [vmem:[%s206 + $0x78] sm:$0xf] %v3728
      %3793 = vst [vmem:[%s206 + $0x7c] sm:$0xf] %v3729
      %p3794 = scmp.lt.s32.totalorder %s18, 1
      %s3795 = scalar_select %p3794, %s18, 1
      %p3796 = scmp.lt.s32.totalorder %s19, 0
      %s3797 = scalar_select %p3796, %s19, 0
      %s3798 = smul.addr %s3797, 32
      %s3799 = smul.addr %s3795, 32
      %s3800 = sadd.s32 %s3798, %s3799
      %s3801 = smul.addr %s3800, 4
      %s3802 = scalar_lea.vmem %s3, %s3801
      // Predicated region
      $region33: #{basic_conv2d.1} parent=31 // pred_check
        %p3803 = pneg %p116
      $region34: #{basic_conv2d.1} parent=31 // pred_check_branch
        %3805 = sbr.rel (%p3803) target = $region36
      $region35: #{basic_conv2d.1} parent=31 // pred_region
        _
      $region36: #{basic_conv2d.1} parent=31 // pred_fallthru
        _
    $region32: #{basic_conv2d.1} parent=5 // pred_fallthru
      _
    %p3806 = scmp.le.s32.totalorder 2, %s9
    // Predicated region
    $region37: #{basic_conv2d.1} parent=5 // pred_check
      %p3807 = pneg %p3806
    $region38: #{basic_conv2d.1} parent=5 // pred_check_branch
      %3809 = sbr.rel (%p3807) target = $region40
    $region39: #{basic_conv2d.1} parent=5 // pred_region
      %s3810 = ssub.s32 %s9, 2
      // Predicated region
      $region41: #{basic_conv2d.1} parent=39 // pred_check
        %p3811 = pneg %p122
      $region42: #{basic_conv2d.1} parent=39 // pred_check_branch
        %3813 = sbr.rel (%p3811) target = $region44
      $region43: #{basic_conv2d.1} parent=39 // pred_region
        %p3814 = scmp.lt.s32.totalorder %s20, 1
        %s3815 = scalar_select %p3814, %s20, 1
        %p3816 = scmp.lt.s32.totalorder %s21, 0
        %s3817 = scalar_select %p3816, %s21, 0
        %s3818 = smul.addr %s3817, 32
        %s3819 = smul.addr %s3815, 32
        %s3820 = sadd.s32 %s3818, %s3819
        %s3821 = smul.addr %s3820, 4
        %s3822 = scalar_lea.vmem %s3, %s3821
      $region44: #{basic_conv2d.1} parent=39 // pred_fallthru
        _
    $region40: #{basic_conv2d.1} parent=5 // pred_fallthru
      _
  $region6: #{basic_conv2d.1} parent=0 // loop_footer
    %s13 = sadd.s32 1, %s9
  $region7: #{basic_conv2d.1} parent=0 // loop_footer_branch
    %8 = sbr.rel target = $region3
  $region8: #{basic_conv2d.1} parent=0 // loop_exit
    _

</llo_original>
